<compile_context>
chip_gen: v7x
topology: tpu7x:2x2x1
jax: 0.10.0
libtpu: 0.0.40
codegen_flags: <defaults>
</compile_context>

<pallas_src>
import functools

import jax
import jax.numpy as jnp
from jax import lax
from jax.experimental import pallas as pl
from jax.experimental.pallas import tpu as pltpu


# ---------------------------------------------------------------------------
# Fused Inception kernel
# ---------------------------------------------------------------------------
def _inception_kernel(x_ref, w_red_ref, s_red_ref, w_23_ref, s_23_ref,
                      w_b3b_ref, s_b3b_ref, w_b4_ref, s_b4_ref,
                      o_ref, col_ref, *, sizes, compute_dtype):
    n1x1, n3x3red, n3x3, n5x5red, n5x5, pool_planes = sizes
    _, H, W, Cin = x_ref.shape
    c_shared = n3x3red + n5x5red            # channels feeding both 3x3 convs
    cmax = col_ref.shape[2] // 9            # per-tap channel-slot stride

    x2 = x_ref[0].reshape(H * W, Cin)       # free view (W % 8 == 0 here)

    def mm_bias_relu(a, w_ref_, s_ref_):
        # MXU matmul (bf16 operands on v6e/v7x if requested) with f32
        # accumulation; BN scale is already folded into the weights, so the
        # epilogue is shift + relu in f32 (v5e-safe: no bf16 VPU math).
        y = jnp.dot(a.astype(compute_dtype), w_ref_[...],
                    preferred_element_type=jnp.float32)
        return jnp.maximum(y + s_ref_[...], 0.0)

    # ---- fused 1x1 over the shared input: [ b2-reduce | b3-reduce | b1 ] ----
    red = mm_bias_relu(x2, w_red_ref, s_red_ref)
    y1 = red[:, c_shared:c_shared + n1x1]

    # ---- im2col scratch maintenance: zero ONLY the padding border strips ----
    # Interior regions are fully overwritten by every fill; channel slots a
    # fill does not write multiply zero weight rows, so they stay inert.
    zrow = jnp.zeros((1, W, cmax), jnp.float32)
    zcol = jnp.zeros((H, 1, cmax), jnp.float32)
    for dy in range(3):
        for dx in range(3):
            oy, ox = dy - 1, dx - 1
            base = (dy * 3 + dx) * cmax
            if oy == -1:
                col_ref[0:1, :, base:base + cmax] = zrow
            if oy == 1:
                col_ref[H - 1:H, :, base:base + cmax] = zrow
            if ox == -1:
                col_ref[:, 0:1, base:base + cmax] = zcol
            if ox == 1:
                col_ref[:, W - 1:W, base:base + cmax] = zcol

    def fill_col(src3, cin):
        # col[h, w, tap*cmax + c] = src[h+dy-1, w+dx-1, c]   (interior only)
        for dy in range(3):
            for dx in range(3):
                oy, ox = dy - 1, dx - 1
                r0, r1 = max(0, -oy), H - max(0, oy)
                c0, c1 = max(0, -ox), W - max(0, ox)
                base = (dy * 3 + dx) * cmax
                col_ref[r0:r1, c0:c1, base:base + cin] = \
                    src3[r0 + oy:r1 + oy, c0 + ox:c1 + ox, :]

    # ---- branches 2 and 3a: ONE shared im2col fill + ONE MXU dot ------------
    fill_col(red[:, :c_shared].reshape(H, W, c_shared), c_shared)
    y23 = mm_bias_relu(col_ref[...].reshape(H * W, 9 * cmax), w_23_ref, s_23_ref)
    y2 = y23[:, :n3x3]                       # branch 2 output
    t3 = y23[:, n3x3:]                       # branch 3 intermediate

    # ---- branch 3 second 3x3 (re-uses the same scratch / zeroed borders) ----
    fill_col(t3.reshape(H, W, n5x5), n5x5)
    y3 = mm_bias_relu(col_ref[...].reshape(H * W, 9 * cmax), w_b3b_ref, s_b3b_ref)

    # ---- branch 4: 3x3/s1 max-pool ("same") -> 1x1 ---------------------------
    # Separable max with replicate-edge semantics (== -inf padding for a max):
    # W-direction via sublane roll + iota mask, H-direction via outer-dim
    # slices.  No pool scratch, no -inf fill.
    wi = lax.broadcasted_iota(jnp.int32, (H, W, Cin), 1).reshape(H * W, Cin)
    nxt = jnp.where(wi < W - 1, pltpu.roll(x2, shift=H * W - 1, axis=0), x2)
    prv = jnp.where(wi > 0, pltpu.roll(x2, shift=1, axis=0), x2)
    mw = jnp.maximum(x2, jnp.maximum(nxt, prv)).reshape(H, W, Cin)
    dn = jnp.concatenate([mw[1:], mw[H - 1:]], axis=0)
    up = jnp.concatenate([mw[:1], mw[:H - 1]], axis=0)
    pooled = jnp.maximum(mw, jnp.maximum(dn, up)).reshape(H * W, Cin)
    y4 = mm_bias_relu(pooled, w_b4_ref, s_b4_ref)

    # ---- single lane-dense store of the fused (concatenated) output block ---
    y = jnp.concatenate([y1, y2, y3, y4], axis=-1)       # (H*W, Ctot)
    o_ref[0] = y.reshape(H, W, y.shape[-1]).astype(o_ref.dtype)


# ---------------------------------------------------------------------------
# Parameter construction (deterministic) and BN folding (scale -> weights)
# ---------------------------------------------------------------------------
def _make_conv_bn(key, cin, cout, ksize, eps=1e-5):
    kw, kb, kg, kbe = jax.random.split(key, 4)
    if ksize == 1:
        w = 0.1 * jax.random.normal(kw, (cin, cout), jnp.float32)
    else:
        w = 0.1 * jax.random.normal(kw, (ksize, ksize, cin, cout), jnp.float32)
    b = 0.1 * jax.random.normal(kb, (cout,), jnp.float32)
    gamma = 1.0 + 0.1 * jax.random.normal(kg, (cout,), jnp.float32)
    beta = 0.1 * jax.random.normal(kbe, (cout,), jnp.float32)
    mean = jnp.zeros((cout,), jnp.float32)   # running stats at PyTorch init
    var = jnp.ones((cout,), jnp.float32)
    s = gamma / jnp.sqrt(var + eps)
    w_folded = (w * s).astype(jnp.float32)          # BN scale folded into conv
    shift = (beta + (b - mean) * s).reshape(1, -1).astype(jnp.float32)
    return {"w": w_folded, "shift": shift}


def init_inception_params(key, in_planes, n1x1, n3x3red, n3x3,
                          n5x5red, n5x5, pool_planes):
    ks = jax.random.split(key, 7)
    return {
        "b1": _make_conv_bn(ks[0], in_planes, n1x1, 1),
        "b2_red": _make_conv_bn(ks[1], in_planes, n3x3red, 1),
        "b2_3x3": _make_conv_bn(ks[2], n3x3red, n3x3, 3),
        "b3_red": _make_conv_bn(ks[3], in_planes, n5x5red, 1),
        "b3_3x3a": _make_conv_bn(ks[4], n5x5red, n5x5, 3),
        "b3_3x3b": _make_conv_bn(ks[5], n5x5, n5x5, 3),
        "b4": _make_conv_bn(ks[6], in_planes, pool_planes, 1),
    }


def _pack_params(params, sizes, compute_dtype):
    """Kernel-ready weights: fused 1x1 and block-structured im2col 3x3."""
    n1x1, n3x3red, n3x3, n5x5red, n5x5, pool_planes = sizes
    c_shared = n3x3red + n5x5red
    cmax = max(c_shared, n5x5)
    cd = compute_dtype

    def tap_w(w, row_off, total_out, col_off):
        # (3,3,cin,cout) -> (9*cmax, total_out).  Rows outside
        # [row_off, row_off+cin) in each tap slot are ZERO: this is what makes
        # stale scratch lanes harmless under border-only zeroing.
        _, _, cin, cout = w.shape
        wz = jnp.zeros((9, cmax, total_out), jnp.float32)
        wz = wz.at[:, row_off:row_off + cin, col_off:col_off + cout].set(
            w.reshape(9, cin, cout))
        return wz.reshape(9 * cmax, total_out)

    w_23 = (tap_w(params["b2_3x3"]["w"], 0, n3x3 + n5x5, 0)
            + tap_w(params["b3_3x3a"]["w"], n3x3red, n3x3 + n5x5, n3x3))

    packed = {
        # fused 1x1 weights, ordered [b2_red | b3_red | b1] so the slice that
        # feeds the shared im2col starts at lane offset 0.
        "w_red": jnp.concatenate([params["b2_red"]["w"], params["b3_red"]["w"],
                                  params["b1"]["w"]], axis=1).astype(cd),
        "s_red": jnp.concatenate([params["b2_red"]["shift"],
                                  params["b3_red"]["shift"],
                                  params["b1"]["shift"]], axis=1),
        "w_23": w_23.astype(cd),
        "s_23": jnp.concatenate([params["b2_3x3"]["shift"],
                                 params["b3_3x3a"]["shift"]], axis=1),
        "w_b3b": tap_w(params["b3_3x3b"]["w"], 0, n5x5, 0).astype(cd),
        "s_b3b": params["b3_3x3b"]["shift"],
        "w_b4": params["b4"]["w"].astype(cd),
        "s_b4": params["b4"]["shift"],
    }
    return packed, cmax


# ---------------------------------------------------------------------------
# Inception forward (NCHW in, NCHW out — matches the PyTorch module)
# ---------------------------------------------------------------------------
def inception_forward(x_nchw, params, sizes, compute_dtype=jnp.bfloat16):
    n1x1, n3x3red, n3x3, n5x5red, n5x5, pool_planes = sizes
    packed, cmax = _pack_params(params, sizes, compute_dtype)

    # TODO(synk): in a full GoogLeNet keep activations NHWC end-to-end instead
    # of transposing around every block (each transpose is an HBM round trip).
    x = jnp.transpose(x_nchw, (0, 2, 3, 1))          # -> NHWC
    N, H, W, Cin = x.shape
    ctot = n1x1 + n3x3 + n5x5 + pool_planes

    weight_args = (packed["w_red"], packed["s_red"], packed["w_23"],
                   packed["s_23"], packed["w_b3b"], packed["s_b3b"],
                   packed["w_b4"], packed["s_b4"])

    def _const_spec(a):
        # Constant block index: Pallas keeps the same VMEM block every step.
        # TODO(synk): single-buffer / preload weights to scratch to save VMEM
        # under v7x's 64 MiB budget at real Inception sizes.
        nd = a.ndim
        return pl.BlockSpec(a.shape, lambda n, _nd=nd: (0,) * _nd)

    flops = 2 * N * H * W * (Cin * (n1x1 + n3x3red + n5x5red)
                             + 9 * cmax * (n3x3 + n5x5)
                             + 9 * cmax * n5x5
                             + Cin * pool_planes)
    bytes_accessed = (int(x.size) * x.dtype.itemsize
                      + sum(int(a.size) * a.dtype.itemsize for a in weight_args)
                      + N * H * W * ctot * x.dtype.itemsize)

    kernel = functools.partial(_inception_kernel, sizes=sizes,
                               compute_dtype=compute_dtype)

    out = pl.pallas_call(
        kernel,
        out_shape=jax.ShapeDtypeStruct((N, H, W, ctot), x.dtype),
        grid=(N,),
        in_specs=[pl.BlockSpec((1, H, W, Cin), lambda n: (n, 0, 0, 0))]
                 + [_const_spec(a) for a in weight_args],
        out_specs=pl.BlockSpec((1, H, W, ctot), lambda n: (n, 0, 0, 0)),
        scratch_shapes=[pltpu.VMEM((H, W, 9 * cmax), jnp.float32)],   # im2col
        compiler_params=pltpu.CompilerParams(
            dimension_semantics=("parallel",),
            vmem_limit_bytes=48 * 1024 * 1024),
        cost_estimate=pl.CostEstimate(flops=flops, transcendentals=0,
                                      bytes_accessed=bytes_accessed),
    )(x, *weight_args)

    return jnp.transpose(out, (0, 3, 1, 2))          # -> NCHW


# ---------------------------------------------------------------------------
# Pure-JAX reference (for correctness check) — uses the same folded weights
# ---------------------------------------------------------------------------
def _ref_c1(x, m):
    y = jnp.einsum("nhwc,co->nhwo", x, m["w"]) + m["shift"][0]
    return jnp.maximum(y, 0.0)


def _ref_c3(x, m):
    y = lax.conv_general_dilated(
        x, m["w"], window_strides=(1, 1), padding="SAME",
        dimension_numbers=("NHWC", "HWIO", "NHWC"))
    y = y + m["shift"][0]
    return jnp.maximum(y, 0.0)


def _ref_pool(x, m):
    xm = lax.reduce_window(x, -jnp.inf, lax.max, (1, 3, 3, 1), (1, 1, 1, 1),
                           ((0, 0), (1, 1), (1, 1), (0, 0)))
    return _ref_c1(xm, m)


def inception_reference(x_nchw, p):
    x = jnp.transpose(x_nchw, (0, 2, 3, 1))
    y1 = _ref_c1(x, p["b1"])
    y2 = _ref_c3(_ref_c1(x, p["b2_red"]), p["b2_3x3"])
    y3 = _ref_c3(_ref_c3(_ref_c1(x, p["b3_red"]), p["b3_3x3a"]), p["b3_3x3b"])
    y4 = _ref_pool(x, p["b4"])
    y = jnp.concatenate([y1, y2, y3, y4], axis=-1)
    return jnp.transpose(y, (0, 3, 1, 2))


# ---------------------------------------------------------------------------
if __name__ == "__main__":
    # Small shapes: batch=2, in_planes=4, spatial 16x16
    in_planes, n1x1, n3x3red, n3x3, n5x5red, n5x5, pool_planes = 4, 8, 4, 8, 4, 8, 8
    sizes = (n1x1, n3x3red, n3x3, n5x5red, n5x5, pool_planes)

    key = jax.random.PRNGKey(0)
    kx, kp = jax.random.split(key)
    x = jax.random.normal(kx, (2, in_planes, 16, 16), jnp.float32)  # NCHW
    params = init_inception_params(kp, in_planes, *sizes)

    # f32 path (tight correctness check against the pure-JAX reference)
    fwd = jax.jit(lambda xx, pp: inception_forward(
        xx, pp, sizes, compute_dtype=jnp.float32))
    out = jax.block_until_ready(fwd(x, params))

    expected_channels = n1x1 + n3x3 + n5x5 + pool_planes
    assert out.shape == (2, expected_channels, 16, 16), out.shape

    ref = jax.block_until_ready(inception_reference(x, params))
    assert jnp.allclose(out, ref, atol=1e-4, rtol=1e-4), \
        float(jnp.max(jnp.abs(out - ref)))

    # bf16-MXU-operand path (default; recommended on v6e/v7x); f32 accumulation
    # and f32 elementwise epilogue, so only matmul rounding differs.
    fwd_bf16 = jax.jit(lambda xx, pp: inception_forward(
        xx, pp, sizes, compute_dtype=jnp.bfloat16))
    out_bf16 = jax.block_until_ready(fwd_bf16(x, params))
    assert jnp.allclose(out_bf16, ref, atol=1e-1, rtol=1e-1), \
        float(jnp.max(jnp.abs(out_bf16 - ref)))

    print("KERNEL_OK")
</pallas_src>

<mosaic_0001>
module attributes {stable_mosaic.version = 11 : i64} {
  func.func @_inception_kernel(%arg0: i32, %arg1: memref<1x16x16x4xf32, #tpu.memory_space<vmem>>, %arg2: memref<4x16xf32, #tpu.memory_space<vmem>>, %arg3: memref<1x16xf32, #tpu.memory_space<vmem>>, %arg4: memref<72x16xf32, #tpu.memory_space<vmem>>, %arg5: memref<1x16xf32, #tpu.memory_space<vmem>>, %arg6: memref<72x8xf32, #tpu.memory_space<vmem>>, %arg7: memref<1x8xf32, #tpu.memory_space<vmem>>, %arg8: memref<4x8xf32, #tpu.memory_space<vmem>>, %arg9: memref<1x8xf32, #tpu.memory_space<vmem>>, %arg10: memref<1x16x16x32xf32, #tpu.memory_space<vmem>>, %arg11: memref<16x16x72xf32, #tpu.memory_space<vmem>>) attributes {dimension_semantics = [#tpu.dimension_semantics<parallel>], iteration_bounds = array<i64: 2>, scalar_prefetch = 0 : i64, scratch_operands = 1 : i64, tpu.core_type = #tpu.core_type<tc>, window_params = [{transform_indices = @transform_0, window_bounds = array<i64: 1, 16, 16, 4>}, {pipeline_mode = #tpu.pipeline_mode<synchronous>, transform_indices = @transform_1, window_bounds = array<i64: 4, 16>}, {pipeline_mode = #tpu.pipeline_mode<synchronous>, transform_indices = @transform_2, window_bounds = array<i64: 1, 16>}, {pipeline_mode = #tpu.pipeline_mode<synchronous>, transform_indices = @transform_3, window_bounds = array<i64: 72, 16>}, {pipeline_mode = #tpu.pipeline_mode<synchronous>, transform_indices = @transform_4, window_bounds = array<i64: 1, 16>}, {pipeline_mode = #tpu.pipeline_mode<synchronous>, transform_indices = @transform_5, window_bounds = array<i64: 72, 8>}, {pipeline_mode = #tpu.pipeline_mode<synchronous>, transform_indices = @transform_6, window_bounds = array<i64: 1, 8>}, {pipeline_mode = #tpu.pipeline_mode<synchronous>, transform_indices = @transform_7, window_bounds = array<i64: 4, 8>}, {pipeline_mode = #tpu.pipeline_mode<synchronous>, transform_indices = @transform_8, window_bounds = array<i64: 1, 8>}, {transform_indices = @transform_9, window_bounds = array<i64: 1, 16, 16, 32>}]} {
    %c0 = arith.constant 0 : index
    %c0_0 = arith.constant 0 : index
    %c0_1 = arith.constant 0 : index
    %c0_2 = arith.constant 0 : index
    %0 = vector.load %arg1[%c0, %c0_0, %c0_1, %c0_2] : memref<1x16x16x4xf32, #tpu.memory_space<vmem>>, vector<1x16x16x4xf32>
    %1 = vector.shape_cast %0 : vector<1x16x16x4xf32> to vector<16x16x4xf32>
    %2 = vector.shape_cast %1 : vector<16x16x4xf32> to vector<256x4xf32>
    %c0_3 = arith.constant 0 : index
    %c0_4 = arith.constant 0 : index
    %3 = vector.load %arg2[%c0_3, %c0_4] : memref<4x16xf32, #tpu.memory_space<vmem>>, vector<4x16xf32>
    %cst = arith.constant dense<0.000000e+00> : vector<256x16xf32>
    %4 = tpu.matmul %2, %3, %cst {dimension_numbers = #tpu.dot_dimension_numbers<[1], [0], [0], [1], [0, 0, 1, 1], [], []>} : vector<256x4xf32>, vector<4x16xf32>, vector<256x16xf32> -> vector<256x16xf32>
    %c0_5 = arith.constant 0 : index
    %c0_6 = arith.constant 0 : index
    %5 = vector.load %arg3[%c0_5, %c0_6] : memref<1x16xf32, #tpu.memory_space<vmem>>, vector<1x16xf32>
    %6 = vector.broadcast %5 : vector<1x16xf32> to vector<256x16xf32>
    %7 = arith.addf %4, %6 : vector<256x16xf32>
    %cst_7 = arith.constant 0.000000e+00 : f32
    %8 = vector.broadcast %cst_7 : f32 to vector<256x16xf32>
    %9 = arith.maximumf %7, %8 : vector<256x16xf32>
    %10 = vector.extract_strided_slice %9 {offsets = [0, 8], sizes = [256, 8], strides = [1, 1]} : vector<256x16xf32> to vector<256x8xf32>
    %cst_8 = arith.constant 0.000000e+00 : f32
    %11 = vector.broadcast %cst_8 : f32 to vector<1x16x8xf32>
    %cst_9 = arith.constant 0.000000e+00 : f32
    %12 = vector.broadcast %cst_9 : f32 to vector<16x1x8xf32>
    %c0_10 = arith.constant 0 : index
    %c0_11 = arith.constant 0 : index
    %c0_12 = arith.constant 0 : index
    %13 = vector.load %arg11[%c0_10, %c0_11, %c0_12] : memref<16x16x72xf32, #tpu.memory_space<vmem>>, vector<1x16x8xf32>
    tpu.vector_store %arg11[%c0_10, %c0_11, %c0_12], %11 {strides = array<i32>} : memref<16x16x72xf32, #tpu.memory_space<vmem>>, vector<1x16x8xf32>,
    %c0_13 = arith.constant 0 : index
    %c0_14 = arith.constant 0 : index
    %c0_15 = arith.constant 0 : index
    %14 = vector.load %arg11[%c0_13, %c0_14, %c0_15] : memref<16x16x72xf32, #tpu.memory_space<vmem>>, vector<16x1x8xf32>
    tpu.vector_store %arg11[%c0_13, %c0_14, %c0_15], %12 {strides = array<i32>} : memref<16x16x72xf32, #tpu.memory_space<vmem>>, vector<16x1x8xf32>,
    %c0_16 = arith.constant 0 : index
    %c0_17 = arith.constant 0 : index
    %c8 = arith.constant 8 : index
    %15 = vector.load %arg11[%c0_16, %c0_17, %c8] : memref<16x16x72xf32, #tpu.memory_space<vmem>>, vector<1x16x8xf32>
    tpu.vector_store %arg11[%c0_16, %c0_17, %c8], %11 {strides = array<i32>} : memref<16x16x72xf32, #tpu.memory_space<vmem>>, vector<1x16x8xf32>,
    %c0_18 = arith.constant 0 : index
    %c0_19 = arith.constant 0 : index
    %c16 = arith.constant 16 : index
    %16 = vector.load %arg11[%c0_18, %c0_19, %c16] : memref<16x16x72xf32, #tpu.memory_space<vmem>>, vector<1x16x8xf32>
    tpu.vector_store %arg11[%c0_18, %c0_19, %c16], %11 {strides = array<i32>} : memref<16x16x72xf32, #tpu.memory_space<vmem>>, vector<1x16x8xf32>,
    %c0_20 = arith.constant 0 : index
    %c15 = arith.constant 15 : index
    %c16_21 = arith.constant 16 : index
    %17 = vector.load %arg11[%c0_20, %c15, %c16_21] : memref<16x16x72xf32, #tpu.memory_space<vmem>>, vector<16x1x8xf32>
    tpu.vector_store %arg11[%c0_20, %c15, %c16_21], %12 {strides = array<i32>} : memref<16x16x72xf32, #tpu.memory_space<vmem>>, vector<16x1x8xf32>,
    %c0_22 = arith.constant 0 : index
    %c0_23 = arith.constant 0 : index
    %c24 = arith.constant 24 : index
    %18 = vector.load %arg11[%c0_22, %c0_23, %c24] : memref<16x16x72xf32, #tpu.memory_space<vmem>>, vector<16x1x8xf32>
    tpu.vector_store %arg11[%c0_22, %c0_23, %c24], %12 {strides = array<i32>} : memref<16x16x72xf32, #tpu.memory_space<vmem>>, vector<16x1x8xf32>,
    %c0_24 = arith.constant 0 : index
    %c15_25 = arith.constant 15 : index
    %c40 = arith.constant 40 : index
    %19 = vector.load %arg11[%c0_24, %c15_25, %c40] : memref<16x16x72xf32, #tpu.memory_space<vmem>>, vector<16x1x8xf32>
    tpu.vector_store %arg11[%c0_24, %c15_25, %c40], %12 {strides = array<i32>} : memref<16x16x72xf32, #tpu.memory_space<vmem>>, vector<16x1x8xf32>,
    %c15_26 = arith.constant 15 : index
    %c0_27 = arith.constant 0 : index
    %c48 = arith.constant 48 : index
    %20 = vector.load %arg11[%c15_26, %c0_27, %c48] : memref<16x16x72xf32, #tpu.memory_space<vmem>>, vector<1x16x8xf32>
    tpu.vector_store %arg11[%c15_26, %c0_27, %c48], %11 {strides = array<i32>} : memref<16x16x72xf32, #tpu.memory_space<vmem>>, vector<1x16x8xf32>,
    %c0_28 = arith.constant 0 : index
    %c0_29 = arith.constant 0 : index
    %c48_30 = arith.constant 48 : index
    %21 = vector.load %arg11[%c0_28, %c0_29, %c48_30] : memref<16x16x72xf32, #tpu.memory_space<vmem>>, vector<16x1x8xf32>
    tpu.vector_store %arg11[%c0_28, %c0_29, %c48_30], %12 {strides = array<i32>} : memref<16x16x72xf32, #tpu.memory_space<vmem>>, vector<16x1x8xf32>,
    %c15_31 = arith.constant 15 : index
    %c0_32 = arith.constant 0 : index
    %c56 = arith.constant 56 : index
    %22 = vector.load %arg11[%c15_31, %c0_32, %c56] : memref<16x16x72xf32, #tpu.memory_space<vmem>>, vector<1x16x8xf32>
    tpu.vector_store %arg11[%c15_31, %c0_32, %c56], %11 {strides = array<i32>} : memref<16x16x72xf32, #tpu.memory_space<vmem>>, vector<1x16x8xf32>,
    %c15_33 = arith.constant 15 : index
    %c0_34 = arith.constant 0 : index
    %c64 = arith.constant 64 : index
    %23 = vector.load %arg11[%c15_33, %c0_34, %c64] : memref<16x16x72xf32, #tpu.memory_space<vmem>>, vector<1x16x8xf32>
    tpu.vector_store %arg11[%c15_33, %c0_34, %c64], %11 {strides = array<i32>} : memref<16x16x72xf32, #tpu.memory_space<vmem>>, vector<1x16x8xf32>,
    %c0_35 = arith.constant 0 : index
    %c15_36 = arith.constant 15 : index
    %c64_37 = arith.constant 64 : index
    %24 = vector.load %arg11[%c0_35, %c15_36, %c64_37] : memref<16x16x72xf32, #tpu.memory_space<vmem>>, vector<16x1x8xf32>
    tpu.vector_store %arg11[%c0_35, %c15_36, %c64_37], %12 {strides = array<i32>} : memref<16x16x72xf32, #tpu.memory_space<vmem>>, vector<16x1x8xf32>,
    %25 = vector.extract_strided_slice %9 {offsets = [0, 0], sizes = [256, 8], strides = [1, 1]} : vector<256x16xf32> to vector<256x8xf32>
    %26 = vector.shape_cast %25 : vector<256x8xf32> to vector<16x16x8xf32>
    %27 = vector.extract_strided_slice %26 {offsets = [0, 0, 0], sizes = [15, 15, 8], strides = [1, 1, 1]} : vector<16x16x8xf32> to vector<15x15x8xf32>
    %c1 = arith.constant 1 : index
    %c1_38 = arith.constant 1 : index
    %c0_39 = arith.constant 0 : index
    %28 = vector.load %arg11[%c1, %c1_38, %c0_39] : memref<16x16x72xf32, #tpu.memory_space<vmem>>, vector<15x15x8xf32>
    tpu.vector_store %arg11[%c1, %c1_38, %c0_39], %27 {strides = array<i32>} : memref<16x16x72xf32, #tpu.memory_space<vmem>>, vector<15x15x8xf32>,
    %29 = vector.extract_strided_slice %26 {offsets = [0, 0, 0], sizes = [15, 16, 8], strides = [1, 1, 1]} : vector<16x16x8xf32> to vector<15x16x8xf32>
    %c1_40 = arith.constant 1 : index
    %c0_41 = arith.constant 0 : index
    %c8_42 = arith.constant 8 : index
    %30 = vector.load %arg11[%c1_40, %c0_41, %c8_42] : memref<16x16x72xf32, #tpu.memory_space<vmem>>, vector<15x16x8xf32>
    tpu.vector_store %arg11[%c1_40, %c0_41, %c8_42], %29 {strides = array<i32>} : memref<16x16x72xf32, #tpu.memory_space<vmem>>, vector<15x16x8xf32>,
    %31 = vector.extract_strided_slice %26 {offsets = [0, 1, 0], sizes = [15, 15, 8], strides = [1, 1, 1]} : vector<16x16x8xf32> to vector<15x15x8xf32>
    %c1_43 = arith.constant 1 : index
    %c0_44 = arith.constant 0 : index
    %c16_45 = arith.constant 16 : index
    %32 = vector.load %arg11[%c1_43, %c0_44, %c16_45] : memref<16x16x72xf32, #tpu.memory_space<vmem>>, vector<15x15x8xf32>
    tpu.vector_store %arg11[%c1_43, %c0_44, %c16_45], %31 {strides = array<i32>} : memref<16x16x72xf32, #tpu.memory_space<vmem>>, vector<15x15x8xf32>,
    %33 = vector.extract_strided_slice %26 {offsets = [0, 0, 0], sizes = [16, 15, 8], strides = [1, 1, 1]} : vector<16x16x8xf32> to vector<16x15x8xf32>
    %c0_46 = arith.constant 0 : index
    %c1_47 = arith.constant 1 : index
    %c24_48 = arith.constant 24 : index
    %34 = vector.load %arg11[%c0_46, %c1_47, %c24_48] : memref<16x16x72xf32, #tpu.memory_space<vmem>>, vector<16x15x8xf32>
    tpu.vector_store %arg11[%c0_46, %c1_47, %c24_48], %33 {strides = array<i32>} : memref<16x16x72xf32, #tpu.memory_space<vmem>>, vector<16x15x8xf32>,
    %c0_49 = arith.constant 0 : index
    %c0_50 = arith.constant 0 : index
    %c32 = arith.constant 32 : index
    %35 = vector.load %arg11[%c0_49, %c0_50, %c32] : memref<16x16x72xf32, #tpu.memory_space<vmem>>, vector<16x16x8xf32>
    tpu.vector_store %arg11[%c0_49, %c0_50, %c32], %26 {strides = array<i32>} : memref<16x16x72xf32, #tpu.memory_space<vmem>>, vector<16x16x8xf32>,
    %36 = vector.extract_strided_slice %26 {offsets = [0, 1, 0], sizes = [16, 15, 8], strides = [1, 1, 1]} : vector<16x16x8xf32> to vector<16x15x8xf32>
    %c0_51 = arith.constant 0 : index
    %c0_52 = arith.constant 0 : index
    %c40_53 = arith.constant 40 : index
    %37 = vector.load %arg11[%c0_51, %c0_52, %c40_53] : memref<16x16x72xf32, #tpu.memory_space<vmem>>, vector<16x15x8xf32>
    tpu.vector_store %arg11[%c0_51, %c0_52, %c40_53], %36 {strides = array<i32>} : memref<16x16x72xf32, #tpu.memory_space<vmem>>, vector<16x15x8xf32>,
    %38 = vector.extract_strided_slice %26 {offsets = [1, 0, 0], sizes = [15, 15, 8], strides = [1, 1, 1]} : vector<16x16x8xf32> to vector<15x15x8xf32>
    %c0_54 = arith.constant 0 : index
    %c1_55 = arith.constant 1 : index
    %c48_56 = arith.constant 48 : index
    %39 = vector.load %arg11[%c0_54, %c1_55, %c48_56] : memref<16x16x72xf32, #tpu.memory_space<vmem>>, vector<15x15x8xf32>
    tpu.vector_store %arg11[%c0_54, %c1_55, %c48_56], %38 {strides = array<i32>} : memref<16x16x72xf32, #tpu.memory_space<vmem>>, vector<15x15x8xf32>,
    %40 = vector.extract_strided_slice %26 {offsets = [1, 0, 0], sizes = [15, 16, 8], strides = [1, 1, 1]} : vector<16x16x8xf32> to vector<15x16x8xf32>
    %c0_57 = arith.constant 0 : index
    %c0_58 = arith.constant 0 : index
    %c56_59 = arith.constant 56 : index
    %41 = vector.load %arg11[%c0_57, %c0_58, %c56_59] : memref<16x16x72xf32, #tpu.memory_space<vmem>>, vector<15x16x8xf32>
    tpu.vector_store %arg11[%c0_57, %c0_58, %c56_59], %40 {strides = array<i32>} : memref<16x16x72xf32, #tpu.memory_space<vmem>>, vector<15x16x8xf32>,
    %42 = vector.extract_strided_slice %26 {offsets = [1, 1, 0], sizes = [15, 15, 8], strides = [1, 1, 1]} : vector<16x16x8xf32> to vector<15x15x8xf32>
    %c0_60 = arith.constant 0 : index
    %c0_61 = arith.constant 0 : index
    %c64_62 = arith.constant 64 : index
    %43 = vector.load %arg11[%c0_60, %c0_61, %c64_62] : memref<16x16x72xf32, #tpu.memory_space<vmem>>, vector<15x15x8xf32>
    tpu.vector_store %arg11[%c0_60, %c0_61, %c64_62], %42 {strides = array<i32>} : memref<16x16x72xf32, #tpu.memory_space<vmem>>, vector<15x15x8xf32>,
    %c0_63 = arith.constant 0 : index
    %c0_64 = arith.constant 0 : index
    %c0_65 = arith.constant 0 : index
    %44 = vector.load %arg11[%c0_63, %c0_64, %c0_65] : memref<16x16x72xf32, #tpu.memory_space<vmem>>, vector<16x16x72xf32>
    %45 = vector.shape_cast %44 : vector<16x16x72xf32> to vector<256x72xf32>
    %c0_66 = arith.constant 0 : index
    %c0_67 = arith.constant 0 : index
    %46 = vector.load %arg4[%c0_66, %c0_67] : memref<72x16xf32, #tpu.memory_space<vmem>>, vector<72x16xf32>
    %cst_68 = arith.constant dense<0.000000e+00> : vector<256x16xf32>
    %47 = tpu.matmul %45, %46, %cst_68 {dimension_numbers = #tpu.dot_dimension_numbers<[1], [0], [0], [1], [0, 0, 1, 1], [], []>} : vector<256x72xf32>, vector<72x16xf32>, vector<256x16xf32> -> vector<256x16xf32>
    %c0_69 = arith.constant 0 : index
    %c0_70 = arith.constant 0 : index
    %48 = vector.load %arg5[%c0_69, %c0_70] : memref<1x16xf32, #tpu.memory_space<vmem>>, vector<1x16xf32>
    %49 = vector.broadcast %48 : vector<1x16xf32> to vector<256x16xf32>
    %50 = arith.addf %47, %49 : vector<256x16xf32>
    %cst_71 = arith.constant 0.000000e+00 : f32
    %51 = vector.broadcast %cst_71 : f32 to vector<256x16xf32>
    %52 = arith.maximumf %50, %51 : vector<256x16xf32>
    %53 = vector.extract_strided_slice %52 {offsets = [0, 0], sizes = [256, 8], strides = [1, 1]} : vector<256x16xf32> to vector<256x8xf32>
    %54 = vector.extract_strided_slice %52 {offsets = [0, 8], sizes = [256, 8], strides = [1, 1]} : vector<256x16xf32> to vector<256x8xf32>
    %55 = vector.shape_cast %54 : vector<256x8xf32> to vector<16x16x8xf32>
    %56 = vector.extract_strided_slice %55 {offsets = [0, 0, 0], sizes = [15, 15, 8], strides = [1, 1, 1]} : vector<16x16x8xf32> to vector<15x15x8xf32>
    %c1_72 = arith.constant 1 : index
    %c1_73 = arith.constant 1 : index
    %c0_74 = arith.constant 0 : index
    %57 = vector.load %arg11[%c1_72, %c1_73, %c0_74] : memref<16x16x72xf32, #tpu.memory_space<vmem>>, vector<15x15x8xf32>
    tpu.vector_store %arg11[%c1_72, %c1_73, %c0_74], %56 {strides = array<i32>} : memref<16x16x72xf32, #tpu.memory_space<vmem>>, vector<15x15x8xf32>,
    %58 = vector.extract_strided_slice %55 {offsets = [0, 0, 0], sizes = [15, 16, 8], strides = [1, 1, 1]} : vector<16x16x8xf32> to vector<15x16x8xf32>
    %c1_75 = arith.constant 1 : index
    %c0_76 = arith.constant 0 : index
    %c8_77 = arith.constant 8 : index
    %59 = vector.load %arg11[%c1_75, %c0_76, %c8_77] : memref<16x16x72xf32, #tpu.memory_space<vmem>>, vector<15x16x8xf32>
    tpu.vector_store %arg11[%c1_75, %c0_76, %c8_77], %58 {strides = array<i32>} : memref<16x16x72xf32, #tpu.memory_space<vmem>>, vector<15x16x8xf32>,
    %60 = vector.extract_strided_slice %55 {offsets = [0, 1, 0], sizes = [15, 15, 8], strides = [1, 1, 1]} : vector<16x16x8xf32> to vector<15x15x8xf32>
    %c1_78 = arith.constant 1 : index
    %c0_79 = arith.constant 0 : index
    %c16_80 = arith.constant 16 : index
    %61 = vector.load %arg11[%c1_78, %c0_79, %c16_80] : memref<16x16x72xf32, #tpu.memory_space<vmem>>, vector<15x15x8xf32>
    tpu.vector_store %arg11[%c1_78, %c0_79, %c16_80], %60 {strides = array<i32>} : memref<16x16x72xf32, #tpu.memory_space<vmem>>, vector<15x15x8xf32>,
    %62 = vector.extract_strided_slice %55 {offsets = [0, 0, 0], sizes = [16, 15, 8], strides = [1, 1, 1]} : vector<16x16x8xf32> to vector<16x15x8xf32>
    %c0_81 = arith.constant 0 : index
    %c1_82 = arith.constant 1 : index
    %c24_83 = arith.constant 24 : index
    %63 = vector.load %arg11[%c0_81, %c1_82, %c24_83] : memref<16x16x72xf32, #tpu.memory_space<vmem>>, vector<16x15x8xf32>
    tpu.vector_store %arg11[%c0_81, %c1_82, %c24_83], %62 {strides = array<i32>} : memref<16x16x72xf32, #tpu.memory_space<vmem>>, vector<16x15x8xf32>,
    %c0_84 = arith.constant 0 : index
    %c0_85 = arith.constant 0 : index
    %c32_86 = arith.constant 32 : index
    %64 = vector.load %arg11[%c0_84, %c0_85, %c32_86] : memref<16x16x72xf32, #tpu.memory_space<vmem>>, vector<16x16x8xf32>
    tpu.vector_store %arg11[%c0_84, %c0_85, %c32_86], %55 {strides = array<i32>} : memref<16x16x72xf32, #tpu.memory_space<vmem>>, vector<16x16x8xf32>,
    %65 = vector.extract_strided_slice %55 {offsets = [0, 1, 0], sizes = [16, 15, 8], strides = [1, 1, 1]} : vector<16x16x8xf32> to vector<16x15x8xf32>
    %c0_87 = arith.constant 0 : index
    %c0_88 = arith.constant 0 : index
    %c40_89 = arith.constant 40 : index
    %66 = vector.load %arg11[%c0_87, %c0_88, %c40_89] : memref<16x16x72xf32, #tpu.memory_space<vmem>>, vector<16x15x8xf32>
    tpu.vector_store %arg11[%c0_87, %c0_88, %c40_89], %65 {strides = array<i32>} : memref<16x16x72xf32, #tpu.memory_space<vmem>>, vector<16x15x8xf32>,
    %67 = vector.extract_strided_slice %55 {offsets = [1, 0, 0], sizes = [15, 15, 8], strides = [1, 1, 1]} : vector<16x16x8xf32> to vector<15x15x8xf32>
    %c0_90 = arith.constant 0 : index
    %c1_91 = arith.constant 1 : index
    %c48_92 = arith.constant 48 : index
    %68 = vector.load %arg11[%c0_90, %c1_91, %c48_92] : memref<16x16x72xf32, #tpu.memory_space<vmem>>, vector<15x15x8xf32>
    tpu.vector_store %arg11[%c0_90, %c1_91, %c48_92], %67 {strides = array<i32>} : memref<16x16x72xf32, #tpu.memory_space<vmem>>, vector<15x15x8xf32>,
    %69 = vector.extract_strided_slice %55 {offsets = [1, 0, 0], sizes = [15, 16, 8], strides = [1, 1, 1]} : vector<16x16x8xf32> to vector<15x16x8xf32>
    %c0_93 = arith.constant 0 : index
    %c0_94 = arith.constant 0 : index
    %c56_95 = arith.constant 56 : index
    %70 = vector.load %arg11[%c0_93, %c0_94, %c56_95] : memref<16x16x72xf32, #tpu.memory_space<vmem>>, vector<15x16x8xf32>
    tpu.vector_store %arg11[%c0_93, %c0_94, %c56_95], %69 {strides = array<i32>} : memref<16x16x72xf32, #tpu.memory_space<vmem>>, vector<15x16x8xf32>,
    %71 = vector.extract_strided_slice %55 {offsets = [1, 1, 0], sizes = [15, 15, 8], strides = [1, 1, 1]} : vector<16x16x8xf32> to vector<15x15x8xf32>
    %c0_96 = arith.constant 0 : index
    %c0_97 = arith.constant 0 : index
    %c64_98 = arith.constant 64 : index
    %72 = vector.load %arg11[%c0_96, %c0_97, %c64_98] : memref<16x16x72xf32, #tpu.memory_space<vmem>>, vector<15x15x8xf32>
    tpu.vector_store %arg11[%c0_96, %c0_97, %c64_98], %71 {strides = array<i32>} : memref<16x16x72xf32, #tpu.memory_space<vmem>>, vector<15x15x8xf32>,
    %c0_99 = arith.constant 0 : index
    %c0_100 = arith.constant 0 : index
    %c0_101 = arith.constant 0 : index
    %73 = vector.load %arg11[%c0_99, %c0_100, %c0_101] : memref<16x16x72xf32, #tpu.memory_space<vmem>>, vector<16x16x72xf32>
    %74 = vector.shape_cast %73 : vector<16x16x72xf32> to vector<256x72xf32>
    %c0_102 = arith.constant 0 : index
    %c0_103 = arith.constant 0 : index
    %75 = vector.load %arg6[%c0_102, %c0_103] : memref<72x8xf32, #tpu.memory_space<vmem>>, vector<72x8xf32>
    %cst_104 = arith.constant dense<0.000000e+00> : vector<256x8xf32>
    %76 = tpu.matmul %74, %75, %cst_104 {dimension_numbers = #tpu.dot_dimension_numbers<[1], [0], [0], [1], [0, 0, 1, 1], [], []>} : vector<256x72xf32>, vector<72x8xf32>, vector<256x8xf32> -> vector<256x8xf32>
    %c0_105 = arith.constant 0 : index
    %c0_106 = arith.constant 0 : index
    %77 = vector.load %arg7[%c0_105, %c0_106] : memref<1x8xf32, #tpu.memory_space<vmem>>, vector<1x8xf32>
    %78 = vector.broadcast %77 : vector<1x8xf32> to vector<256x8xf32>
    %79 = arith.addf %76, %78 : vector<256x8xf32>
    %cst_107 = arith.constant 0.000000e+00 : f32
    %80 = vector.broadcast %cst_107 : f32 to vector<256x8xf32>
    %81 = arith.maximumf %79, %80 : vector<256x8xf32>
    %82 = tpu.iota {dimensions = array<i32: 1>} : vector<16x16x4xi32>
    %83 = vector.shape_cast %82 : vector<16x16x4xi32> to vector<256x4xi32>
    %c15_i32 = arith.constant 15 : i32
    %84 = vector.broadcast %c15_i32 : i32 to vector<256x4xi32>
    %85 = arith.cmpi slt, %83, %84 : vector<256x4xi32>
    %c255_i32 = arith.constant 255 : i32
    %86 = tpu.dynamic_rotate %2 by %c255_i32 dim 0 : vector<256x4xf32>, i32 -> vector<256x4xf32>
    %87 = arith.select %85, %86, %2 : vector<256x4xi1>, vector<256x4xf32>
    %c0_i32 = arith.constant 0 : i32
    %88 = vector.broadcast %c0_i32 : i32 to vector<256x4xi32>
    %89 = arith.cmpi sgt, %83, %88 : vector<256x4xi32>
    %c1_i32 = arith.constant 1 : i32
    %90 = tpu.dynamic_rotate %2 by %c1_i32 dim 0 : vector<256x4xf32>, i32 -> vector<256x4xf32>
    %91 = arith.select %89, %90, %2 : vector<256x4xi1>, vector<256x4xf32>
    %92 = arith.maximumf %87, %91 : vector<256x4xf32>
    %93 = arith.maximumf %2, %92 : vector<256x4xf32>
    %94 = vector.shape_cast %93 : vector<256x4xf32> to vector<16x16x4xf32>
    %95 = vector.extract_strided_slice %94 {offsets = [1, 0, 0], sizes = [15, 16, 4], strides = [1, 1, 1]} : vector<16x16x4xf32> to vector<15x16x4xf32>
    %96 = vector.extract_strided_slice %94 {offsets = [15, 0, 0], sizes = [1, 16, 4], strides = [1, 1, 1]} : vector<16x16x4xf32> to vector<1x16x4xf32>
    %97 = tpu.concatenate %95, %96 in 0 : vector<15x16x4xf32>, vector<1x16x4xf32> -> vector<16x16x4xf32>
    %98 = vector.extract_strided_slice %94 {offsets = [0, 0, 0], sizes = [1, 16, 4], strides = [1, 1, 1]} : vector<16x16x4xf32> to vector<1x16x4xf32>
    %99 = vector.extract_strided_slice %94 {offsets = [0, 0, 0], sizes = [15, 16, 4], strides = [1, 1, 1]} : vector<16x16x4xf32> to vector<15x16x4xf32>
    %100 = tpu.concatenate %98, %99 in 0 : vector<1x16x4xf32>, vector<15x16x4xf32> -> vector<16x16x4xf32>
    %101 = arith.maximumf %97, %100 : vector<16x16x4xf32>
    %102 = arith.maximumf %94, %101 : vector<16x16x4xf32>
    %103 = vector.shape_cast %102 : vector<16x16x4xf32> to vector<256x4xf32>
    %c0_108 = arith.constant 0 : index
    %c0_109 = arith.constant 0 : index
    %104 = vector.load %arg8[%c0_108, %c0_109] : memref<4x8xf32, #tpu.memory_space<vmem>>, vector<4x8xf32>
    %cst_110 = arith.constant dense<0.000000e+00> : vector<256x8xf32>
    %105 = tpu.matmul %103, %104, %cst_110 {dimension_numbers = #tpu.dot_dimension_numbers<[1], [0], [0], [1], [0, 0, 1, 1], [], []>} : vector<256x4xf32>, vector<4x8xf32>, vector<256x8xf32> -> vector<256x8xf32>
    %c0_111 = arith.constant 0 : index
    %c0_112 = arith.constant 0 : index
    %106 = vector.load %arg9[%c0_111, %c0_112] : memref<1x8xf32, #tpu.memory_space<vmem>>, vector<1x8xf32>
    %107 = vector.broadcast %106 : vector<1x8xf32> to vector<256x8xf32>
    %108 = arith.addf %105, %107 : vector<256x8xf32>
    %cst_113 = arith.constant 0.000000e+00 : f32
    %109 = vector.broadcast %cst_113 : f32 to vector<256x8xf32>
    %110 = arith.maximumf %108, %109 : vector<256x8xf32>
    %111 = tpu.concatenate %10, %53, %81, %110 in 1 : vector<256x8xf32>, vector<256x8xf32>, vector<256x8xf32>, vector<256x8xf32> -> vector<256x32xf32>
    %112 = vector.shape_cast %111 : vector<256x32xf32> to vector<16x16x32xf32>
    %c0_114 = arith.constant 0 : index
    %c0_115 = arith.constant 0 : index
    %c0_116 = arith.constant 0 : index
    %c0_117 = arith.constant 0 : index
    %113 = vector.load %arg10[%c0_114, %c0_115, %c0_116, %c0_117] : memref<1x16x16x32xf32, #tpu.memory_space<vmem>>, vector<1x16x16x32xf32>
    %114 = vector.shape_cast %113 : vector<1x16x16x32xf32> to vector<16x16x32xf32>
    %115 = vector.shape_cast %112 : vector<16x16x32xf32> to vector<1x16x16x32xf32>
    tpu.vector_store %arg10[%c0_114, %c0_115, %c0_116, %c0_117], %115 {strides = array<i32>} : memref<1x16x16x32xf32, #tpu.memory_space<vmem>>, vector<1x16x16x32xf32>,
    return
  }
  func.func @transform_0(%arg0: i32) -> (i32, i32, i32, i32) {
    %c0_i32 = arith.constant 0 : i32
    %c0_i32_0 = arith.constant 0 : i32
    %c0_i32_1 = arith.constant 0 : i32
    %c0_i32_2 = arith.constant 0 : i32
    return %arg0, %c0_i32, %c0_i32_0, %c0_i32_1 : i32, i32, i32, i32
  }
  func.func @transform_1(%arg0: i32) -> (i32, i32) {
    %c0_i32 = arith.constant 0 : i32
    %c0_i32_0 = arith.constant 0 : i32
    %c0_i32_1 = arith.constant 0 : i32
    return %c0_i32, %c0_i32_0 : i32, i32
  }
  func.func @transform_2(%arg0: i32) -> (i32, i32) {
    %c0_i32 = arith.constant 0 : i32
    %c0_i32_0 = arith.constant 0 : i32
    %c0_i32_1 = arith.constant 0 : i32
    return %c0_i32, %c0_i32_0 : i32, i32
  }
  func.func @transform_3(%arg0: i32) -> (i32, i32) {
    %c0_i32 = arith.constant 0 : i32
    %c0_i32_0 = arith.constant 0 : i32
    %c0_i32_1 = arith.constant 0 : i32
    return %c0_i32, %c0_i32_0 : i32, i32
  }
  func.func @transform_4(%arg0: i32) -> (i32, i32) {
    %c0_i32 = arith.constant 0 : i32
    %c0_i32_0 = arith.constant 0 : i32
    %c0_i32_1 = arith.constant 0 : i32
    return %c0_i32, %c0_i32_0 : i32, i32
  }
  func.func @transform_5(%arg0: i32) -> (i32, i32) {
    %c0_i32 = arith.constant 0 : i32
    %c0_i32_0 = arith.constant 0 : i32
    %c0_i32_1 = arith.constant 0 : i32
    return %c0_i32, %c0_i32_0 : i32, i32
  }
  func.func @transform_6(%arg0: i32) -> (i32, i32) {
    %c0_i32 = arith.constant 0 : i32
    %c0_i32_0 = arith.constant 0 : i32
    %c0_i32_1 = arith.constant 0 : i32
    return %c0_i32, %c0_i32_0 : i32, i32
  }
  func.func @transform_7(%arg0: i32) -> (i32, i32) {
    %c0_i32 = arith.constant 0 : i32
    %c0_i32_0 = arith.constant 0 : i32
    %c0_i32_1 = arith.constant 0 : i32
    return %c0_i32, %c0_i32_0 : i32, i32
  }
  func.func @transform_8(%arg0: i32) -> (i32, i32) {
    %c0_i32 = arith.constant 0 : i32
    %c0_i32_0 = arith.constant 0 : i32
    %c0_i32_1 = arith.constant 0 : i32
    return %c0_i32, %c0_i32_0 : i32, i32
  }
  func.func @transform_9(%arg0: i32) -> (i32, i32, i32, i32) {
    %c0_i32 = arith.constant 0 : i32
    %c0_i32_0 = arith.constant 0 : i32
    %c0_i32_1 = arith.constant 0 : i32
    %c0_i32_2 = arith.constant 0 : i32
    return %arg0, %c0_i32, %c0_i32_0, %c0_i32_1 : i32, i32, i32, i32
  }
}

</mosaic_0001>

<llo_original>
// kernel: _lambda_.1
$region0: #{_lambda_.1}
  #allocation0 [shape = 'u32[]', space=smem, size = 0x4, offset = 0x4, fixed_abs, tag = 'smem constant byte address 0x4 - core index']
  #allocation1 [shape = 'u32[144,128]{1,0:T(1,128)}', space=vmem, size = 0x12000, scoped, tag = 'internal scratch']
  #allocation2 [shape = 'f32[16,16,72]{2,1,0:T(8,128)}', space=vmem, size = 0x20000, scoped, tag = 'scratch operand']
  %s0 = inlined_call_operand.vmem [shape: f32[2,16,16,4], index: 0, kind: input, shape index: {}]
  %s1 = inlined_call_operand.vmem [shape: f32[4,16], index: 1, kind: input, shape index: {}]
  %s2 = inlined_call_operand.vmem [shape: f32[1,16], index: 2, kind: input, shape index: {}]
  %s3 = inlined_call_operand.vmem [shape: f32[72,16], index: 3, kind: input, shape index: {}]
  %s4 = inlined_call_operand.vmem [shape: f32[1,16], index: 4, kind: input, shape index: {}]
  %s5 = inlined_call_operand.vmem [shape: f32[72,8], index: 5, kind: input, shape index: {}]
  %s6 = inlined_call_operand.vmem [shape: f32[1,8], index: 6, kind: input, shape index: {}]
  %s7 = inlined_call_operand.vmem [shape: f32[4,8], index: 7, kind: input, shape index: {}]
  %s8 = inlined_call_operand.vmem [shape: f32[1,8], index: 8, kind: input, shape index: {}]
  %s9 = inlined_call_operand.hbm [shape: f32[2,16,16,32], index: 9, kind: output, shape index: {}]
  %s10 = sld [smem:[#allocation0]]
  $region69: #{_lambda_.1} parent=0
    _
  %s12 = ssub.s32 1, %s10
  %s13 = scalar_select 0, %s12, %s10
  $region1: #{_lambda_.1} parent=0
    #allocation3 [shape = 'u8[262144]{0}', space=vmem, size = 0x40000, scoped, tag = 'output window, operand 0']
    #allocation4 [shape = 's32[2]{0}', space=sflag, size = 0x8, scoped, tag = 'scoped memory for _lambda_.1']
    %14 = vsyncpa [#allocation4], 0
    %s15 = scalar_lea.sflag [#allocation4], 1
    %16 = vsyncpa %s15, 0
    loop: start=0, step=1, limit=4
    $region2: #{_lambda_.1} parent=1 // loop_pre_header
      _
    $region3: #{_lambda_.1} parent=1 // loop_header
      %s18 = sphi 0, %s22
      %p19 = scmp.ge.s32.totalorder %s18, 4
      %s28 = sphi 0, %s30
      %s31 = sphi 0, %s28
      %s32 = sphi 0, %s31
      %s48 = sphi 0, %s32
      %s52 = sphi 0, %s52
      %s54 = sphi 0, %s52
      %s55 = sphi 0, %s54
      %s69 = sphi 0, %s55
      %s73 = sphi 0, %s73
      %s75 = sphi 0, %s73
      %s76 = sphi 0, %s75
      %s90 = sphi 0, %s76
      %s94 = sphi 0, %s94
      %s96 = sphi 0, %s94
      %s97 = sphi 0, %s96
      %s111 = sphi 0, %s97
      %s115 = sphi 0, %s115
      %s117 = sphi 0, %s115
      %s118 = sphi 0, %s117
      %s132 = sphi 0, %s118
      %s136 = sphi 0, %s136
      %s138 = sphi 0, %s136
      %s139 = sphi 0, %s138
      %s153 = sphi 0, %s139
      %s157 = sphi 0, %s157
      %s159 = sphi 0, %s157
      %s160 = sphi 0, %s159
      %s174 = sphi 0, %s160
      %s178 = sphi 0, %s178
      %s180 = sphi 0, %s178
      %s181 = sphi 0, %s180
      %s195 = sphi 0, %s181
      %s199 = sphi 0, %s199
      %s201 = sphi 0, %s199
      %s202 = sphi 0, %s201
      %s216 = sphi 0, %s202
      %s222 = sphi 0, %s224
      %s225 = sphi 0, %s222
      %s226 = sphi 0, %s225
      %s242 = sphi 0, %s226
    $region4: #{_lambda_.1} parent=1 // loop_header_branch
      %21 = sbr.rel (%p19) target = $region8
    $region5: #{_lambda_.1} parent=1 // loop_body
      %s23 = ssub.s32 %s18, 1
      %s24 = ssub.s32 %s18, 2
      %s25 = sadd.s32 %s18, 1
      %s26 = ssub.s32 %s18, %s25
      %p27 = scmp.eq.s32.totalorder %s26, 0
      %s29 = sadd.s32 %s28, 1
      %s30 = scalar_select %p27, %s28, %s29
      %p33 = pneg %p27
      %p34 = scmp.eq.s32.totalorder %s18, 1
      %p35 = por %p33, %p34
      %p36 = scmp.ne.s32.totalorder %s28, %s31
      %p37 = scmp.eq.s32.totalorder %s18, 0
      %p38 = por %p36, %p37
      %p39 = scmp.ne.s32.totalorder %s28, %s31
      %p40 = scmp.eq.s32.totalorder %s23, 1
      %p41 = por %p39, %p40
      %p42 = scmp.ne.s32.totalorder %s31, %s32
      %p43 = scmp.eq.s32.totalorder %s23, 0
      %p44 = por %p42, %p43
      %p45 = scmp.ne.s32.totalorder %s31, %s32
      %p46 = scmp.eq.s32.totalorder %s24, 1
      %p47 = por %p45, %p46
      %p49 = scmp.ne.s32.totalorder %s32, %s48
      %p50 = scmp.eq.s32.totalorder %s24, 0
      %p51 = por %p49, %p50
      %s53 = sadd.s32 %s52, 1
      %p56 = scmp.eq.s32.totalorder %s18, 1
      %p57 = scmp.ne.s32.totalorder %s52, %s54
      %p58 = scmp.eq.s32.totalorder %s18, 0
      %p59 = por %p57, %p58
      %p60 = scmp.ne.s32.totalorder %s52, %s54
      %p61 = scmp.eq.s32.totalorder %s23, 1
      %p62 = por %p60, %p61
      %p63 = scmp.ne.s32.totalorder %s54, %s55
      %p64 = scmp.eq.s32.totalorder %s23, 0
      %p65 = por %p63, %p64
      %p66 = scmp.ne.s32.totalorder %s54, %s55
      %p67 = scmp.eq.s32.totalorder %s24, 1
      %p68 = por %p66, %p67
      %p70 = scmp.ne.s32.totalorder %s55, %s69
      %p71 = scmp.eq.s32.totalorder %s24, 0
      %p72 = por %p70, %p71
      %s74 = sadd.s32 %s73, 1
      %p77 = scmp.eq.s32.totalorder %s18, 1
      %p78 = scmp.ne.s32.totalorder %s73, %s75
      %p79 = scmp.eq.s32.totalorder %s18, 0
      %p80 = por %p78, %p79
      %p81 = scmp.ne.s32.totalorder %s73, %s75
      %p82 = scmp.eq.s32.totalorder %s23, 1
      %p83 = por %p81, %p82
      %p84 = scmp.ne.s32.totalorder %s75, %s76
      %p85 = scmp.eq.s32.totalorder %s23, 0
      %p86 = por %p84, %p85
      %p87 = scmp.ne.s32.totalorder %s75, %s76
      %p88 = scmp.eq.s32.totalorder %s24, 1
      %p89 = por %p87, %p88
      %p91 = scmp.ne.s32.totalorder %s76, %s90
      %p92 = scmp.eq.s32.totalorder %s24, 0
      %p93 = por %p91, %p92
      %s95 = sadd.s32 %s94, 1
      %p98 = scmp.eq.s32.totalorder %s18, 1
      %p99 = scmp.ne.s32.totalorder %s94, %s96
      %p100 = scmp.eq.s32.totalorder %s18, 0
      %p101 = por %p99, %p100
      %p102 = scmp.ne.s32.totalorder %s94, %s96
      %p103 = scmp.eq.s32.totalorder %s23, 1
      %p104 = por %p102, %p103
      %p105 = scmp.ne.s32.totalorder %s96, %s97
      %p106 = scmp.eq.s32.totalorder %s23, 0
      %p107 = por %p105, %p106
      %p108 = scmp.ne.s32.totalorder %s96, %s97
      %p109 = scmp.eq.s32.totalorder %s24, 1
      %p110 = por %p108, %p109
      %p112 = scmp.ne.s32.totalorder %s97, %s111
      %p113 = scmp.eq.s32.totalorder %s24, 0
      %p114 = por %p112, %p113
      %s116 = sadd.s32 %s115, 1
      %p119 = scmp.eq.s32.totalorder %s18, 1
      %p120 = scmp.ne.s32.totalorder %s115, %s117
      %p121 = scmp.eq.s32.totalorder %s18, 0
      %p122 = por %p120, %p121
      %p123 = scmp.ne.s32.totalorder %s115, %s117
      %p124 = scmp.eq.s32.totalorder %s23, 1
      %p125 = por %p123, %p124
      %p126 = scmp.ne.s32.totalorder %s117, %s118
      %p127 = scmp.eq.s32.totalorder %s23, 0
      %p128 = por %p126, %p127
      %p129 = scmp.ne.s32.totalorder %s117, %s118
      %p130 = scmp.eq.s32.totalorder %s24, 1
      %p131 = por %p129, %p130
      %p133 = scmp.ne.s32.totalorder %s118, %s132
      %p134 = scmp.eq.s32.totalorder %s24, 0
      %p135 = por %p133, %p134
      %s137 = sadd.s32 %s136, 1
      %p140 = scmp.eq.s32.totalorder %s18, 1
      %p141 = scmp.ne.s32.totalorder %s136, %s138
      %p142 = scmp.eq.s32.totalorder %s18, 0
      %p143 = por %p141, %p142
      %p144 = scmp.ne.s32.totalorder %s136, %s138
      %p145 = scmp.eq.s32.totalorder %s23, 1
      %p146 = por %p144, %p145
      %p147 = scmp.ne.s32.totalorder %s138, %s139
      %p148 = scmp.eq.s32.totalorder %s23, 0
      %p149 = por %p147, %p148
      %p150 = scmp.ne.s32.totalorder %s138, %s139
      %p151 = scmp.eq.s32.totalorder %s24, 1
      %p152 = por %p150, %p151
      %p154 = scmp.ne.s32.totalorder %s139, %s153
      %p155 = scmp.eq.s32.totalorder %s24, 0
      %p156 = por %p154, %p155
      %s158 = sadd.s32 %s157, 1
      %p161 = scmp.eq.s32.totalorder %s18, 1
      %p162 = scmp.ne.s32.totalorder %s157, %s159
      %p163 = scmp.eq.s32.totalorder %s18, 0
      %p164 = por %p162, %p163
      %p165 = scmp.ne.s32.totalorder %s157, %s159
      %p166 = scmp.eq.s32.totalorder %s23, 1
      %p167 = por %p165, %p166
      %p168 = scmp.ne.s32.totalorder %s159, %s160
      %p169 = scmp.eq.s32.totalorder %s23, 0
      %p170 = por %p168, %p169
      %p171 = scmp.ne.s32.totalorder %s159, %s160
      %p172 = scmp.eq.s32.totalorder %s24, 1
      %p173 = por %p171, %p172
      %p175 = scmp.ne.s32.totalorder %s160, %s174
      %p176 = scmp.eq.s32.totalorder %s24, 0
      %p177 = por %p175, %p176
      %s179 = sadd.s32 %s178, 1
      %p182 = scmp.eq.s32.totalorder %s18, 1
      %p183 = scmp.ne.s32.totalorder %s178, %s180
      %p184 = scmp.eq.s32.totalorder %s18, 0
      %p185 = por %p183, %p184
      %p186 = scmp.ne.s32.totalorder %s178, %s180
      %p187 = scmp.eq.s32.totalorder %s23, 1
      %p188 = por %p186, %p187
      %p189 = scmp.ne.s32.totalorder %s180, %s181
      %p190 = scmp.eq.s32.totalorder %s23, 0
      %p191 = por %p189, %p190
      %p192 = scmp.ne.s32.totalorder %s180, %s181
      %p193 = scmp.eq.s32.totalorder %s24, 1
      %p194 = por %p192, %p193
      %p196 = scmp.ne.s32.totalorder %s181, %s195
      %p197 = scmp.eq.s32.totalorder %s24, 0
      %p198 = por %p196, %p197
      %s200 = sadd.s32 %s199, 1
      %p203 = scmp.eq.s32.totalorder %s18, 1
      %p204 = scmp.ne.s32.totalorder %s199, %s201
      %p205 = scmp.eq.s32.totalorder %s18, 0
      %p206 = por %p204, %p205
      %p207 = scmp.ne.s32.totalorder %s199, %s201
      %p208 = scmp.eq.s32.totalorder %s23, 1
      %p209 = por %p207, %p208
      %p210 = scmp.ne.s32.totalorder %s201, %s202
      %p211 = scmp.eq.s32.totalorder %s23, 0
      %p212 = por %p210, %p211
      %p213 = scmp.ne.s32.totalorder %s201, %s202
      %p214 = scmp.eq.s32.totalorder %s24, 1
      %p215 = por %p213, %p214
      %p217 = scmp.ne.s32.totalorder %s202, %s216
      %p218 = scmp.eq.s32.totalorder %s24, 0
      %p219 = por %p217, %p218
      %s220 = ssub.s32 %s18, %s25
      %p221 = scmp.eq.s32.totalorder %s220, 0
      %s223 = sadd.s32 %s222, 1
      %s224 = scalar_select %p221, %s222, %s223
      %p227 = pneg %p221
      %p228 = scmp.eq.s32.totalorder %s18, 1
      %p229 = por %p227, %p228
      %p230 = scmp.ne.s32.totalorder %s222, %s225
      %p231 = scmp.eq.s32.totalorder %s18, 0
      %p232 = por %p230, %p231
      %p233 = scmp.ne.s32.totalorder %s222, %s225
      %p234 = scmp.eq.s32.totalorder %s23, 1
      %p235 = por %p233, %p234
      %p236 = scmp.ne.s32.totalorder %s225, %s226
      %p237 = scmp.eq.s32.totalorder %s23, 0
      %p238 = por %p236, %p237
      %p239 = scmp.ne.s32.totalorder %s225, %s226
      %p240 = scmp.eq.s32.totalorder %s24, 1
      %p241 = por %p239, %p240
      %p243 = scmp.ne.s32.totalorder %s226, %s242
      %p244 = scmp.eq.s32.totalorder %s24, 0
      %p245 = por %p243, %p244
      %p246 = scmp.le.s32.totalorder 1, %s18
      %p247 = scmp.lt.s32.totalorder %s18, 3
      %p248 = pnand %p246, %p247
      %p249 = pneg %p248
      // Predicated region
      $region9: #{_lambda_.1} parent=5 // pred_check
        _
      $region10: #{_lambda_.1} parent=5 // pred_check_branch
        %251 = sbr.rel (%p248) target = $region12
      $region11: #{_lambda_.1} parent=5 // pred_region
        %s252 = ssub.s32 %s18, 1
        // Predicated region
        $region13: #{_lambda_.1} parent=11 // pred_check
          %p253 = pneg %p65
        $region14: #{_lambda_.1} parent=11 // pred_check_branch
          %255 = sbr.rel (%p253) target = $region16
        $region15: #{_lambda_.1} parent=11 // pred_region
          _
        $region16: #{_lambda_.1} parent=11 // pred_fallthru
          _
        // Predicated region
        $region17: #{_lambda_.1} parent=11 // pred_check
          %p256 = pneg %p86
        $region18: #{_lambda_.1} parent=11 // pred_check_branch
          %258 = sbr.rel (%p256) target = $region20
        $region19: #{_lambda_.1} parent=11 // pred_region
          _
        $region20: #{_lambda_.1} parent=11 // pred_fallthru
          _
        // Predicated region
        $region21: #{_lambda_.1} parent=11 // pred_check
          %p259 = pneg %p107
        $region22: #{_lambda_.1} parent=11 // pred_check_branch
          %261 = sbr.rel (%p259) target = $region24
        $region23: #{_lambda_.1} parent=11 // pred_region
          _
        $region24: #{_lambda_.1} parent=11 // pred_fallthru
          _
        // Predicated region
        $region25: #{_lambda_.1} parent=11 // pred_check
          %p262 = pneg %p128
        $region26: #{_lambda_.1} parent=11 // pred_check_branch
          %264 = sbr.rel (%p262) target = $region28
        $region27: #{_lambda_.1} parent=11 // pred_region
          _
        $region28: #{_lambda_.1} parent=11 // pred_fallthru
          _
        // Predicated region
        $region29: #{_lambda_.1} parent=11 // pred_check
          %p265 = pneg %p149
        $region30: #{_lambda_.1} parent=11 // pred_check_branch
          %267 = sbr.rel (%p265) target = $region32
        $region31: #{_lambda_.1} parent=11 // pred_region
          _
        $region32: #{_lambda_.1} parent=11 // pred_fallthru
          _
        // Predicated region
        $region33: #{_lambda_.1} parent=11 // pred_check
          %p268 = pneg %p170
        $region34: #{_lambda_.1} parent=11 // pred_check_branch
          %270 = sbr.rel (%p268) target = $region36
        $region35: #{_lambda_.1} parent=11 // pred_region
          _
        $region36: #{_lambda_.1} parent=11 // pred_fallthru
          _
        // Predicated region
        $region37: #{_lambda_.1} parent=11 // pred_check
          %p271 = pneg %p191
        $region38: #{_lambda_.1} parent=11 // pred_check_branch
          %273 = sbr.rel (%p271) target = $region40
        $region39: #{_lambda_.1} parent=11 // pred_region
          _
        $region40: #{_lambda_.1} parent=11 // pred_fallthru
          _
        // Predicated region
        $region41: #{_lambda_.1} parent=11 // pred_check
          %p274 = pneg %p212
        $region42: #{_lambda_.1} parent=11 // pred_check_branch
          %276 = sbr.rel (%p274) target = $region44
        $region43: #{_lambda_.1} parent=11 // pred_region
          _
        $region44: #{_lambda_.1} parent=11 // pred_fallthru
          _
      $region12: #{_lambda_.1} parent=5 // pred_fallthru
        _
      %p277 = scmp.lt.s32.totalorder %s18, 2
      // Predicated region
      $region45: #{_lambda_.1} parent=5 // pred_check
        %p278 = pneg %p277
      $region46: #{_lambda_.1} parent=5 // pred_check_branch
        %280 = sbr.rel (%p278) target = $region48
      $region47: #{_lambda_.1} parent=5 // pred_region
        // Predicated region
        $region49: #{_lambda_.1} parent=47 // pred_check
          %p281 = pneg %p38
        $region50: #{_lambda_.1} parent=47 // pred_check_branch
          %283 = sbr.rel (%p281) target = $region52
        $region51: #{_lambda_.1} parent=47 // pred_region
          %p284 = scmp.lt.s32.totalorder %s18, 1
          %s285 = scalar_select %p284, %s18, 1
          %s286 = smul.addr %s285, 32
          %s287 = smul.addr %s286, 8
          %s288 = scalar_lea.vmem %s0, %s287
        $region52: #{_lambda_.1} parent=47 // pred_fallthru
          _
      $region48: #{_lambda_.1} parent=5 // pred_fallthru
        _
      %p289 = scmp.le.s32.totalorder 1, %s18
      %p290 = scmp.lt.s32.totalorder %s18, 3
      %p291 = pnand %p289, %p290
      %p292 = pneg %p291
      // Predicated region
      $region53: #{_lambda_.1} parent=5 // pred_check
        _
      $region54: #{_lambda_.1} parent=5 // pred_check_branch
        %294 = sbr.rel (%p291) target = $region56
      $region55: #{_lambda_.1} parent=5 // pred_region
        %s295 = ssub.s32 %s18, 1
        %p296 = scmp.lt.s32.totalorder %s23, 1
        %s297 = scalar_select %p296, %s23, 1
        %s298 = smul.addr %s297, 32
        %s299 = smul.addr %s298, 8
        %s300 = scalar_lea.vmem %s0, %s299
        %p301 = pneg %p44
        %p302 = pneg %p41
        %p303 = pneg %p65
        %p304 = pneg %p62
        %p305 = pneg %p86
        %p306 = pneg %p83
        %p307 = pneg %p107
        %p308 = pneg %p104
        %p309 = pneg %p128
        %p310 = pneg %p125
        %p311 = pneg %p149
        %p312 = pneg %p146
        %p313 = pneg %p170
        %p314 = pneg %p167
        %p315 = pneg %p191
        %p316 = pneg %p188
        %p317 = pneg %p212
        %p318 = pneg %p209
        %p319 = pneg %p238
        %p320 = pneg %p235
        %s321 = sand.u32 %s225, 1
        %s322 = scalar_lea.sflag [#allocation4], %s321
        %s323 = sand.u32 %s225, 1
        %s324 = smul.addr %s323, 256
        %s325 = scalar_lea.vmem [#allocation3], %s324
        %p326 = scmp.lt.s32.totalorder %s23, 1
        %s327 = scalar_select %p326, %s23, 1
        %s328 = smul.addr %s327, 32
        %s329 = smul.addr %s328, 8
        %s330 = scalar_lea.vmem %s0, %s329
        %v331 = vld [vmem:[%s330] sm:$0xff]
        %v332 = vld [vmem:[%s330 + $0x8] sm:$0xff]
        %v333 = vld [vmem:[%s330 + $0x10] sm:$0xff]
        %v334 = vld [vmem:[%s330 + $0x18] sm:$0xff]
        %v335 = vld [vmem:[%s330 + $0x20] sm:$0xff]
        %v336 = vld [vmem:[%s330 + $0x28] sm:$0xff]
        %v337 = vld [vmem:[%s330 + $0x30] sm:$0xff]
        %v338 = vld [vmem:[%s330 + $0x38] sm:$0xff]
        %v339 = vld [vmem:[%s330 + $0x40] sm:$0xff]
        %v340 = vld [vmem:[%s330 + $0x48] sm:$0xff]
        %v341 = vld [vmem:[%s330 + $0x50] sm:$0xff]
        %v342 = vld [vmem:[%s330 + $0x58] sm:$0xff]
        %v343 = vld [vmem:[%s330 + $0x60] sm:$0xff]
        %v344 = vld [vmem:[%s330 + $0x68] sm:$0xff]
        %v345 = vld [vmem:[%s330 + $0x70] sm:$0xff]
        %v346 = vld [vmem:[%s330 + $0x78] sm:$0xff]
        %v347 = vld [vmem:[%s330 + $0x80] sm:$0xff]
        %v348 = vld [vmem:[%s330 + $0x88] sm:$0xff]
        %v349 = vld [vmem:[%s330 + $0x90] sm:$0xff]
        %v350 = vld [vmem:[%s330 + $0x98] sm:$0xff]
        %v351 = vld [vmem:[%s330 + $0xa0] sm:$0xff]
        %v352 = vld [vmem:[%s330 + $0xa8] sm:$0xff]
        %v353 = vld [vmem:[%s330 + $0xb0] sm:$0xff]
        %v354 = vld [vmem:[%s330 + $0xb8] sm:$0xff]
        %v355 = vld [vmem:[%s330 + $0xc0] sm:$0xff]
        %v356 = vld [vmem:[%s330 + $0xc8] sm:$0xff]
        %v357 = vld [vmem:[%s330 + $0xd0] sm:$0xff]
        %v358 = vld [vmem:[%s330 + $0xd8] sm:$0xff]
        %v359 = vld [vmem:[%s330 + $0xe0] sm:$0xff]
        %v360 = vld [vmem:[%s330 + $0xe8] sm:$0xff]
        %v361 = vld [vmem:[%s330 + $0xf0] sm:$0xff]
        %v362 = vld [vmem:[%s330 + $0xf8] sm:$0xff]
        %v363 = vld [vmem:[%s1] sm:$0xf]
        %v364 = vld [vmem:[%s2] sm:$0x1]
        %v366 = vlaneseq
        %v367 = vshrl.u32 %v366, 7
        %v368 = vsub.s32 0, %v367
        %v369 = vrot.slane %v364, %v368
        %vm371 = vcmask 31744
        %v373 = vsel %vm371, %v331, 0
        %v376 = vsel %vm371, %v332, 0
        %v379 = vsel %vm371, %v333, 0
        %v382 = vsel %vm371, %v334, 0
        %v385 = vsel %vm371, %v335, 0
        %v388 = vsel %vm371, %v336, 0
        %v391 = vsel %vm371, %v337, 0
        %v394 = vsel %vm371, %v338, 0
        %v397 = vsel %vm371, %v339, 0
        %v400 = vsel %vm371, %v340, 0
        %v403 = vsel %vm371, %v341, 0
        %v406 = vsel %vm371, %v342, 0
        %v409 = vsel %vm371, %v343, 0
        %v412 = vsel %vm371, %v344, 0
        %v415 = vsel %vm371, %v345, 0
        %v418 = vsel %vm371, %v346, 0
        %v421 = vsel %vm371, %v347, 0
        %v424 = vsel %vm371, %v348, 0
        %v427 = vsel %vm371, %v349, 0
        %v430 = vsel %vm371, %v350, 0
        %v433 = vsel %vm371, %v351, 0
        %v436 = vsel %vm371, %v352, 0
        %v439 = vsel %vm371, %v353, 0
        %v442 = vsel %vm371, %v354, 0
        %v445 = vsel %vm371, %v355, 0
        %v448 = vsel %vm371, %v356, 0
        %v451 = vsel %vm371, %v357, 0
        %v454 = vsel %vm371, %v358, 0
        %v457 = vsel %vm371, %v359, 0
        %v460 = vsel %vm371, %v360, 0
        %v463 = vsel %vm371, %v361, 0
        %v466 = vsel %vm371, %v362, 0
        %vm468 = vcmask 1043456
        %v470 = vsel %vm468, %v363, 0
        %472 = vmatprep.subr.mxu0 0.0
        %473 = vmatpush1.msra.mxu0 %v470
        %474 = vmatprep.subr.mxu0 0.0
        %475 = vmatpush1.msra.mxu0 0.0
        %476 = vmatprep.subr.mxu0 0.0
        %477 = vmatpush1.msra.mxu0 0.0
        %478 = vmatprep.subr.mxu0 0.0
        %479 = vmatpush1.msra.mxu0 0.0
        %480 = vmatprep.subr.mxu0 0.0
        %481 = vmatpush1.msra.mxu0 0.0
        %482 = vmatprep.subr.mxu0 0.0
        %483 = vmatpush1.msra.mxu0 0.0
        %484 = vmatprep.subr.mxu0 0.0
        %485 = vmatpush1.msra.mxu0 0.0
        %486 = vmatprep.subr.mxu0 0.0
        %487 = vmatpush1.msra.mxu0 0.0
        %488 = vmatprep.subr.mxu0 0.0
        %489 = vmatpush1.msra.mxu0 0.0
        %490 = vmatprep.subr.mxu0 0.0
        %491 = vmatpush1.msra.mxu0 0.0
        %492 = vmatprep.subr.mxu0 0.0
        %493 = vmatpush1.msra.mxu0 0.0
        %494 = vmatprep.subr.mxu0 0.0
        %495 = vmatpush1.msra.mxu0 0.0
        %496 = vmatprep.subr.mxu0 0.0
        %497 = vmatpush1.msra.mxu0 0.0
        %498 = vmatprep.subr.mxu0 0.0
        %499 = vmatpush1.msra.mxu0 0.0
        %500 = vmatprep.subr.mxu0 0.0
        %501 = vmatpush1.msra.mxu0 0.0
        %502 = vmatprep.subr.mxu0 0.0
        %503 = vmatpush1.msra.mxu0 0.0
        %504 = vmatprep.subr.mxu0 0.0
        %505 = vmatpush1.msra.mxu0 0.0
        %506 = vmatprep.subr.mxu0 0.0
        %507 = vmatpush1.msra.mxu0 0.0
        %508 = vmatprep.subr.mxu0 0.0
        %509 = vmatpush1.msra.mxu0 0.0
        %510 = vmatprep.subr.mxu0 0.0
        %511 = vmatpush1.msra.mxu0 0.0
        %512 = vmatprep.subr.mxu0 0.0
        %513 = vmatpush1.msra.mxu0 0.0
        %514 = vmatprep.subr.mxu0 0.0
        %515 = vmatpush1.msra.mxu0 0.0
        %516 = vmatprep.subr.mxu0 0.0
        %517 = vmatpush1.msra.mxu0 0.0
        %518 = vmatprep.subr.mxu0 0.0
        %519 = vmatpush1.msra.mxu0 0.0
        %520 = vmatprep.subr.mxu0 0.0
        %521 = vmatpush1.msra.mxu0 0.0
        %522 = vmatprep.subr.mxu0 0.0
        %523 = vmatpush1.msra.mxu0 0.0
        %524 = vmatprep.subr.mxu0 0.0
        %525 = vmatpush1.msra.mxu0 0.0
        %526 = vmatprep.subr.mxu0 0.0
        %527 = vmatpush1.msra.mxu0 0.0
        %528 = vmatprep.subr.mxu0 0.0
        %529 = vmatpush1.msra.mxu0 0.0
        %530 = vmatprep.subr.mxu0 0.0
        %531 = vmatpush1.msra.mxu0 0.0
        %532 = vmatprep.subr.mxu0 0.0
        %533 = vmatpush1.msra.mxu0 0.0
        %534 = vmatprep.subr.mxu0 0.0
        %535 = vmatpush1.msra.mxu0 0.0
        %536 = vmatprep.mubr.f32.mxu0 0.0
        %537 = vmatmul.mubr.f32.gmra.mrb[0].mxu0 %v373
        %v538 = vpop.f32.mrb[0].mxu0
        %v539 = vadd.f32 %v369, %v538
        %v540 = vpop.f32.mrb[0].mxu0
        %541 = vmatprep.mubr.f32.mxu0 0.0
        %542 = vmatmul.mubr.f32.gmra.mrb[0].mxu0 %v376
        %v543 = vpop.f32.mrb[0].mxu0
        %v544 = vadd.f32 %v369, %v543
        %v545 = vpop.f32.mrb[0].mxu0
        %546 = vmatprep.mubr.f32.mxu0 0.0
        %547 = vmatmul.mubr.f32.gmra.mrb[0].mxu0 %v379
        %v548 = vpop.f32.mrb[0].mxu0
        %v549 = vadd.f32 %v369, %v548
        %v550 = vpop.f32.mrb[0].mxu0
        %551 = vmatprep.mubr.f32.mxu0 0.0
        %552 = vmatmul.mubr.f32.gmra.mrb[0].mxu0 %v382
        %v553 = vpop.f32.mrb[0].mxu0
        %v554 = vadd.f32 %v369, %v553
        %v555 = vpop.f32.mrb[0].mxu0
        %556 = vmatprep.mubr.f32.mxu0 0.0
        %557 = vmatmul.mubr.f32.gmra.mrb[0].mxu0 %v385
        %v558 = vpop.f32.mrb[0].mxu0
        %v559 = vadd.f32 %v369, %v558
        %v560 = vpop.f32.mrb[0].mxu0
        %561 = vmatprep.mubr.f32.mxu0 0.0
        %562 = vmatmul.mubr.f32.gmra.mrb[0].mxu0 %v388
        %v563 = vpop.f32.mrb[0].mxu0
        %v564 = vadd.f32 %v369, %v563
        %v565 = vpop.f32.mrb[0].mxu0
        %566 = vmatprep.mubr.f32.mxu0 0.0
        %567 = vmatmul.mubr.f32.gmra.mrb[0].mxu0 %v391
        %v568 = vpop.f32.mrb[0].mxu0
        %v569 = vadd.f32 %v369, %v568
        %v570 = vpop.f32.mrb[0].mxu0
        %571 = vmatprep.mubr.f32.mxu0 0.0
        %572 = vmatmul.mubr.f32.gmra.mrb[0].mxu0 %v394
        %v573 = vpop.f32.mrb[0].mxu0
        %v574 = vadd.f32 %v369, %v573
        %v575 = vpop.f32.mrb[0].mxu0
        %576 = vmatprep.mubr.f32.mxu0 0.0
        %577 = vmatmul.mubr.f32.gmra.mrb[0].mxu0 %v397
        %v578 = vpop.f32.mrb[0].mxu0
        %v579 = vadd.f32 %v369, %v578
        %v580 = vpop.f32.mrb[0].mxu0
        %581 = vmatprep.mubr.f32.mxu0 0.0
        %582 = vmatmul.mubr.f32.gmra.mrb[0].mxu0 %v400
        %v583 = vpop.f32.mrb[0].mxu0
        %v584 = vadd.f32 %v369, %v583
        %v585 = vpop.f32.mrb[0].mxu0
        %586 = vmatprep.mubr.f32.mxu0 0.0
        %587 = vmatmul.mubr.f32.gmra.mrb[0].mxu0 %v403
        %v588 = vpop.f32.mrb[0].mxu0
        %v589 = vadd.f32 %v369, %v588
        %v590 = vpop.f32.mrb[0].mxu0
        %591 = vmatprep.mubr.f32.mxu0 0.0
        %592 = vmatmul.mubr.f32.gmra.mrb[0].mxu0 %v406
        %v593 = vpop.f32.mrb[0].mxu0
        %v594 = vadd.f32 %v369, %v593
        %v595 = vpop.f32.mrb[0].mxu0
        %596 = vmatprep.mubr.f32.mxu0 0.0
        %597 = vmatmul.mubr.f32.gmra.mrb[0].mxu0 %v409
        %v598 = vpop.f32.mrb[0].mxu0
        %v599 = vadd.f32 %v369, %v598
        %v600 = vpop.f32.mrb[0].mxu0
        %601 = vmatprep.mubr.f32.mxu0 0.0
        %602 = vmatmul.mubr.f32.gmra.mrb[0].mxu0 %v412
        %v603 = vpop.f32.mrb[0].mxu0
        %v604 = vadd.f32 %v369, %v603
        %v605 = vpop.f32.mrb[0].mxu0
        %606 = vmatprep.mubr.f32.mxu0 0.0
        %607 = vmatmul.mubr.f32.gmra.mrb[0].mxu0 %v415
        %v608 = vpop.f32.mrb[0].mxu0
        %v609 = vadd.f32 %v369, %v608
        %v610 = vpop.f32.mrb[0].mxu0
        %611 = vmatprep.mubr.f32.mxu0 0.0
        %612 = vmatmul.mubr.f32.gmra.mrb[0].mxu0 %v418
        %v613 = vpop.f32.mrb[0].mxu0
        %v614 = vadd.f32 %v369, %v613
        %v615 = vpop.f32.mrb[0].mxu0
        %616 = vmatprep.mubr.f32.mxu0 0.0
        %617 = vmatmul.mubr.f32.gmra.mrb[0].mxu0 %v421
        %v618 = vpop.f32.mrb[0].mxu0
        %v619 = vadd.f32 %v369, %v618
        %v620 = vpop.f32.mrb[0].mxu0
        %621 = vmatprep.mubr.f32.mxu0 0.0
        %622 = vmatmul.mubr.f32.gmra.mrb[0].mxu0 %v424
        %v623 = vpop.f32.mrb[0].mxu0
        %v624 = vadd.f32 %v369, %v623
        %v625 = vpop.f32.mrb[0].mxu0
        %626 = vmatprep.mubr.f32.mxu0 0.0
        %627 = vmatmul.mubr.f32.gmra.mrb[0].mxu0 %v427
        %v628 = vpop.f32.mrb[0].mxu0
        %v629 = vadd.f32 %v369, %v628
        %v630 = vpop.f32.mrb[0].mxu0
        %631 = vmatprep.mubr.f32.mxu0 0.0
        %632 = vmatmul.mubr.f32.gmra.mrb[0].mxu0 %v430
        %v633 = vpop.f32.mrb[0].mxu0
        %v634 = vadd.f32 %v369, %v633
        %v635 = vpop.f32.mrb[0].mxu0
        %636 = vmatprep.mubr.f32.mxu0 0.0
        %637 = vmatmul.mubr.f32.gmra.mrb[0].mxu0 %v433
        %v638 = vpop.f32.mrb[0].mxu0
        %v639 = vadd.f32 %v369, %v638
        %v640 = vpop.f32.mrb[0].mxu0
        %641 = vmatprep.mubr.f32.mxu0 0.0
        %642 = vmatmul.mubr.f32.gmra.mrb[0].mxu0 %v436
        %v643 = vpop.f32.mrb[0].mxu0
        %v644 = vadd.f32 %v369, %v643
        %v645 = vpop.f32.mrb[0].mxu0
        %646 = vmatprep.mubr.f32.mxu0 0.0
        %647 = vmatmul.mubr.f32.gmra.mrb[0].mxu0 %v439
        %v648 = vpop.f32.mrb[0].mxu0
        %v649 = vadd.f32 %v369, %v648
        %v650 = vpop.f32.mrb[0].mxu0
        %651 = vmatprep.mubr.f32.mxu0 0.0
        %652 = vmatmul.mubr.f32.gmra.mrb[0].mxu0 %v442
        %v653 = vpop.f32.mrb[0].mxu0
        %v654 = vadd.f32 %v369, %v653
        %v655 = vpop.f32.mrb[0].mxu0
        %656 = vmatprep.mubr.f32.mxu0 0.0
        %657 = vmatmul.mubr.f32.gmra.mrb[0].mxu0 %v445
        %v658 = vpop.f32.mrb[0].mxu0
        %v659 = vadd.f32 %v369, %v658
        %v660 = vpop.f32.mrb[0].mxu0
        %661 = vmatprep.mubr.f32.mxu0 0.0
        %662 = vmatmul.mubr.f32.gmra.mrb[0].mxu0 %v448
        %v663 = vpop.f32.mrb[0].mxu0
        %v664 = vadd.f32 %v369, %v663
        %v665 = vpop.f32.mrb[0].mxu0
        %666 = vmatprep.mubr.f32.mxu0 0.0
        %667 = vmatmul.mubr.f32.gmra.mrb[0].mxu0 %v451
        %v668 = vpop.f32.mrb[0].mxu0
        %v669 = vadd.f32 %v369, %v668
        %v670 = vpop.f32.mrb[0].mxu0
        %671 = vmatprep.mubr.f32.mxu0 0.0
        %672 = vmatmul.mubr.f32.gmra.mrb[0].mxu0 %v454
        %v673 = vpop.f32.mrb[0].mxu0
        %v674 = vadd.f32 %v369, %v673
        %v675 = vpop.f32.mrb[0].mxu0
        %676 = vmatprep.mubr.f32.mxu0 0.0
        %677 = vmatmul.mubr.f32.gmra.mrb[0].mxu0 %v457
        %v678 = vpop.f32.mrb[0].mxu0
        %v679 = vadd.f32 %v369, %v678
        %v680 = vpop.f32.mrb[0].mxu0
        %681 = vmatprep.mubr.f32.mxu0 0.0
        %682 = vmatmul.mubr.f32.gmra.mrb[0].mxu0 %v460
        %v683 = vpop.f32.mrb[0].mxu0
        %v684 = vadd.f32 %v369, %v683
        %v685 = vpop.f32.mrb[0].mxu0
        %686 = vmatprep.mubr.f32.mxu0 0.0
        %687 = vmatmul.mubr.f32.gmra.mrb[0].mxu0 %v463
        %v688 = vpop.f32.mrb[0].mxu0
        %v689 = vadd.f32 %v369, %v688
        %v690 = vpop.f32.mrb[0].mxu0
        %691 = vmatprep.mubr.f32.mxu0 0.0
        %692 = vmatmul.mubr.f32.gmra.mrb[0].mxu0 %v466
        %v693 = vpop.f32.mrb[0].mxu0
        %v694 = vadd.f32 %v369, %v693
        %v695 = vpop.f32.mrb[0].mxu0
        %696 = vdwg.mxu0
        %v697 = vmax.f32 %v539, 0.0
        %v698 = vmax.f32 %v544, 0.0
        %v699 = vmax.f32 %v549, 0.0
        %v700 = vmax.f32 %v554, 0.0
        %v701 = vmax.f32 %v559, 0.0
        %v702 = vmax.f32 %v564, 0.0
        %v703 = vmax.f32 %v569, 0.0
        %v704 = vmax.f32 %v574, 0.0
        %v705 = vmax.f32 %v579, 0.0
        %v706 = vmax.f32 %v584, 0.0
        %v707 = vmax.f32 %v589, 0.0
        %v708 = vmax.f32 %v594, 0.0
        %v709 = vmax.f32 %v599, 0.0
        %v710 = vmax.f32 %v604, 0.0
        %v711 = vmax.f32 %v609, 0.0
        %v712 = vmax.f32 %v614, 0.0
        %v713 = vmax.f32 %v619, 0.0
        %v714 = vmax.f32 %v624, 0.0
        %v715 = vmax.f32 %v629, 0.0
        %v716 = vmax.f32 %v634, 0.0
        %v717 = vmax.f32 %v639, 0.0
        %v718 = vmax.f32 %v644, 0.0
        %v719 = vmax.f32 %v649, 0.0
        %v720 = vmax.f32 %v654, 0.0
        %v721 = vmax.f32 %v659, 0.0
        %v722 = vmax.f32 %v664, 0.0
        %v723 = vmax.f32 %v669, 0.0
        %v724 = vmax.f32 %v674, 0.0
        %v725 = vmax.f32 %v679, 0.0
        %v726 = vmax.f32 %v684, 0.0
        %v727 = vmax.f32 %v689, 0.0
        %v728 = vmax.f32 %v694, 0.0
        %vm729 = vcmask 64512
        %730 = vst.msk [vmem:[#allocation2] sm:$0xff] %vm729, 0.0
        %731 = vst.msk [vmem:[#allocation2 + $0x8] sm:$0xff] %vm729, 0.0
        %vm732 = vcmask 57344
        %733 = vst.msk [vmem:[#allocation2] sm:$0x1] %vm732, 0.0
        %734 = vst.msk [vmem:[#allocation2 + $0x10] sm:$0x1] %vm732, 0.0
        %735 = vst.msk [vmem:[#allocation2 + $0x20] sm:$0x1] %vm732, 0.0
        %736 = vst.msk [vmem:[#allocation2 + $0x30] sm:$0x1] %vm732, 0.0
        %737 = vst.msk [vmem:[#allocation2 + $0x40] sm:$0x1] %vm732, 0.0
        %738 = vst.msk [vmem:[#allocation2 + $0x50] sm:$0x1] %vm732, 0.0
        %739 = vst.msk [vmem:[#allocation2 + $0x60] sm:$0x1] %vm732, 0.0
        %740 = vst.msk [vmem:[#allocation2 + $0x70] sm:$0x1] %vm732, 0.0
        %741 = vst.msk [vmem:[#allocation2 + $0x80] sm:$0x1] %vm732, 0.0
        %742 = vst.msk [vmem:[#allocation2 + $0x90] sm:$0x1] %vm732, 0.0
        %743 = vst.msk [vmem:[#allocation2 + $0xa0] sm:$0x1] %vm732, 0.0
        %744 = vst.msk [vmem:[#allocation2 + $0xb0] sm:$0x1] %vm732, 0.0
        %745 = vst.msk [vmem:[#allocation2 + $0xc0] sm:$0x1] %vm732, 0.0
        %746 = vst.msk [vmem:[#allocation2 + $0xd0] sm:$0x1] %vm732, 0.0
        %747 = vst.msk [vmem:[#allocation2 + $0xe0] sm:$0x1] %vm732, 0.0
        %748 = vst.msk [vmem:[#allocation2 + $0xf0] sm:$0x1] %vm732, 0.0
        %vm749 = vcmask 130112
        %750 = vst.msk [vmem:[#allocation2] sm:$0xff] %vm749, 0.0
        %751 = vst.msk [vmem:[#allocation2 + $0x8] sm:$0xff] %vm749, 0.0
        %vm752 = vcmask 195712
        %753 = vst.msk [vmem:[#allocation2] sm:$0xff] %vm752, 0.0
        %754 = vst.msk [vmem:[#allocation2 + $0x8] sm:$0xff] %vm752, 0.0
        %vm755 = vcmask 188544
        %756 = vst.msk [vmem:[#allocation2 + $0xf] sm:$0x1] %vm755, 0.0
        %757 = vst.msk [vmem:[#allocation2 + $0x1f] sm:$0x1] %vm755, 0.0
        %758 = vst.msk [vmem:[#allocation2 + $0x2f] sm:$0x1] %vm755, 0.0
        %759 = vst.msk [vmem:[#allocation2 + $0x3f] sm:$0x1] %vm755, 0.0
        %760 = vst.msk [vmem:[#allocation2 + $0x4f] sm:$0x1] %vm755, 0.0
        %761 = vst.msk [vmem:[#allocation2 + $0x5f] sm:$0x1] %vm755, 0.0
        %762 = vst.msk [vmem:[#allocation2 + $0x6f] sm:$0x1] %vm755, 0.0
        %763 = vst.msk [vmem:[#allocation2 + $0x7f] sm:$0x1] %vm755, 0.0
        %764 = vst.msk [vmem:[#allocation2 + $0x8f] sm:$0x1] %vm755, 0.0
        %765 = vst.msk [vmem:[#allocation2 + $0x9f] sm:$0x1] %vm755, 0.0
        %766 = vst.msk [vmem:[#allocation2 + $0xaf] sm:$0x1] %vm755, 0.0
        %767 = vst.msk [vmem:[#allocation2 + $0xbf] sm:$0x1] %vm755, 0.0
        %768 = vst.msk [vmem:[#allocation2 + $0xcf] sm:$0x1] %vm755, 0.0
        %769 = vst.msk [vmem:[#allocation2 + $0xdf] sm:$0x1] %vm755, 0.0
        %770 = vst.msk [vmem:[#allocation2 + $0xef] sm:$0x1] %vm755, 0.0
        %771 = vst.msk [vmem:[#allocation2 + $0xff] sm:$0x1] %vm755, 0.0
        %vm772 = vcmask 254144
        %773 = vst.msk [vmem:[#allocation2] sm:$0x1] %vm772, 0.0
        %774 = vst.msk [vmem:[#allocation2 + $0x10] sm:$0x1] %vm772, 0.0
        %775 = vst.msk [vmem:[#allocation2 + $0x20] sm:$0x1] %vm772, 0.0
        %776 = vst.msk [vmem:[#allocation2 + $0x30] sm:$0x1] %vm772, 0.0
        %777 = vst.msk [vmem:[#allocation2 + $0x40] sm:$0x1] %vm772, 0.0
        %778 = vst.msk [vmem:[#allocation2 + $0x50] sm:$0x1] %vm772, 0.0
        %779 = vst.msk [vmem:[#allocation2 + $0x60] sm:$0x1] %vm772, 0.0
        %780 = vst.msk [vmem:[#allocation2 + $0x70] sm:$0x1] %vm772, 0.0
        %781 = vst.msk [vmem:[#allocation2 + $0x80] sm:$0x1] %vm772, 0.0
        %782 = vst.msk [vmem:[#allocation2 + $0x90] sm:$0x1] %vm772, 0.0
        %783 = vst.msk [vmem:[#allocation2 + $0xa0] sm:$0x1] %vm772, 0.0
        %784 = vst.msk [vmem:[#allocation2 + $0xb0] sm:$0x1] %vm772, 0.0
        %785 = vst.msk [vmem:[#allocation2 + $0xc0] sm:$0x1] %vm772, 0.0
        %786 = vst.msk [vmem:[#allocation2 + $0xd0] sm:$0x1] %vm772, 0.0
        %787 = vst.msk [vmem:[#allocation2 + $0xe0] sm:$0x1] %vm772, 0.0
        %788 = vst.msk [vmem:[#allocation2 + $0xf0] sm:$0x1] %vm772, 0.0
        %vm789 = vcmask 385344
        %790 = vst.msk [vmem:[#allocation2 + $0xf] sm:$0x1] %vm789, 0.0
        %791 = vst.msk [vmem:[#allocation2 + $0x1f] sm:$0x1] %vm789, 0.0
        %792 = vst.msk [vmem:[#allocation2 + $0x2f] sm:$0x1] %vm789, 0.0
        %793 = vst.msk [vmem:[#allocation2 + $0x3f] sm:$0x1] %vm789, 0.0
        %794 = vst.msk [vmem:[#allocation2 + $0x4f] sm:$0x1] %vm789, 0.0
        %795 = vst.msk [vmem:[#allocation2 + $0x5f] sm:$0x1] %vm789, 0.0
        %796 = vst.msk [vmem:[#allocation2 + $0x6f] sm:$0x1] %vm789, 0.0
        %797 = vst.msk [vmem:[#allocation2 + $0x7f] sm:$0x1] %vm789, 0.0
        %798 = vst.msk [vmem:[#allocation2 + $0x8f] sm:$0x1] %vm789, 0.0
        %799 = vst.msk [vmem:[#allocation2 + $0x9f] sm:$0x1] %vm789, 0.0
        %800 = vst.msk [vmem:[#allocation2 + $0xaf] sm:$0x1] %vm789, 0.0
        %801 = vst.msk [vmem:[#allocation2 + $0xbf] sm:$0x1] %vm789, 0.0
        %802 = vst.msk [vmem:[#allocation2 + $0xcf] sm:$0x1] %vm789, 0.0
        %803 = vst.msk [vmem:[#allocation2 + $0xdf] sm:$0x1] %vm789, 0.0
        %804 = vst.msk [vmem:[#allocation2 + $0xef] sm:$0x1] %vm789, 0.0
        %805 = vst.msk [vmem:[#allocation2 + $0xff] sm:$0x1] %vm789, 0.0
        %s806 = scalar_lea.vmem [#allocation2], 240
        %vm807 = vcmask 458112
        %808 = vst.msk [vmem:[%s806] sm:$0xff] %vm807, 0.0
        %809 = vst.msk [vmem:[%s806 + $0x8] sm:$0xff] %vm807, 0.0
        %vm810 = vcmask 450944
        %811 = vst.msk [vmem:[#allocation2] sm:$0x1] %vm810, 0.0
        %812 = vst.msk [vmem:[#allocation2 + $0x10] sm:$0x1] %vm810, 0.0
        %813 = vst.msk [vmem:[#allocation2 + $0x20] sm:$0x1] %vm810, 0.0
        %814 = vst.msk [vmem:[#allocation2 + $0x30] sm:$0x1] %vm810, 0.0
        %815 = vst.msk [vmem:[#allocation2 + $0x40] sm:$0x1] %vm810, 0.0
        %816 = vst.msk [vmem:[#allocation2 + $0x50] sm:$0x1] %vm810, 0.0
        %817 = vst.msk [vmem:[#allocation2 + $0x60] sm:$0x1] %vm810, 0.0
        %818 = vst.msk [vmem:[#allocation2 + $0x70] sm:$0x1] %vm810, 0.0
        %819 = vst.msk [vmem:[#allocation2 + $0x80] sm:$0x1] %vm810, 0.0
        %820 = vst.msk [vmem:[#allocation2 + $0x90] sm:$0x1] %vm810, 0.0
        %821 = vst.msk [vmem:[#allocation2 + $0xa0] sm:$0x1] %vm810, 0.0
        %822 = vst.msk [vmem:[#allocation2 + $0xb0] sm:$0x1] %vm810, 0.0
        %823 = vst.msk [vmem:[#allocation2 + $0xc0] sm:$0x1] %vm810, 0.0
        %824 = vst.msk [vmem:[#allocation2 + $0xd0] sm:$0x1] %vm810, 0.0
        %825 = vst.msk [vmem:[#allocation2 + $0xe0] sm:$0x1] %vm810, 0.0
        %826 = vst.msk [vmem:[#allocation2 + $0xf0] sm:$0x1] %vm810, 0.0
        %vm827 = vcmask 523712
        %828 = vst.msk [vmem:[%s806] sm:$0xff] %vm827, 0.0
        %829 = vst.msk [vmem:[%s806 + $0x8] sm:$0xff] %vm827, 0.0
        %vm830 = vcmask 589312
        %831 = vst.msk [vmem:[%s806] sm:$0xff] %vm830, 0.0
        %832 = vst.msk [vmem:[%s806 + $0x8] sm:$0xff] %vm830, 0.0
        %vm833 = vcmask 582144
        %834 = vst.msk [vmem:[#allocation2 + $0xf] sm:$0x1] %vm833, 0.0
        %835 = vst.msk [vmem:[#allocation2 + $0x1f] sm:$0x1] %vm833, 0.0
        %836 = vst.msk [vmem:[#allocation2 + $0x2f] sm:$0x1] %vm833, 0.0
        %837 = vst.msk [vmem:[#allocation2 + $0x3f] sm:$0x1] %vm833, 0.0
        %838 = vst.msk [vmem:[#allocation2 + $0x4f] sm:$0x1] %vm833, 0.0
        %839 = vst.msk [vmem:[#allocation2 + $0x5f] sm:$0x1] %vm833, 0.0
        %840 = vst.msk [vmem:[#allocation2 + $0x6f] sm:$0x1] %vm833, 0.0
        %841 = vst.msk [vmem:[#allocation2 + $0x7f] sm:$0x1] %vm833, 0.0
        %842 = vst.msk [vmem:[#allocation2 + $0x8f] sm:$0x1] %vm833, 0.0
        %843 = vst.msk [vmem:[#allocation2 + $0x9f] sm:$0x1] %vm833, 0.0
        %844 = vst.msk [vmem:[#allocation2 + $0xaf] sm:$0x1] %vm833, 0.0
        %845 = vst.msk [vmem:[#allocation2 + $0xbf] sm:$0x1] %vm833, 0.0
        %846 = vst.msk [vmem:[#allocation2 + $0xcf] sm:$0x1] %vm833, 0.0
        %847 = vst.msk [vmem:[#allocation2 + $0xdf] sm:$0x1] %vm833, 0.0
        %848 = vst.msk [vmem:[#allocation2 + $0xef] sm:$0x1] %vm833, 0.0
        %849 = vst.msk [vmem:[#allocation2 + $0xff] sm:$0x1] %vm833, 0.0
        %s850 = scalar_lea.vmem [#allocation2], 16
        %851 = vst.msk [vmem:[%s850 + $0x1] sm:$0xff] %vm729, %v697
        %vm852 = vcmask 63488
        %853 = vst.msk [vmem:[%s850 + $0x9] sm:$0x7f] %vm852, %v698
        %854 = vst.msk [vmem:[%s850 + $0x11] sm:$0xff] %vm729, %v699
        %855 = vst.msk [vmem:[%s850 + $0x19] sm:$0x7f] %vm852, %v700
        %856 = vst.msk [vmem:[%s850 + $0x21] sm:$0xff] %vm729, %v701
        %857 = vst.msk [vmem:[%s850 + $0x29] sm:$0x7f] %vm852, %v702
        %858 = vst.msk [vmem:[%s850 + $0x31] sm:$0xff] %vm729, %v703
        %859 = vst.msk [vmem:[%s850 + $0x39] sm:$0x7f] %vm852, %v704
        %860 = vst.msk [vmem:[%s850 + $0x41] sm:$0xff] %vm729, %v705
        %861 = vst.msk [vmem:[%s850 + $0x49] sm:$0x7f] %vm852, %v706
        %862 = vst.msk [vmem:[%s850 + $0x51] sm:$0xff] %vm729, %v707
        %863 = vst.msk [vmem:[%s850 + $0x59] sm:$0x7f] %vm852, %v708
        %864 = vst.msk [vmem:[%s850 + $0x61] sm:$0xff] %vm729, %v709
        %865 = vst.msk [vmem:[%s850 + $0x69] sm:$0x7f] %vm852, %v710
        %866 = vst.msk [vmem:[%s850 + $0x71] sm:$0xff] %vm729, %v711
        %867 = vst.msk [vmem:[%s850 + $0x79] sm:$0x7f] %vm852, %v712
        %868 = vst.msk [vmem:[%s850 + $0x81] sm:$0xff] %vm729, %v713
        %869 = vst.msk [vmem:[%s850 + $0x89] sm:$0x7f] %vm852, %v714
        %870 = vst.msk [vmem:[%s850 + $0x91] sm:$0xff] %vm729, %v715
        %871 = vst.msk [vmem:[%s850 + $0x99] sm:$0x7f] %vm852, %v716
        %872 = vst.msk [vmem:[%s850 + $0xa1] sm:$0xff] %vm729, %v717
        %873 = vst.msk [vmem:[%s850 + $0xa9] sm:$0x7f] %vm852, %v718
        %874 = vst.msk [vmem:[%s850 + $0xb1] sm:$0xff] %vm729, %v719
        %875 = vst.msk [vmem:[%s850 + $0xb9] sm:$0x7f] %vm852, %v720
        %876 = vst.msk [vmem:[%s850 + $0xc1] sm:$0xff] %vm729, %v721
        %877 = vst.msk [vmem:[%s850 + $0xc9] sm:$0x7f] %vm852, %v722
        %878 = vst.msk [vmem:[%s850 + $0xd1] sm:$0xff] %vm729, %v723
        %879 = vst.msk [vmem:[%s850 + $0xd9] sm:$0x7f] %vm852, %v724
        %880 = vst.msk [vmem:[%s850 + $0xe1] sm:$0xff] %vm729, %v725
        %881 = vst.msk [vmem:[%s850 + $0xe9] sm:$0x7f] %vm852, %v726
        %912 = vrot.lane.b32.xlu0 %v697, 8
        %v913 = vpop.permute.xlu0 %912
        %914 = vrot.lane.b32.xlu0 %v698, 8
        %v915 = vpop.permute.xlu0 %914
        %916 = vrot.lane.b32.xlu0 %v699, 8
        %v917 = vpop.permute.xlu0 %916
        %918 = vrot.lane.b32.xlu0 %v700, 8
        %v919 = vpop.permute.xlu0 %918
        %920 = vrot.lane.b32.xlu0 %v701, 8
        %v921 = vpop.permute.xlu0 %920
        %922 = vrot.lane.b32.xlu0 %v702, 8
        %v923 = vpop.permute.xlu0 %922
        %924 = vrot.lane.b32.xlu0 %v703, 8
        %v925 = vpop.permute.xlu0 %924
        %926 = vrot.lane.b32.xlu0 %v704, 8
        %v927 = vpop.permute.xlu0 %926
        %928 = vrot.lane.b32.xlu0 %v705, 8
        %v929 = vpop.permute.xlu0 %928
        %930 = vrot.lane.b32.xlu0 %v706, 8
        %v931 = vpop.permute.xlu0 %930
        %932 = vrot.lane.b32.xlu0 %v707, 8
        %v933 = vpop.permute.xlu0 %932
        %934 = vrot.lane.b32.xlu0 %v708, 8
        %v935 = vpop.permute.xlu0 %934
        %936 = vrot.lane.b32.xlu0 %v709, 8
        %v937 = vpop.permute.xlu0 %936
        %938 = vrot.lane.b32.xlu0 %v710, 8
        %v939 = vpop.permute.xlu0 %938
        %940 = vrot.lane.b32.xlu0 %v711, 8
        %v941 = vpop.permute.xlu0 %940
        %942 = vrot.lane.b32.xlu0 %v712, 8
        %v943 = vpop.permute.xlu0 %942
        %944 = vrot.lane.b32.xlu0 %v713, 8
        %v945 = vpop.permute.xlu0 %944
        %946 = vrot.lane.b32.xlu0 %v714, 8
        %v947 = vpop.permute.xlu0 %946
        %948 = vrot.lane.b32.xlu0 %v715, 8
        %v949 = vpop.permute.xlu0 %948
        %950 = vrot.lane.b32.xlu0 %v716, 8
        %v951 = vpop.permute.xlu0 %950
        %952 = vrot.lane.b32.xlu0 %v717, 8
        %v953 = vpop.permute.xlu0 %952
        %954 = vrot.lane.b32.xlu0 %v718, 8
        %v955 = vpop.permute.xlu0 %954
        %956 = vrot.lane.b32.xlu0 %v719, 8
        %v957 = vpop.permute.xlu0 %956
        %958 = vrot.lane.b32.xlu0 %v720, 8
        %v959 = vpop.permute.xlu0 %958
        %960 = vrot.lane.b32.xlu0 %v721, 8
        %v961 = vpop.permute.xlu0 %960
        %962 = vrot.lane.b32.xlu0 %v722, 8
        %v963 = vpop.permute.xlu0 %962
        %964 = vrot.lane.b32.xlu0 %v723, 8
        %v965 = vpop.permute.xlu0 %964
        %966 = vrot.lane.b32.xlu0 %v724, 8
        %v967 = vpop.permute.xlu0 %966
        %968 = vrot.lane.b32.xlu0 %v725, 8
        %v969 = vpop.permute.xlu0 %968
        %970 = vrot.lane.b32.xlu0 %v726, 8
        %v971 = vpop.permute.xlu0 %970
        %1002 = vst.msk [vmem:[%s850] sm:$0xff] %vm749, %v913
        %1003 = vst.msk [vmem:[%s850 + $0x8] sm:$0xff] %vm749, %v915
        %1004 = vst.msk [vmem:[%s850 + $0x10] sm:$0xff] %vm749, %v917
        %1005 = vst.msk [vmem:[%s850 + $0x18] sm:$0xff] %vm749, %v919
        %1006 = vst.msk [vmem:[%s850 + $0x20] sm:$0xff] %vm749, %v921
        %1007 = vst.msk [vmem:[%s850 + $0x28] sm:$0xff] %vm749, %v923
        %1008 = vst.msk [vmem:[%s850 + $0x30] sm:$0xff] %vm749, %v925
        %1009 = vst.msk [vmem:[%s850 + $0x38] sm:$0xff] %vm749, %v927
        %1010 = vst.msk [vmem:[%s850 + $0x40] sm:$0xff] %vm749, %v929
        %1011 = vst.msk [vmem:[%s850 + $0x48] sm:$0xff] %vm749, %v931
        %1012 = vst.msk [vmem:[%s850 + $0x50] sm:$0xff] %vm749, %v933
        %1013 = vst.msk [vmem:[%s850 + $0x58] sm:$0xff] %vm749, %v935
        %1014 = vst.msk [vmem:[%s850 + $0x60] sm:$0xff] %vm749, %v937
        %1015 = vst.msk [vmem:[%s850 + $0x68] sm:$0xff] %vm749, %v939
        %1016 = vst.msk [vmem:[%s850 + $0x70] sm:$0xff] %vm749, %v941
        %1017 = vst.msk [vmem:[%s850 + $0x78] sm:$0xff] %vm749, %v943
        %1018 = vst.msk [vmem:[%s850 + $0x80] sm:$0xff] %vm749, %v945
        %1019 = vst.msk [vmem:[%s850 + $0x88] sm:$0xff] %vm749, %v947
        %1020 = vst.msk [vmem:[%s850 + $0x90] sm:$0xff] %vm749, %v949
        %1021 = vst.msk [vmem:[%s850 + $0x98] sm:$0xff] %vm749, %v951
        %1022 = vst.msk [vmem:[%s850 + $0xa0] sm:$0xff] %vm749, %v953
        %1023 = vst.msk [vmem:[%s850 + $0xa8] sm:$0xff] %vm749, %v955
        %1024 = vst.msk [vmem:[%s850 + $0xb0] sm:$0xff] %vm749, %v957
        %1025 = vst.msk [vmem:[%s850 + $0xb8] sm:$0xff] %vm749, %v959
        %1026 = vst.msk [vmem:[%s850 + $0xc0] sm:$0xff] %vm749, %v961
        %1027 = vst.msk [vmem:[%s850 + $0xc8] sm:$0xff] %vm749, %v963
        %1028 = vst.msk [vmem:[%s850 + $0xd0] sm:$0xff] %vm749, %v965
        %1029 = vst.msk [vmem:[%s850 + $0xd8] sm:$0xff] %vm749, %v967
        %1030 = vst.msk [vmem:[%s850 + $0xe0] sm:$0xff] %vm749, %v969
        %1031 = vst.msk [vmem:[%s850 + $0xe8] sm:$0xff] %vm749, %v971
        %1032 = vrot.lane.b32.xlu0 %v697, 16
        %v1033 = vpop.permute.xlu0 %1032
        %1034 = vrot.lane.b32.xlu0 %v698, 16
        %v1035 = vpop.permute.xlu0 %1034
        %1036 = vrot.lane.b32.xlu0 %v699, 16
        %v1037 = vpop.permute.xlu0 %1036
        %1038 = vrot.lane.b32.xlu0 %v700, 16
        %v1039 = vpop.permute.xlu0 %1038
        %1040 = vrot.lane.b32.xlu0 %v701, 16
        %v1041 = vpop.permute.xlu0 %1040
        %1042 = vrot.lane.b32.xlu0 %v702, 16
        %v1043 = vpop.permute.xlu0 %1042
        %1044 = vrot.lane.b32.xlu0 %v703, 16
        %v1045 = vpop.permute.xlu0 %1044
        %1046 = vrot.lane.b32.xlu0 %v704, 16
        %v1047 = vpop.permute.xlu0 %1046
        %1048 = vrot.lane.b32.xlu0 %v705, 16
        %v1049 = vpop.permute.xlu0 %1048
        %1050 = vrot.lane.b32.xlu0 %v706, 16
        %v1051 = vpop.permute.xlu0 %1050
        %1052 = vrot.lane.b32.xlu0 %v707, 16
        %v1053 = vpop.permute.xlu0 %1052
        %1054 = vrot.lane.b32.xlu0 %v708, 16
        %v1055 = vpop.permute.xlu0 %1054
        %1056 = vrot.lane.b32.xlu0 %v709, 16
        %v1057 = vpop.permute.xlu0 %1056
        %1058 = vrot.lane.b32.xlu0 %v710, 16
        %v1059 = vpop.permute.xlu0 %1058
        %1060 = vrot.lane.b32.xlu0 %v711, 16
        %v1061 = vpop.permute.xlu0 %1060
        %1062 = vrot.lane.b32.xlu0 %v712, 16
        %v1063 = vpop.permute.xlu0 %1062
        %1064 = vrot.lane.b32.xlu0 %v713, 16
        %v1065 = vpop.permute.xlu0 %1064
        %1066 = vrot.lane.b32.xlu0 %v714, 16
        %v1067 = vpop.permute.xlu0 %1066
        %1068 = vrot.lane.b32.xlu0 %v715, 16
        %v1069 = vpop.permute.xlu0 %1068
        %1070 = vrot.lane.b32.xlu0 %v716, 16
        %v1071 = vpop.permute.xlu0 %1070
        %1072 = vrot.lane.b32.xlu0 %v717, 16
        %v1073 = vpop.permute.xlu0 %1072
        %1074 = vrot.lane.b32.xlu0 %v718, 16
        %v1075 = vpop.permute.xlu0 %1074
        %1076 = vrot.lane.b32.xlu0 %v719, 16
        %v1077 = vpop.permute.xlu0 %1076
        %1078 = vrot.lane.b32.xlu0 %v720, 16
        %v1079 = vpop.permute.xlu0 %1078
        %1080 = vrot.lane.b32.xlu0 %v721, 16
        %v1081 = vpop.permute.xlu0 %1080
        %1082 = vrot.lane.b32.xlu0 %v722, 16
        %v1083 = vpop.permute.xlu0 %1082
        %1084 = vrot.lane.b32.xlu0 %v723, 16
        %v1085 = vpop.permute.xlu0 %1084
        %1086 = vrot.lane.b32.xlu0 %v724, 16
        %v1087 = vpop.permute.xlu0 %1086
        %1088 = vrot.lane.b32.xlu0 %v725, 16
        %v1089 = vpop.permute.xlu0 %1088
        %1090 = vrot.lane.b32.xlu0 %v726, 16
        %v1091 = vpop.permute.xlu0 %1090
        %vm1122 = vcmask 195713
        %1123 = vst.msk [vmem:[%s850 - $0x1] sm:$0xfe] %vm1122, %v1033
        %1124 = vst.msk [vmem:[%s850 + $0x7] sm:$0xff] %vm752, %v1035
        %1125 = vst.msk [vmem:[%s850 + $0xf] sm:$0xfe] %vm1122, %v1037
        %1126 = vst.msk [vmem:[%s850 + $0x17] sm:$0xff] %vm752, %v1039
        %1127 = vst.msk [vmem:[%s850 + $0x1f] sm:$0xfe] %vm1122, %v1041
        %1128 = vst.msk [vmem:[%s850 + $0x27] sm:$0xff] %vm752, %v1043
        %1129 = vst.msk [vmem:[%s850 + $0x2f] sm:$0xfe] %vm1122, %v1045
        %1130 = vst.msk [vmem:[%s850 + $0x37] sm:$0xff] %vm752, %v1047
        %1131 = vst.msk [vmem:[%s850 + $0x3f] sm:$0xfe] %vm1122, %v1049
        %1132 = vst.msk [vmem:[%s850 + $0x47] sm:$0xff] %vm752, %v1051
        %1133 = vst.msk [vmem:[%s850 + $0x4f] sm:$0xfe] %vm1122, %v1053
        %1134 = vst.msk [vmem:[%s850 + $0x57] sm:$0xff] %vm752, %v1055
        %1135 = vst.msk [vmem:[%s850 + $0x5f] sm:$0xfe] %vm1122, %v1057
        %1136 = vst.msk [vmem:[%s850 + $0x67] sm:$0xff] %vm752, %v1059
        %1137 = vst.msk [vmem:[%s850 + $0x6f] sm:$0xfe] %vm1122, %v1061
        %1138 = vst.msk [vmem:[%s850 + $0x77] sm:$0xff] %vm752, %v1063
        %1139 = vst.msk [vmem:[%s850 + $0x7f] sm:$0xfe] %vm1122, %v1065
        %1140 = vst.msk [vmem:[%s850 + $0x87] sm:$0xff] %vm752, %v1067
        %1141 = vst.msk [vmem:[%s850 + $0x8f] sm:$0xfe] %vm1122, %v1069
        %1142 = vst.msk [vmem:[%s850 + $0x97] sm:$0xff] %vm752, %v1071
        %1143 = vst.msk [vmem:[%s850 + $0x9f] sm:$0xfe] %vm1122, %v1073
        %1144 = vst.msk [vmem:[%s850 + $0xa7] sm:$0xff] %vm752, %v1075
        %1145 = vst.msk [vmem:[%s850 + $0xaf] sm:$0xfe] %vm1122, %v1077
        %1146 = vst.msk [vmem:[%s850 + $0xb7] sm:$0xff] %vm752, %v1079
        %1147 = vst.msk [vmem:[%s850 + $0xbf] sm:$0xfe] %vm1122, %v1081
        %1148 = vst.msk [vmem:[%s850 + $0xc7] sm:$0xff] %vm752, %v1083
        %1149 = vst.msk [vmem:[%s850 + $0xcf] sm:$0xfe] %vm1122, %v1085
        %1150 = vst.msk [vmem:[%s850 + $0xd7] sm:$0xff] %vm752, %v1087
        %1151 = vst.msk [vmem:[%s850 + $0xdf] sm:$0xfe] %vm1122, %v1089
        %1152 = vst.msk [vmem:[%s850 + $0xe7] sm:$0xff] %vm752, %v1091
        %1155 = vrot.lane.b32.xlu0 %v697, 24
        %v1156 = vpop.permute.xlu0 %1155
        %1157 = vrot.lane.b32.xlu0 %v698, 24
        %v1158 = vpop.permute.xlu0 %1157
        %1159 = vrot.lane.b32.xlu0 %v699, 24
        %v1160 = vpop.permute.xlu0 %1159
        %1161 = vrot.lane.b32.xlu0 %v700, 24
        %v1162 = vpop.permute.xlu0 %1161
        %1163 = vrot.lane.b32.xlu0 %v701, 24
        %v1164 = vpop.permute.xlu0 %1163
        %1165 = vrot.lane.b32.xlu0 %v702, 24
        %v1166 = vpop.permute.xlu0 %1165
        %1167 = vrot.lane.b32.xlu0 %v703, 24
        %v1168 = vpop.permute.xlu0 %1167
        %1169 = vrot.lane.b32.xlu0 %v704, 24
        %v1170 = vpop.permute.xlu0 %1169
        %1171 = vrot.lane.b32.xlu0 %v705, 24
        %v1172 = vpop.permute.xlu0 %1171
        %1173 = vrot.lane.b32.xlu0 %v706, 24
        %v1174 = vpop.permute.xlu0 %1173
        %1175 = vrot.lane.b32.xlu0 %v707, 24
        %v1176 = vpop.permute.xlu0 %1175
        %1177 = vrot.lane.b32.xlu0 %v708, 24
        %v1178 = vpop.permute.xlu0 %1177
        %1179 = vrot.lane.b32.xlu0 %v709, 24
        %v1180 = vpop.permute.xlu0 %1179
        %1181 = vrot.lane.b32.xlu0 %v710, 24
        %v1182 = vpop.permute.xlu0 %1181
        %1183 = vrot.lane.b32.xlu0 %v711, 24
        %v1184 = vpop.permute.xlu0 %1183
        %1185 = vrot.lane.b32.xlu0 %v712, 24
        %v1186 = vpop.permute.xlu0 %1185
        %1187 = vrot.lane.b32.xlu0 %v713, 24
        %v1188 = vpop.permute.xlu0 %1187
        %1189 = vrot.lane.b32.xlu0 %v714, 24
        %v1190 = vpop.permute.xlu0 %1189
        %1191 = vrot.lane.b32.xlu0 %v715, 24
        %v1192 = vpop.permute.xlu0 %1191
        %1193 = vrot.lane.b32.xlu0 %v716, 24
        %v1194 = vpop.permute.xlu0 %1193
        %1195 = vrot.lane.b32.xlu0 %v717, 24
        %v1196 = vpop.permute.xlu0 %1195
        %1197 = vrot.lane.b32.xlu0 %v718, 24
        %v1198 = vpop.permute.xlu0 %1197
        %1199 = vrot.lane.b32.xlu0 %v719, 24
        %v1200 = vpop.permute.xlu0 %1199
        %1201 = vrot.lane.b32.xlu0 %v720, 24
        %v1202 = vpop.permute.xlu0 %1201
        %1203 = vrot.lane.b32.xlu0 %v721, 24
        %v1204 = vpop.permute.xlu0 %1203
        %1205 = vrot.lane.b32.xlu0 %v722, 24
        %v1206 = vpop.permute.xlu0 %1205
        %1207 = vrot.lane.b32.xlu0 %v723, 24
        %v1208 = vpop.permute.xlu0 %1207
        %1209 = vrot.lane.b32.xlu0 %v724, 24
        %v1210 = vpop.permute.xlu0 %1209
        %1211 = vrot.lane.b32.xlu0 %v725, 24
        %v1212 = vpop.permute.xlu0 %1211
        %1213 = vrot.lane.b32.xlu0 %v726, 24
        %v1214 = vpop.permute.xlu0 %1213
        %1215 = vrot.lane.b32.xlu0 %v727, 24
        %v1216 = vpop.permute.xlu0 %1215
        %1217 = vrot.lane.b32.xlu0 %v728, 24
        %v1218 = vpop.permute.xlu0 %1217
        %vm1251 = vcmask 261312
        %1252 = vst.msk [vmem:[#allocation2 + $0x1] sm:$0xff] %vm1251, %v1156
        %vm1253 = vcmask 260288
        %1254 = vst.msk [vmem:[#allocation2 + $0x9] sm:$0x7f] %vm1253, %v1158
        %1255 = vst.msk [vmem:[#allocation2 + $0x11] sm:$0xff] %vm1251, %v1160
        %1256 = vst.msk [vmem:[#allocation2 + $0x19] sm:$0x7f] %vm1253, %v1162
        %1257 = vst.msk [vmem:[#allocation2 + $0x21] sm:$0xff] %vm1251, %v1164
        %1258 = vst.msk [vmem:[#allocation2 + $0x29] sm:$0x7f] %vm1253, %v1166
        %1259 = vst.msk [vmem:[#allocation2 + $0x31] sm:$0xff] %vm1251, %v1168
        %1260 = vst.msk [vmem:[#allocation2 + $0x39] sm:$0x7f] %vm1253, %v1170
        %1261 = vst.msk [vmem:[#allocation2 + $0x41] sm:$0xff] %vm1251, %v1172
        %1262 = vst.msk [vmem:[#allocation2 + $0x49] sm:$0x7f] %vm1253, %v1174
        %1263 = vst.msk [vmem:[#allocation2 + $0x51] sm:$0xff] %vm1251, %v1176
        %1264 = vst.msk [vmem:[#allocation2 + $0x59] sm:$0x7f] %vm1253, %v1178
        %1265 = vst.msk [vmem:[#allocation2 + $0x61] sm:$0xff] %vm1251, %v1180
        %1266 = vst.msk [vmem:[#allocation2 + $0x69] sm:$0x7f] %vm1253, %v1182
        %1267 = vst.msk [vmem:[#allocation2 + $0x71] sm:$0xff] %vm1251, %v1184
        %1268 = vst.msk [vmem:[#allocation2 + $0x79] sm:$0x7f] %vm1253, %v1186
        %1269 = vst.msk [vmem:[#allocation2 + $0x81] sm:$0xff] %vm1251, %v1188
        %1270 = vst.msk [vmem:[#allocation2 + $0x89] sm:$0x7f] %vm1253, %v1190
        %1271 = vst.msk [vmem:[#allocation2 + $0x91] sm:$0xff] %vm1251, %v1192
        %1272 = vst.msk [vmem:[#allocation2 + $0x99] sm:$0x7f] %vm1253, %v1194
        %1273 = vst.msk [vmem:[#allocation2 + $0xa1] sm:$0xff] %vm1251, %v1196
        %1274 = vst.msk [vmem:[#allocation2 + $0xa9] sm:$0x7f] %vm1253, %v1198
        %1275 = vst.msk [vmem:[#allocation2 + $0xb1] sm:$0xff] %vm1251, %v1200
        %1276 = vst.msk [vmem:[#allocation2 + $0xb9] sm:$0x7f] %vm1253, %v1202
        %1277 = vst.msk [vmem:[#allocation2 + $0xc1] sm:$0xff] %vm1251, %v1204
        %1278 = vst.msk [vmem:[#allocation2 + $0xc9] sm:$0x7f] %vm1253, %v1206
        %1279 = vst.msk [vmem:[#allocation2 + $0xd1] sm:$0xff] %vm1251, %v1208
        %1280 = vst.msk [vmem:[#allocation2 + $0xd9] sm:$0x7f] %vm1253, %v1210
        %1281 = vst.msk [vmem:[#allocation2 + $0xe1] sm:$0xff] %vm1251, %v1212
        %1282 = vst.msk [vmem:[#allocation2 + $0xe9] sm:$0x7f] %vm1253, %v1214
        %1283 = vst.msk [vmem:[#allocation2 + $0xf1] sm:$0xff] %vm1251, %v1216
        %1284 = vst.msk [vmem:[#allocation2 + $0xf9] sm:$0x7f] %vm1253, %v1218
        %1285 = vrot.lane.b32.xlu0 %v697, 32
        %v1286 = vpop.permute.xlu0 %1285
        %1287 = vrot.lane.b32.xlu0 %v698, 32
        %v1288 = vpop.permute.xlu0 %1287
        %1289 = vrot.lane.b32.xlu0 %v699, 32
        %v1290 = vpop.permute.xlu0 %1289
        %1291 = vrot.lane.b32.xlu0 %v700, 32
        %v1292 = vpop.permute.xlu0 %1291
        %1293 = vrot.lane.b32.xlu0 %v701, 32
        %v1294 = vpop.permute.xlu0 %1293
        %1295 = vrot.lane.b32.xlu0 %v702, 32
        %v1296 = vpop.permute.xlu0 %1295
        %1297 = vrot.lane.b32.xlu0 %v703, 32
        %v1298 = vpop.permute.xlu0 %1297
        %1299 = vrot.lane.b32.xlu0 %v704, 32
        %v1300 = vpop.permute.xlu0 %1299
        %1301 = vrot.lane.b32.xlu0 %v705, 32
        %v1302 = vpop.permute.xlu0 %1301
        %1303 = vrot.lane.b32.xlu0 %v706, 32
        %v1304 = vpop.permute.xlu0 %1303
        %1305 = vrot.lane.b32.xlu0 %v707, 32
        %v1306 = vpop.permute.xlu0 %1305
        %1307 = vrot.lane.b32.xlu0 %v708, 32
        %v1308 = vpop.permute.xlu0 %1307
        %1309 = vrot.lane.b32.xlu0 %v709, 32
        %v1310 = vpop.permute.xlu0 %1309
        %1311 = vrot.lane.b32.xlu0 %v710, 32
        %v1312 = vpop.permute.xlu0 %1311
        %1313 = vrot.lane.b32.xlu0 %v711, 32
        %v1314 = vpop.permute.xlu0 %1313
        %1315 = vrot.lane.b32.xlu0 %v712, 32
        %v1316 = vpop.permute.xlu0 %1315
        %1317 = vrot.lane.b32.xlu0 %v713, 32
        %v1318 = vpop.permute.xlu0 %1317
        %1319 = vrot.lane.b32.xlu0 %v714, 32
        %v1320 = vpop.permute.xlu0 %1319
        %1321 = vrot.lane.b32.xlu0 %v715, 32
        %v1322 = vpop.permute.xlu0 %1321
        %1323 = vrot.lane.b32.xlu0 %v716, 32
        %v1324 = vpop.permute.xlu0 %1323
        %1325 = vrot.lane.b32.xlu0 %v717, 32
        %v1326 = vpop.permute.xlu0 %1325
        %1327 = vrot.lane.b32.xlu0 %v718, 32
        %v1328 = vpop.permute.xlu0 %1327
        %1329 = vrot.lane.b32.xlu0 %v719, 32
        %v1330 = vpop.permute.xlu0 %1329
        %1331 = vrot.lane.b32.xlu0 %v720, 32
        %v1332 = vpop.permute.xlu0 %1331
        %1333 = vrot.lane.b32.xlu0 %v721, 32
        %v1334 = vpop.permute.xlu0 %1333
        %1335 = vrot.lane.b32.xlu0 %v722, 32
        %v1336 = vpop.permute.xlu0 %1335
        %1337 = vrot.lane.b32.xlu0 %v723, 32
        %v1338 = vpop.permute.xlu0 %1337
        %1339 = vrot.lane.b32.xlu0 %v724, 32
        %v1340 = vpop.permute.xlu0 %1339
        %1341 = vrot.lane.b32.xlu0 %v725, 32
        %v1342 = vpop.permute.xlu0 %1341
        %1343 = vrot.lane.b32.xlu0 %v726, 32
        %v1344 = vpop.permute.xlu0 %1343
        %1345 = vrot.lane.b32.xlu0 %v727, 32
        %v1346 = vpop.permute.xlu0 %1345
        %1347 = vrot.lane.b32.xlu0 %v728, 32
        %v1348 = vpop.permute.xlu0 %1347
        %vm1381 = vcmask 326912
        %1382 = vst.msk [vmem:[#allocation2] sm:$0xff] %vm1381, %v1286
        %1383 = vst.msk [vmem:[#allocation2 + $0x8] sm:$0xff] %vm1381, %v1288
        %1384 = vst.msk [vmem:[#allocation2 + $0x10] sm:$0xff] %vm1381, %v1290
        %1385 = vst.msk [vmem:[#allocation2 + $0x18] sm:$0xff] %vm1381, %v1292
        %1386 = vst.msk [vmem:[#allocation2 + $0x20] sm:$0xff] %vm1381, %v1294
        %1387 = vst.msk [vmem:[#allocation2 + $0x28] sm:$0xff] %vm1381, %v1296
        %1388 = vst.msk [vmem:[#allocation2 + $0x30] sm:$0xff] %vm1381, %v1298
        %1389 = vst.msk [vmem:[#allocation2 + $0x38] sm:$0xff] %vm1381, %v1300
        %1390 = vst.msk [vmem:[#allocation2 + $0x40] sm:$0xff] %vm1381, %v1302
        %1391 = vst.msk [vmem:[#allocation2 + $0x48] sm:$0xff] %vm1381, %v1304
        %1392 = vst.msk [vmem:[#allocation2 + $0x50] sm:$0xff] %vm1381, %v1306
        %1393 = vst.msk [vmem:[#allocation2 + $0x58] sm:$0xff] %vm1381, %v1308
        %1394 = vst.msk [vmem:[#allocation2 + $0x60] sm:$0xff] %vm1381, %v1310
        %1395 = vst.msk [vmem:[#allocation2 + $0x68] sm:$0xff] %vm1381, %v1312
        %1396 = vst.msk [vmem:[#allocation2 + $0x70] sm:$0xff] %vm1381, %v1314
        %1397 = vst.msk [vmem:[#allocation2 + $0x78] sm:$0xff] %vm1381, %v1316
        %1398 = vst.msk [vmem:[#allocation2 + $0x80] sm:$0xff] %vm1381, %v1318
        %1399 = vst.msk [vmem:[#allocation2 + $0x88] sm:$0xff] %vm1381, %v1320
        %1400 = vst.msk [vmem:[#allocation2 + $0x90] sm:$0xff] %vm1381, %v1322
        %1401 = vst.msk [vmem:[#allocation2 + $0x98] sm:$0xff] %vm1381, %v1324
        %1402 = vst.msk [vmem:[#allocation2 + $0xa0] sm:$0xff] %vm1381, %v1326
        %1403 = vst.msk [vmem:[#allocation2 + $0xa8] sm:$0xff] %vm1381, %v1328
        %1404 = vst.msk [vmem:[#allocation2 + $0xb0] sm:$0xff] %vm1381, %v1330
        %1405 = vst.msk [vmem:[#allocation2 + $0xb8] sm:$0xff] %vm1381, %v1332
        %1406 = vst.msk [vmem:[#allocation2 + $0xc0] sm:$0xff] %vm1381, %v1334
        %1407 = vst.msk [vmem:[#allocation2 + $0xc8] sm:$0xff] %vm1381, %v1336
        %1408 = vst.msk [vmem:[#allocation2 + $0xd0] sm:$0xff] %vm1381, %v1338
        %1409 = vst.msk [vmem:[#allocation2 + $0xd8] sm:$0xff] %vm1381, %v1340
        %1410 = vst.msk [vmem:[#allocation2 + $0xe0] sm:$0xff] %vm1381, %v1342
        %1411 = vst.msk [vmem:[#allocation2 + $0xe8] sm:$0xff] %vm1381, %v1344
        %1412 = vst.msk [vmem:[#allocation2 + $0xf0] sm:$0xff] %vm1381, %v1346
        %1413 = vst.msk [vmem:[#allocation2 + $0xf8] sm:$0xff] %vm1381, %v1348
        %1414 = vrot.lane.b32.xlu0 %v697, 40
        %v1415 = vpop.permute.xlu0 %1414
        %1416 = vrot.lane.b32.xlu0 %v698, 40
        %v1417 = vpop.permute.xlu0 %1416
        %1418 = vrot.lane.b32.xlu0 %v699, 40
        %v1419 = vpop.permute.xlu0 %1418
        %1420 = vrot.lane.b32.xlu0 %v700, 40
        %v1421 = vpop.permute.xlu0 %1420
        %1422 = vrot.lane.b32.xlu0 %v701, 40
        %v1423 = vpop.permute.xlu0 %1422
        %1424 = vrot.lane.b32.xlu0 %v702, 40
        %v1425 = vpop.permute.xlu0 %1424
        %1426 = vrot.lane.b32.xlu0 %v703, 40
        %v1427 = vpop.permute.xlu0 %1426
        %1428 = vrot.lane.b32.xlu0 %v704, 40
        %v1429 = vpop.permute.xlu0 %1428
        %1430 = vrot.lane.b32.xlu0 %v705, 40
        %v1431 = vpop.permute.xlu0 %1430
        %1432 = vrot.lane.b32.xlu0 %v706, 40
        %v1433 = vpop.permute.xlu0 %1432
        %1434 = vrot.lane.b32.xlu0 %v707, 40
        %v1435 = vpop.permute.xlu0 %1434
        %1436 = vrot.lane.b32.xlu0 %v708, 40
        %v1437 = vpop.permute.xlu0 %1436
        %1438 = vrot.lane.b32.xlu0 %v709, 40
        %v1439 = vpop.permute.xlu0 %1438
        %1440 = vrot.lane.b32.xlu0 %v710, 40
        %v1441 = vpop.permute.xlu0 %1440
        %1442 = vrot.lane.b32.xlu0 %v711, 40
        %v1443 = vpop.permute.xlu0 %1442
        %1444 = vrot.lane.b32.xlu0 %v712, 40
        %v1445 = vpop.permute.xlu0 %1444
        %1446 = vrot.lane.b32.xlu0 %v713, 40
        %v1447 = vpop.permute.xlu0 %1446
        %1448 = vrot.lane.b32.xlu0 %v714, 40
        %v1449 = vpop.permute.xlu0 %1448
        %1450 = vrot.lane.b32.xlu0 %v715, 40
        %v1451 = vpop.permute.xlu0 %1450
        %1452 = vrot.lane.b32.xlu0 %v716, 40
        %v1453 = vpop.permute.xlu0 %1452
        %1454 = vrot.lane.b32.xlu0 %v717, 40
        %v1455 = vpop.permute.xlu0 %1454
        %1456 = vrot.lane.b32.xlu0 %v718, 40
        %v1457 = vpop.permute.xlu0 %1456
        %1458 = vrot.lane.b32.xlu0 %v719, 40
        %v1459 = vpop.permute.xlu0 %1458
        %1460 = vrot.lane.b32.xlu0 %v720, 40
        %v1461 = vpop.permute.xlu0 %1460
        %1462 = vrot.lane.b32.xlu0 %v721, 40
        %v1463 = vpop.permute.xlu0 %1462
        %1464 = vrot.lane.b32.xlu0 %v722, 40
        %v1465 = vpop.permute.xlu0 %1464
        %1466 = vrot.lane.b32.xlu0 %v723, 40
        %v1467 = vpop.permute.xlu0 %1466
        %1468 = vrot.lane.b32.xlu0 %v724, 40
        %v1469 = vpop.permute.xlu0 %1468
        %1470 = vrot.lane.b32.xlu0 %v725, 40
        %v1471 = vpop.permute.xlu0 %1470
        %1472 = vrot.lane.b32.xlu0 %v726, 40
        %v1473 = vpop.permute.xlu0 %1472
        %1474 = vrot.lane.b32.xlu0 %v727, 40
        %v1475 = vpop.permute.xlu0 %1474
        %1476 = vrot.lane.b32.xlu0 %v728, 40
        %v1477 = vpop.permute.xlu0 %1476
        %vm1510 = vcmask 392513
        %1511 = vst.msk [vmem:[#allocation2 - $0x1] sm:$0xfe] %vm1510, %v1415
        %vm1512 = vcmask 392512
        %1513 = vst.msk [vmem:[#allocation2 + $0x7] sm:$0xff] %vm1512, %v1417
        %1514 = vst.msk [vmem:[#allocation2 + $0xf] sm:$0xfe] %vm1510, %v1419
        %1515 = vst.msk [vmem:[#allocation2 + $0x17] sm:$0xff] %vm1512, %v1421
        %1516 = vst.msk [vmem:[#allocation2 + $0x1f] sm:$0xfe] %vm1510, %v1423
        %1517 = vst.msk [vmem:[#allocation2 + $0x27] sm:$0xff] %vm1512, %v1425
        %1518 = vst.msk [vmem:[#allocation2 + $0x2f] sm:$0xfe] %vm1510, %v1427
        %1519 = vst.msk [vmem:[#allocation2 + $0x37] sm:$0xff] %vm1512, %v1429
        %1520 = vst.msk [vmem:[#allocation2 + $0x3f] sm:$0xfe] %vm1510, %v1431
        %1521 = vst.msk [vmem:[#allocation2 + $0x47] sm:$0xff] %vm1512, %v1433
        %1522 = vst.msk [vmem:[#allocation2 + $0x4f] sm:$0xfe] %vm1510, %v1435
        %1523 = vst.msk [vmem:[#allocation2 + $0x57] sm:$0xff] %vm1512, %v1437
        %1524 = vst.msk [vmem:[#allocation2 + $0x5f] sm:$0xfe] %vm1510, %v1439
        %1525 = vst.msk [vmem:[#allocation2 + $0x67] sm:$0xff] %vm1512, %v1441
        %1526 = vst.msk [vmem:[#allocation2 + $0x6f] sm:$0xfe] %vm1510, %v1443
        %1527 = vst.msk [vmem:[#allocation2 + $0x77] sm:$0xff] %vm1512, %v1445
        %1528 = vst.msk [vmem:[#allocation2 + $0x7f] sm:$0xfe] %vm1510, %v1447
        %1529 = vst.msk [vmem:[#allocation2 + $0x87] sm:$0xff] %vm1512, %v1449
        %1530 = vst.msk [vmem:[#allocation2 + $0x8f] sm:$0xfe] %vm1510, %v1451
        %1531 = vst.msk [vmem:[#allocation2 + $0x97] sm:$0xff] %vm1512, %v1453
        %1532 = vst.msk [vmem:[#allocation2 + $0x9f] sm:$0xfe] %vm1510, %v1455
        %1533 = vst.msk [vmem:[#allocation2 + $0xa7] sm:$0xff] %vm1512, %v1457
        %1534 = vst.msk [vmem:[#allocation2 + $0xaf] sm:$0xfe] %vm1510, %v1459
        %1535 = vst.msk [vmem:[#allocation2 + $0xb7] sm:$0xff] %vm1512, %v1461
        %1536 = vst.msk [vmem:[#allocation2 + $0xbf] sm:$0xfe] %vm1510, %v1463
        %1537 = vst.msk [vmem:[#allocation2 + $0xc7] sm:$0xff] %vm1512, %v1465
        %1538 = vst.msk [vmem:[#allocation2 + $0xcf] sm:$0xfe] %vm1510, %v1467
        %1539 = vst.msk [vmem:[#allocation2 + $0xd7] sm:$0xff] %vm1512, %v1469
        %1540 = vst.msk [vmem:[#allocation2 + $0xdf] sm:$0xfe] %vm1510, %v1471
        %1541 = vst.msk [vmem:[#allocation2 + $0xe7] sm:$0xff] %vm1512, %v1473
        %1542 = vst.msk [vmem:[#allocation2 + $0xef] sm:$0xfe] %vm1510, %v1475
        %1543 = vst.msk [vmem:[#allocation2 + $0xf7] sm:$0xff] %vm1512, %v1477
        %1544 = vrot.lane.b32.xlu0 %v699, 48
        %v1545 = vpop.permute.xlu0 %1544
        %1546 = vrot.lane.b32.xlu0 %v700, 48
        %v1547 = vpop.permute.xlu0 %1546
        %1548 = vrot.lane.b32.xlu0 %v701, 48
        %v1549 = vpop.permute.xlu0 %1548
        %1550 = vrot.lane.b32.xlu0 %v702, 48
        %v1551 = vpop.permute.xlu0 %1550
        %1552 = vrot.lane.b32.xlu0 %v703, 48
        %v1553 = vpop.permute.xlu0 %1552
        %1554 = vrot.lane.b32.xlu0 %v704, 48
        %v1555 = vpop.permute.xlu0 %1554
        %1556 = vrot.lane.b32.xlu0 %v705, 48
        %v1557 = vpop.permute.xlu0 %1556
        %1558 = vrot.lane.b32.xlu0 %v706, 48
        %v1559 = vpop.permute.xlu0 %1558
        %1560 = vrot.lane.b32.xlu0 %v707, 48
        %v1561 = vpop.permute.xlu0 %1560
        %1562 = vrot.lane.b32.xlu0 %v708, 48
        %v1563 = vpop.permute.xlu0 %1562
        %1564 = vrot.lane.b32.xlu0 %v709, 48
        %v1565 = vpop.permute.xlu0 %1564
        %1566 = vrot.lane.b32.xlu0 %v710, 48
        %v1567 = vpop.permute.xlu0 %1566
        %1568 = vrot.lane.b32.xlu0 %v711, 48
        %v1569 = vpop.permute.xlu0 %1568
        %1570 = vrot.lane.b32.xlu0 %v712, 48
        %v1571 = vpop.permute.xlu0 %1570
        %1572 = vrot.lane.b32.xlu0 %v713, 48
        %v1573 = vpop.permute.xlu0 %1572
        %1574 = vrot.lane.b32.xlu0 %v714, 48
        %v1575 = vpop.permute.xlu0 %1574
        %1576 = vrot.lane.b32.xlu0 %v715, 48
        %v1577 = vpop.permute.xlu0 %1576
        %1578 = vrot.lane.b32.xlu0 %v716, 48
        %v1579 = vpop.permute.xlu0 %1578
        %1580 = vrot.lane.b32.xlu0 %v717, 48
        %v1581 = vpop.permute.xlu0 %1580
        %1582 = vrot.lane.b32.xlu0 %v718, 48
        %v1583 = vpop.permute.xlu0 %1582
        %1584 = vrot.lane.b32.xlu0 %v719, 48
        %v1585 = vpop.permute.xlu0 %1584
        %1586 = vrot.lane.b32.xlu0 %v720, 48
        %v1587 = vpop.permute.xlu0 %1586
        %1588 = vrot.lane.b32.xlu0 %v721, 48
        %v1589 = vpop.permute.xlu0 %1588
        %1590 = vrot.lane.b32.xlu0 %v722, 48
        %v1591 = vpop.permute.xlu0 %1590
        %1592 = vrot.lane.b32.xlu0 %v723, 48
        %v1593 = vpop.permute.xlu0 %1592
        %1594 = vrot.lane.b32.xlu0 %v724, 48
        %v1595 = vpop.permute.xlu0 %1594
        %1596 = vrot.lane.b32.xlu0 %v725, 48
        %v1597 = vpop.permute.xlu0 %1596
        %1598 = vrot.lane.b32.xlu0 %v726, 48
        %v1599 = vpop.permute.xlu0 %1598
        %1600 = vrot.lane.b32.xlu0 %v727, 48
        %v1601 = vpop.permute.xlu0 %1600
        %1602 = vrot.lane.b32.xlu0 %v728, 48
        %v1603 = vpop.permute.xlu0 %1602
        %1634 = vst.msk [vmem:[#allocation2 + $0x1] sm:$0xff] %vm807, %v1545
        %vm1635 = vcmask 457088
        %1636 = vst.msk [vmem:[#allocation2 + $0x9] sm:$0x7f] %vm1635, %v1547
        %1637 = vst.msk [vmem:[#allocation2 + $0x11] sm:$0xff] %vm807, %v1549
        %1638 = vst.msk [vmem:[#allocation2 + $0x19] sm:$0x7f] %vm1635, %v1551
        %1639 = vst.msk [vmem:[#allocation2 + $0x21] sm:$0xff] %vm807, %v1553
        %1640 = vst.msk [vmem:[#allocation2 + $0x29] sm:$0x7f] %vm1635, %v1555
        %1641 = vst.msk [vmem:[#allocation2 + $0x31] sm:$0xff] %vm807, %v1557
        %1642 = vst.msk [vmem:[#allocation2 + $0x39] sm:$0x7f] %vm1635, %v1559
        %1643 = vst.msk [vmem:[#allocation2 + $0x41] sm:$0xff] %vm807, %v1561
        %1644 = vst.msk [vmem:[#allocation2 + $0x49] sm:$0x7f] %vm1635, %v1563
        %1645 = vst.msk [vmem:[#allocation2 + $0x51] sm:$0xff] %vm807, %v1565
        %1646 = vst.msk [vmem:[#allocation2 + $0x59] sm:$0x7f] %vm1635, %v1567
        %1647 = vst.msk [vmem:[#allocation2 + $0x61] sm:$0xff] %vm807, %v1569
        %1648 = vst.msk [vmem:[#allocation2 + $0x69] sm:$0x7f] %vm1635, %v1571
        %1649 = vst.msk [vmem:[#allocation2 + $0x71] sm:$0xff] %vm807, %v1573
        %1650 = vst.msk [vmem:[#allocation2 + $0x79] sm:$0x7f] %vm1635, %v1575
        %1651 = vst.msk [vmem:[#allocation2 + $0x81] sm:$0xff] %vm807, %v1577
        %1652 = vst.msk [vmem:[#allocation2 + $0x89] sm:$0x7f] %vm1635, %v1579
        %1653 = vst.msk [vmem:[#allocation2 + $0x91] sm:$0xff] %vm807, %v1581
        %1654 = vst.msk [vmem:[#allocation2 + $0x99] sm:$0x7f] %vm1635, %v1583
        %1655 = vst.msk [vmem:[#allocation2 + $0xa1] sm:$0xff] %vm807, %v1585
        %1656 = vst.msk [vmem:[#allocation2 + $0xa9] sm:$0x7f] %vm1635, %v1587
        %1657 = vst.msk [vmem:[#allocation2 + $0xb1] sm:$0xff] %vm807, %v1589
        %1658 = vst.msk [vmem:[#allocation2 + $0xb9] sm:$0x7f] %vm1635, %v1591
        %1659 = vst.msk [vmem:[#allocation2 + $0xc1] sm:$0xff] %vm807, %v1593
        %1660 = vst.msk [vmem:[#allocation2 + $0xc9] sm:$0x7f] %vm1635, %v1595
        %1661 = vst.msk [vmem:[#allocation2 + $0xd1] sm:$0xff] %vm807, %v1597
        %1662 = vst.msk [vmem:[#allocation2 + $0xd9] sm:$0x7f] %vm1635, %v1599
        %1663 = vst.msk [vmem:[#allocation2 + $0xe1] sm:$0xff] %vm807, %v1601
        %1664 = vst.msk [vmem:[#allocation2 + $0xe9] sm:$0x7f] %vm1635, %v1603
        %1665 = vrot.lane.b32.xlu0 %v699, 56
        %v1666 = vpop.permute.xlu0 %1665
        %1667 = vrot.lane.b32.xlu0 %v700, 56
        %v1668 = vpop.permute.xlu0 %1667
        %1669 = vrot.lane.b32.xlu0 %v701, 56
        %v1670 = vpop.permute.xlu0 %1669
        %1671 = vrot.lane.b32.xlu0 %v702, 56
        %v1672 = vpop.permute.xlu0 %1671
        %1673 = vrot.lane.b32.xlu0 %v703, 56
        %v1674 = vpop.permute.xlu0 %1673
        %1675 = vrot.lane.b32.xlu0 %v704, 56
        %v1676 = vpop.permute.xlu0 %1675
        %1677 = vrot.lane.b32.xlu0 %v705, 56
        %v1678 = vpop.permute.xlu0 %1677
        %1679 = vrot.lane.b32.xlu0 %v706, 56
        %v1680 = vpop.permute.xlu0 %1679
        %1681 = vrot.lane.b32.xlu0 %v707, 56
        %v1682 = vpop.permute.xlu0 %1681
        %1683 = vrot.lane.b32.xlu0 %v708, 56
        %v1684 = vpop.permute.xlu0 %1683
        %1685 = vrot.lane.b32.xlu0 %v709, 56
        %v1686 = vpop.permute.xlu0 %1685
        %1687 = vrot.lane.b32.xlu0 %v710, 56
        %v1688 = vpop.permute.xlu0 %1687
        %1689 = vrot.lane.b32.xlu0 %v711, 56
        %v1690 = vpop.permute.xlu0 %1689
        %1691 = vrot.lane.b32.xlu0 %v712, 56
        %v1692 = vpop.permute.xlu0 %1691
        %1693 = vrot.lane.b32.xlu0 %v713, 56
        %v1694 = vpop.permute.xlu0 %1693
        %1695 = vrot.lane.b32.xlu0 %v714, 56
        %v1696 = vpop.permute.xlu0 %1695
        %1697 = vrot.lane.b32.xlu0 %v715, 56
        %v1698 = vpop.permute.xlu0 %1697
        %1699 = vrot.lane.b32.xlu0 %v716, 56
        %v1700 = vpop.permute.xlu0 %1699
        %1701 = vrot.lane.b32.xlu0 %v717, 56
        %v1702 = vpop.permute.xlu0 %1701
        %1703 = vrot.lane.b32.xlu0 %v718, 56
        %v1704 = vpop.permute.xlu0 %1703
        %1705 = vrot.lane.b32.xlu0 %v719, 56
        %v1706 = vpop.permute.xlu0 %1705
        %1707 = vrot.lane.b32.xlu0 %v720, 56
        %v1708 = vpop.permute.xlu0 %1707
        %1709 = vrot.lane.b32.xlu0 %v721, 56
        %v1710 = vpop.permute.xlu0 %1709
        %1711 = vrot.lane.b32.xlu0 %v722, 56
        %v1712 = vpop.permute.xlu0 %1711
        %1713 = vrot.lane.b32.xlu0 %v723, 56
        %v1714 = vpop.permute.xlu0 %1713
        %1715 = vrot.lane.b32.xlu0 %v724, 56
        %v1716 = vpop.permute.xlu0 %1715
        %1717 = vrot.lane.b32.xlu0 %v725, 56
        %v1718 = vpop.permute.xlu0 %1717
        %1719 = vrot.lane.b32.xlu0 %v726, 56
        %v1720 = vpop.permute.xlu0 %1719
        %1721 = vrot.lane.b32.xlu0 %v727, 56
        %v1722 = vpop.permute.xlu0 %1721
        %1723 = vrot.lane.b32.xlu0 %v728, 56
        %v1724 = vpop.permute.xlu0 %1723
        %1755 = vst.msk [vmem:[#allocation2] sm:$0xff] %vm827, %v1666
        %1756 = vst.msk [vmem:[#allocation2 + $0x8] sm:$0xff] %vm827, %v1668
        %1757 = vst.msk [vmem:[#allocation2 + $0x10] sm:$0xff] %vm827, %v1670
        %1758 = vst.msk [vmem:[#allocation2 + $0x18] sm:$0xff] %vm827, %v1672
        %1759 = vst.msk [vmem:[#allocation2 + $0x20] sm:$0xff] %vm827, %v1674
        %1760 = vst.msk [vmem:[#allocation2 + $0x28] sm:$0xff] %vm827, %v1676
        %1761 = vst.msk [vmem:[#allocation2 + $0x30] sm:$0xff] %vm827, %v1678
        %1762 = vst.msk [vmem:[#allocation2 + $0x38] sm:$0xff] %vm827, %v1680
        %1763 = vst.msk [vmem:[#allocation2 + $0x40] sm:$0xff] %vm827, %v1682
        %1764 = vst.msk [vmem:[#allocation2 + $0x48] sm:$0xff] %vm827, %v1684
        %1765 = vst.msk [vmem:[#allocation2 + $0x50] sm:$0xff] %vm827, %v1686
        %1766 = vst.msk [vmem:[#allocation2 + $0x58] sm:$0xff] %vm827, %v1688
        %1767 = vst.msk [vmem:[#allocation2 + $0x60] sm:$0xff] %vm827, %v1690
        %1768 = vst.msk [vmem:[#allocation2 + $0x68] sm:$0xff] %vm827, %v1692
        %1769 = vst.msk [vmem:[#allocation2 + $0x70] sm:$0xff] %vm827, %v1694
        %1770 = vst.msk [vmem:[#allocation2 + $0x78] sm:$0xff] %vm827, %v1696
        %1771 = vst.msk [vmem:[#allocation2 + $0x80] sm:$0xff] %vm827, %v1698
        %1772 = vst.msk [vmem:[#allocation2 + $0x88] sm:$0xff] %vm827, %v1700
        %1773 = vst.msk [vmem:[#allocation2 + $0x90] sm:$0xff] %vm827, %v1702
        %1774 = vst.msk [vmem:[#allocation2 + $0x98] sm:$0xff] %vm827, %v1704
        %1775 = vst.msk [vmem:[#allocation2 + $0xa0] sm:$0xff] %vm827, %v1706
        %1776 = vst.msk [vmem:[#allocation2 + $0xa8] sm:$0xff] %vm827, %v1708
        %1777 = vst.msk [vmem:[#allocation2 + $0xb0] sm:$0xff] %vm827, %v1710
        %1778 = vst.msk [vmem:[#allocation2 + $0xb8] sm:$0xff] %vm827, %v1712
        %1779 = vst.msk [vmem:[#allocation2 + $0xc0] sm:$0xff] %vm827, %v1714
        %1780 = vst.msk [vmem:[#allocation2 + $0xc8] sm:$0xff] %vm827, %v1716
        %1781 = vst.msk [vmem:[#allocation2 + $0xd0] sm:$0xff] %vm827, %v1718
        %1782 = vst.msk [vmem:[#allocation2 + $0xd8] sm:$0xff] %vm827, %v1720
        %1783 = vst.msk [vmem:[#allocation2 + $0xe0] sm:$0xff] %vm827, %v1722
        %1784 = vst.msk [vmem:[#allocation2 + $0xe8] sm:$0xff] %vm827, %v1724
        %1785 = vrot.lane.b32.xlu0 %v699, 64
        %v1786 = vpop.permute.xlu0 %1785
        %1787 = vrot.lane.b32.xlu0 %v700, 64
        %v1788 = vpop.permute.xlu0 %1787
        %1789 = vrot.lane.b32.xlu0 %v701, 64
        %v1790 = vpop.permute.xlu0 %1789
        %1791 = vrot.lane.b32.xlu0 %v702, 64
        %v1792 = vpop.permute.xlu0 %1791
        %1793 = vrot.lane.b32.xlu0 %v703, 64
        %v1794 = vpop.permute.xlu0 %1793
        %1795 = vrot.lane.b32.xlu0 %v704, 64
        %v1796 = vpop.permute.xlu0 %1795
        %1797 = vrot.lane.b32.xlu0 %v705, 64
        %v1798 = vpop.permute.xlu0 %1797
        %1799 = vrot.lane.b32.xlu0 %v706, 64
        %v1800 = vpop.permute.xlu0 %1799
        %1801 = vrot.lane.b32.xlu0 %v707, 64
        %v1802 = vpop.permute.xlu0 %1801
        %1803 = vrot.lane.b32.xlu0 %v708, 64
        %v1804 = vpop.permute.xlu0 %1803
        %1805 = vrot.lane.b32.xlu0 %v709, 64
        %v1806 = vpop.permute.xlu0 %1805
        %1807 = vrot.lane.b32.xlu0 %v710, 64
        %v1808 = vpop.permute.xlu0 %1807
        %1809 = vrot.lane.b32.xlu0 %v711, 64
        %v1810 = vpop.permute.xlu0 %1809
        %1811 = vrot.lane.b32.xlu0 %v712, 64
        %v1812 = vpop.permute.xlu0 %1811
        %1813 = vrot.lane.b32.xlu0 %v713, 64
        %v1814 = vpop.permute.xlu0 %1813
        %1815 = vrot.lane.b32.xlu0 %v714, 64
        %v1816 = vpop.permute.xlu0 %1815
        %1817 = vrot.lane.b32.xlu0 %v715, 64
        %v1818 = vpop.permute.xlu0 %1817
        %1819 = vrot.lane.b32.xlu0 %v716, 64
        %v1820 = vpop.permute.xlu0 %1819
        %1821 = vrot.lane.b32.xlu0 %v717, 64
        %v1822 = vpop.permute.xlu0 %1821
        %1823 = vrot.lane.b32.xlu0 %v718, 64
        %v1824 = vpop.permute.xlu0 %1823
        %1825 = vrot.lane.b32.xlu0 %v719, 64
        %v1826 = vpop.permute.xlu0 %1825
        %1827 = vrot.lane.b32.xlu0 %v720, 64
        %v1828 = vpop.permute.xlu0 %1827
        %1829 = vrot.lane.b32.xlu0 %v721, 64
        %v1830 = vpop.permute.xlu0 %1829
        %1831 = vrot.lane.b32.xlu0 %v722, 64
        %v1832 = vpop.permute.xlu0 %1831
        %1833 = vrot.lane.b32.xlu0 %v723, 64
        %v1834 = vpop.permute.xlu0 %1833
        %1835 = vrot.lane.b32.xlu0 %v724, 64
        %v1836 = vpop.permute.xlu0 %1835
        %1837 = vrot.lane.b32.xlu0 %v725, 64
        %v1838 = vpop.permute.xlu0 %1837
        %1839 = vrot.lane.b32.xlu0 %v726, 64
        %v1840 = vpop.permute.xlu0 %1839
        %1841 = vrot.lane.b32.xlu0 %v727, 64
        %v1842 = vpop.permute.xlu0 %1841
        %1843 = vrot.lane.b32.xlu0 %v728, 64
        %v1844 = vpop.permute.xlu0 %1843
        %vm1875 = vcmask 589313
        %1876 = vst.msk [vmem:[#allocation2 - $0x1] sm:$0xfe] %vm1875, %v1786
        %1877 = vst.msk [vmem:[#allocation2 + $0x7] sm:$0xff] %vm830, %v1788
        %1878 = vst.msk [vmem:[#allocation2 + $0xf] sm:$0xfe] %vm1875, %v1790
        %1879 = vst.msk [vmem:[#allocation2 + $0x17] sm:$0xff] %vm830, %v1792
        %1880 = vst.msk [vmem:[#allocation2 + $0x1f] sm:$0xfe] %vm1875, %v1794
        %1881 = vst.msk [vmem:[#allocation2 + $0x27] sm:$0xff] %vm830, %v1796
        %1882 = vst.msk [vmem:[#allocation2 + $0x2f] sm:$0xfe] %vm1875, %v1798
        %1883 = vst.msk [vmem:[#allocation2 + $0x37] sm:$0xff] %vm830, %v1800
        %1884 = vst.msk [vmem:[#allocation2 + $0x3f] sm:$0xfe] %vm1875, %v1802
        %1885 = vst.msk [vmem:[#allocation2 + $0x47] sm:$0xff] %vm830, %v1804
        %1886 = vst.msk [vmem:[#allocation2 + $0x4f] sm:$0xfe] %vm1875, %v1806
        %1887 = vst.msk [vmem:[#allocation2 + $0x57] sm:$0xff] %vm830, %v1808
        %1888 = vst.msk [vmem:[#allocation2 + $0x5f] sm:$0xfe] %vm1875, %v1810
        %1889 = vst.msk [vmem:[#allocation2 + $0x67] sm:$0xff] %vm830, %v1812
        %1890 = vst.msk [vmem:[#allocation2 + $0x6f] sm:$0xfe] %vm1875, %v1814
        %1891 = vst.msk [vmem:[#allocation2 + $0x77] sm:$0xff] %vm830, %v1816
        %1892 = vst.msk [vmem:[#allocation2 + $0x7f] sm:$0xfe] %vm1875, %v1818
        %1893 = vst.msk [vmem:[#allocation2 + $0x87] sm:$0xff] %vm830, %v1820
        %1894 = vst.msk [vmem:[#allocation2 + $0x8f] sm:$0xfe] %vm1875, %v1822
        %1895 = vst.msk [vmem:[#allocation2 + $0x97] sm:$0xff] %vm830, %v1824
        %1896 = vst.msk [vmem:[#allocation2 + $0x9f] sm:$0xfe] %vm1875, %v1826
        %1897 = vst.msk [vmem:[#allocation2 + $0xa7] sm:$0xff] %vm830, %v1828
        %1898 = vst.msk [vmem:[#allocation2 + $0xaf] sm:$0xfe] %vm1875, %v1830
        %1899 = vst.msk [vmem:[#allocation2 + $0xb7] sm:$0xff] %vm830, %v1832
        %1900 = vst.msk [vmem:[#allocation2 + $0xbf] sm:$0xfe] %vm1875, %v1834
        %1901 = vst.msk [vmem:[#allocation2 + $0xc7] sm:$0xff] %vm830, %v1836
        %1902 = vst.msk [vmem:[#allocation2 + $0xcf] sm:$0xfe] %vm1875, %v1838
        %1903 = vst.msk [vmem:[#allocation2 + $0xd7] sm:$0xff] %vm830, %v1840
        %1904 = vst.msk [vmem:[#allocation2 + $0xdf] sm:$0xfe] %vm1875, %v1842
        %1905 = vst.msk [vmem:[#allocation2 + $0xe7] sm:$0xff] %vm830, %v1844
        %v1906 = vld [vmem:[#allocation2] sm:$0xff]
        %v1907 = vld [vmem:[#allocation2 + $0x8] sm:$0xff]
        %v1908 = vld [vmem:[#allocation2 + $0x10] sm:$0xff]
        %v1909 = vld [vmem:[#allocation2 + $0x18] sm:$0xff]
        %v1910 = vld [vmem:[#allocation2 + $0x20] sm:$0xff]
        %v1911 = vld [vmem:[#allocation2 + $0x28] sm:$0xff]
        %v1912 = vld [vmem:[#allocation2 + $0x30] sm:$0xff]
        %v1913 = vld [vmem:[#allocation2 + $0x38] sm:$0xff]
        %v1914 = vld [vmem:[#allocation2 + $0x40] sm:$0xff]
        %v1915 = vld [vmem:[#allocation2 + $0x48] sm:$0xff]
        %v1916 = vld [vmem:[#allocation2 + $0x50] sm:$0xff]
        %v1917 = vld [vmem:[#allocation2 + $0x58] sm:$0xff]
        %v1918 = vld [vmem:[#allocation2 + $0x60] sm:$0xff]
        %v1919 = vld [vmem:[#allocation2 + $0x68] sm:$0xff]
        %v1920 = vld [vmem:[#allocation2 + $0x70] sm:$0xff]
        %v1921 = vld [vmem:[#allocation2 + $0x78] sm:$0xff]
        %v1922 = vld [vmem:[#allocation2 + $0x80] sm:$0xff]
        %v1923 = vld [vmem:[#allocation2 + $0x88] sm:$0xff]
        %v1924 = vld [vmem:[#allocation2 + $0x90] sm:$0xff]
        %v1925 = vld [vmem:[#allocation2 + $0x98] sm:$0xff]
        %v1926 = vld [vmem:[#allocation2 + $0xa0] sm:$0xff]
        %v1927 = vld [vmem:[#allocation2 + $0xa8] sm:$0xff]
        %v1928 = vld [vmem:[#allocation2 + $0xb0] sm:$0xff]
        %v1929 = vld [vmem:[#allocation2 + $0xb8] sm:$0xff]
        %v1930 = vld [vmem:[#allocation2 + $0xc0] sm:$0xff]
        %v1931 = vld [vmem:[#allocation2 + $0xc8] sm:$0xff]
        %v1932 = vld [vmem:[#allocation2 + $0xd0] sm:$0xff]
        %v1933 = vld [vmem:[#allocation2 + $0xd8] sm:$0xff]
        %v1934 = vld [vmem:[#allocation2 + $0xe0] sm:$0xff]
        %v1935 = vld [vmem:[#allocation2 + $0xe8] sm:$0xff]
        %v1936 = vld [vmem:[#allocation2 + $0xf0] sm:$0xff]
        %v1937 = vld [vmem:[#allocation2 + $0xf8] sm:$0xff]
        %v1938 = vld [vmem:[%s3] sm:$0xff]
        %v1939 = vld [vmem:[%s3 + $0x8] sm:$0xff]
        %v1940 = vld [vmem:[%s3 + $0x10] sm:$0xff]
        %v1941 = vld [vmem:[%s3 + $0x18] sm:$0xff]
        %v1942 = vld [vmem:[%s3 + $0x20] sm:$0xff]
        %v1943 = vld [vmem:[%s3 + $0x28] sm:$0xff]
        %v1944 = vld [vmem:[%s3 + $0x30] sm:$0xff]
        %v1945 = vld [vmem:[%s3 + $0x38] sm:$0xff]
        %v1946 = vld [vmem:[%s3 + $0x40] sm:$0xff]
        %v1947 = vld [vmem:[%s4] sm:$0x1]
        %v1949 = vlaneseq
        %v1950 = vshrl.u32 %v1949, 7
        %v1951 = vsub.s32 0, %v1950
        %v1952 = vrot.slane %v1947, %v1951
        %vm1954 = vcmask 588800
        %v1956 = vsel %vm1954, %v1906, 0
        %v1959 = vsel %vm1954, %v1907, 0
        %v1962 = vsel %vm1954, %v1908, 0
        %v1965 = vsel %vm1954, %v1909, 0
        %v1968 = vsel %vm1954, %v1910, 0
        %v1971 = vsel %vm1954, %v1911, 0
        %v1974 = vsel %vm1954, %v1912, 0
        %v1977 = vsel %vm1954, %v1913, 0
        %v1980 = vsel %vm1954, %v1914, 0
        %v1983 = vsel %vm1954, %v1915, 0
        %v1986 = vsel %vm1954, %v1916, 0
        %v1989 = vsel %vm1954, %v1917, 0
        %v1992 = vsel %vm1954, %v1918, 0
        %v1995 = vsel %vm1954, %v1919, 0
        %v1998 = vsel %vm1954, %v1920, 0
        %v2001 = vsel %vm1954, %v1921, 0
        %v2004 = vsel %vm1954, %v1922, 0
        %v2007 = vsel %vm1954, %v1923, 0
        %v2010 = vsel %vm1954, %v1924, 0
        %v2013 = vsel %vm1954, %v1925, 0
        %v2016 = vsel %vm1954, %v1926, 0
        %v2019 = vsel %vm1954, %v1927, 0
        %v2022 = vsel %vm1954, %v1928, 0
        %v2025 = vsel %vm1954, %v1929, 0
        %v2028 = vsel %vm1954, %v1930, 0
        %v2031 = vsel %vm1954, %v1931, 0
        %v2034 = vsel %vm1954, %v1932, 0
        %v2037 = vsel %vm1954, %v1933, 0
        %v2040 = vsel %vm1954, %v1934, 0
        %v2043 = vsel %vm1954, %v1935, 0
        %v2046 = vsel %vm1954, %v1936, 0
        %v2049 = vsel %vm1954, %v1937, 0
        %2051 = vmatprep.subr.mxu0 0.0
        %2052 = vmatpush1.msra.mxu0 %v1938
        %2053 = vmatprep.subr.mxu0 0.0
        %2054 = vmatpush1.msra.mxu0 %v1939
        %2055 = vmatprep.subr.mxu0 0.0
        %2056 = vmatpush1.msra.mxu0 %v1940
        %2057 = vmatprep.subr.mxu0 0.0
        %2058 = vmatpush1.msra.mxu0 %v1941
        %2059 = vmatprep.subr.mxu0 0.0
        %2060 = vmatpush1.msra.mxu0 %v1942
        %2061 = vmatprep.subr.mxu0 0.0
        %2062 = vmatpush1.msra.mxu0 %v1943
        %2063 = vmatprep.subr.mxu0 0.0
        %2064 = vmatpush1.msra.mxu0 %v1944
        %2065 = vmatprep.subr.mxu0 0.0
        %2066 = vmatpush1.msra.mxu0 %v1945
        %2067 = vmatprep.subr.mxu0 0.0
        %2068 = vmatpush1.msra.mxu0 %v1946
        %2069 = vmatprep.subr.mxu0 0.0
        %2070 = vmatpush1.msra.mxu0 0.0
        %2071 = vmatprep.subr.mxu0 0.0
        %2072 = vmatpush1.msra.mxu0 0.0
        %2073 = vmatprep.subr.mxu0 0.0
        %2074 = vmatpush1.msra.mxu0 0.0
        %2075 = vmatprep.subr.mxu0 0.0
        %2076 = vmatpush1.msra.mxu0 0.0
        %2077 = vmatprep.subr.mxu0 0.0
        %2078 = vmatpush1.msra.mxu0 0.0
        %2079 = vmatprep.subr.mxu0 0.0
        %2080 = vmatpush1.msra.mxu0 0.0
        %2081 = vmatprep.subr.mxu0 0.0
        %2082 = vmatpush1.msra.mxu0 0.0
        %2083 = vmatprep.subr.mxu0 0.0
        %2084 = vmatpush1.msra.mxu0 0.0
        %2085 = vmatprep.subr.mxu0 0.0
        %2086 = vmatpush1.msra.mxu0 0.0
        %2087 = vmatprep.subr.mxu0 0.0
        %2088 = vmatpush1.msra.mxu0 0.0
        %2089 = vmatprep.subr.mxu0 0.0
        %2090 = vmatpush1.msra.mxu0 0.0
        %2091 = vmatprep.subr.mxu0 0.0
        %2092 = vmatpush1.msra.mxu0 0.0
        %2093 = vmatprep.subr.mxu0 0.0
        %2094 = vmatpush1.msra.mxu0 0.0
        %2095 = vmatprep.subr.mxu0 0.0
        %2096 = vmatpush1.msra.mxu0 0.0
        %2097 = vmatprep.subr.mxu0 0.0
        %2098 = vmatpush1.msra.mxu0 0.0
        %2099 = vmatprep.subr.mxu0 0.0
        %2100 = vmatpush1.msra.mxu0 0.0
        %2101 = vmatprep.subr.mxu0 0.0
        %2102 = vmatpush1.msra.mxu0 0.0
        %2103 = vmatprep.subr.mxu0 0.0
        %2104 = vmatpush1.msra.mxu0 0.0
        %2105 = vmatprep.subr.mxu0 0.0
        %2106 = vmatpush1.msra.mxu0 0.0
        %2107 = vmatprep.subr.mxu0 0.0
        %2108 = vmatpush1.msra.mxu0 0.0
        %2109 = vmatprep.subr.mxu0 0.0
        %2110 = vmatpush1.msra.mxu0 0.0
        %2111 = vmatprep.subr.mxu0 0.0
        %2112 = vmatpush1.msra.mxu0 0.0
        %2113 = vmatprep.subr.mxu0 0.0
        %2114 = vmatpush1.msra.mxu0 0.0
        %2115 = vmatprep.mubr.f32.mxu0 0.0
        %2116 = vmatmul.mubr.f32.gmra.mrb[0].mxu0 %v1956
        %v2117 = vpop.f32.mrb[0].mxu0
        %v2118 = vadd.f32 %v1952, %v2117
        %v2119 = vpop.f32.mrb[0].mxu0
        %2120 = vmatprep.mubr.f32.mxu0 0.0
        %2121 = vmatmul.mubr.f32.gmra.mrb[0].mxu0 %v1959
        %v2122 = vpop.f32.mrb[0].mxu0
        %v2123 = vadd.f32 %v1952, %v2122
        %v2124 = vpop.f32.mrb[0].mxu0
        %2125 = vmatprep.mubr.f32.mxu0 0.0
        %2126 = vmatmul.mubr.f32.gmra.mrb[0].mxu0 %v1962
        %v2127 = vpop.f32.mrb[0].mxu0
        %v2128 = vadd.f32 %v1952, %v2127
        %v2129 = vpop.f32.mrb[0].mxu0
        %2130 = vmatprep.mubr.f32.mxu0 0.0
        %2131 = vmatmul.mubr.f32.gmra.mrb[0].mxu0 %v1965
        %v2132 = vpop.f32.mrb[0].mxu0
        %v2133 = vadd.f32 %v1952, %v2132
        %v2134 = vpop.f32.mrb[0].mxu0
        %2135 = vmatprep.mubr.f32.mxu0 0.0
        %2136 = vmatmul.mubr.f32.gmra.mrb[0].mxu0 %v1968
        %v2137 = vpop.f32.mrb[0].mxu0
        %v2138 = vadd.f32 %v1952, %v2137
        %v2139 = vpop.f32.mrb[0].mxu0
        %2140 = vmatprep.mubr.f32.mxu0 0.0
        %2141 = vmatmul.mubr.f32.gmra.mrb[0].mxu0 %v1971
        %v2142 = vpop.f32.mrb[0].mxu0
        %v2143 = vadd.f32 %v1952, %v2142
        %v2144 = vpop.f32.mrb[0].mxu0
        %2145 = vmatprep.mubr.f32.mxu0 0.0
        %2146 = vmatmul.mubr.f32.gmra.mrb[0].mxu0 %v1974
        %v2147 = vpop.f32.mrb[0].mxu0
        %v2148 = vadd.f32 %v1952, %v2147
        %v2149 = vpop.f32.mrb[0].mxu0
        %2150 = vmatprep.mubr.f32.mxu0 0.0
        %2151 = vmatmul.mubr.f32.gmra.mrb[0].mxu0 %v1977
        %v2152 = vpop.f32.mrb[0].mxu0
        %v2153 = vadd.f32 %v1952, %v2152
        %v2154 = vpop.f32.mrb[0].mxu0
        %2155 = vmatprep.mubr.f32.mxu0 0.0
        %2156 = vmatmul.mubr.f32.gmra.mrb[0].mxu0 %v1980
        %v2157 = vpop.f32.mrb[0].mxu0
        %v2158 = vadd.f32 %v1952, %v2157
        %v2159 = vpop.f32.mrb[0].mxu0
        %2160 = vmatprep.mubr.f32.mxu0 0.0
        %2161 = vmatmul.mubr.f32.gmra.mrb[0].mxu0 %v1983
        %v2162 = vpop.f32.mrb[0].mxu0
        %v2163 = vadd.f32 %v1952, %v2162
        %v2164 = vpop.f32.mrb[0].mxu0
        %2165 = vmatprep.mubr.f32.mxu0 0.0
        %2166 = vmatmul.mubr.f32.gmra.mrb[0].mxu0 %v1986
        %v2167 = vpop.f32.mrb[0].mxu0
        %v2168 = vadd.f32 %v1952, %v2167
        %v2169 = vpop.f32.mrb[0].mxu0
        %2170 = vmatprep.mubr.f32.mxu0 0.0
        %2171 = vmatmul.mubr.f32.gmra.mrb[0].mxu0 %v1989
        %v2172 = vpop.f32.mrb[0].mxu0
        %v2173 = vadd.f32 %v1952, %v2172
        %v2174 = vpop.f32.mrb[0].mxu0
        %2175 = vmatprep.mubr.f32.mxu0 0.0
        %2176 = vmatmul.mubr.f32.gmra.mrb[0].mxu0 %v1992
        %v2177 = vpop.f32.mrb[0].mxu0
        %v2178 = vadd.f32 %v1952, %v2177
        %v2179 = vpop.f32.mrb[0].mxu0
        %2180 = vmatprep.mubr.f32.mxu0 0.0
        %2181 = vmatmul.mubr.f32.gmra.mrb[0].mxu0 %v1995
        %v2182 = vpop.f32.mrb[0].mxu0
        %v2183 = vadd.f32 %v1952, %v2182
        %v2184 = vpop.f32.mrb[0].mxu0
        %2185 = vmatprep.mubr.f32.mxu0 0.0
        %2186 = vmatmul.mubr.f32.gmra.mrb[0].mxu0 %v1998
        %v2187 = vpop.f32.mrb[0].mxu0
        %v2188 = vadd.f32 %v1952, %v2187
        %v2189 = vpop.f32.mrb[0].mxu0
        %2190 = vmatprep.mubr.f32.mxu0 0.0
        %2191 = vmatmul.mubr.f32.gmra.mrb[0].mxu0 %v2001
        %v2192 = vpop.f32.mrb[0].mxu0
        %v2193 = vadd.f32 %v1952, %v2192
        %v2194 = vpop.f32.mrb[0].mxu0
        %2195 = vmatprep.mubr.f32.mxu0 0.0
        %2196 = vmatmul.mubr.f32.gmra.mrb[0].mxu0 %v2004
        %v2197 = vpop.f32.mrb[0].mxu0
        %v2198 = vadd.f32 %v1952, %v2197
        %v2199 = vpop.f32.mrb[0].mxu0
        %2200 = vmatprep.mubr.f32.mxu0 0.0
        %2201 = vmatmul.mubr.f32.gmra.mrb[0].mxu0 %v2007
        %v2202 = vpop.f32.mrb[0].mxu0
        %v2203 = vadd.f32 %v1952, %v2202
        %v2204 = vpop.f32.mrb[0].mxu0
        %2205 = vmatprep.mubr.f32.mxu0 0.0
        %2206 = vmatmul.mubr.f32.gmra.mrb[0].mxu0 %v2010
        %v2207 = vpop.f32.mrb[0].mxu0
        %v2208 = vadd.f32 %v1952, %v2207
        %v2209 = vpop.f32.mrb[0].mxu0
        %2210 = vmatprep.mubr.f32.mxu0 0.0
        %2211 = vmatmul.mubr.f32.gmra.mrb[0].mxu0 %v2013
        %v2212 = vpop.f32.mrb[0].mxu0
        %v2213 = vadd.f32 %v1952, %v2212
        %v2214 = vpop.f32.mrb[0].mxu0
        %2215 = vmatprep.mubr.f32.mxu0 0.0
        %2216 = vmatmul.mubr.f32.gmra.mrb[0].mxu0 %v2016
        %v2217 = vpop.f32.mrb[0].mxu0
        %v2218 = vadd.f32 %v1952, %v2217
        %v2219 = vpop.f32.mrb[0].mxu0
        %2220 = vmatprep.mubr.f32.mxu0 0.0
        %2221 = vmatmul.mubr.f32.gmra.mrb[0].mxu0 %v2019
        %v2222 = vpop.f32.mrb[0].mxu0
        %v2223 = vadd.f32 %v1952, %v2222
        %v2224 = vpop.f32.mrb[0].mxu0
        %2225 = vmatprep.mubr.f32.mxu0 0.0
        %2226 = vmatmul.mubr.f32.gmra.mrb[0].mxu0 %v2022
        %v2227 = vpop.f32.mrb[0].mxu0
        %v2228 = vadd.f32 %v1952, %v2227
        %v2229 = vpop.f32.mrb[0].mxu0
        %2230 = vmatprep.mubr.f32.mxu0 0.0
        %2231 = vmatmul.mubr.f32.gmra.mrb[0].mxu0 %v2025
        %v2232 = vpop.f32.mrb[0].mxu0
        %v2233 = vadd.f32 %v1952, %v2232
        %v2234 = vpop.f32.mrb[0].mxu0
        %2235 = vmatprep.mubr.f32.mxu0 0.0
        %2236 = vmatmul.mubr.f32.gmra.mrb[0].mxu0 %v2028
        %v2237 = vpop.f32.mrb[0].mxu0
        %v2238 = vadd.f32 %v1952, %v2237
        %v2239 = vpop.f32.mrb[0].mxu0
        %2240 = vmatprep.mubr.f32.mxu0 0.0
        %2241 = vmatmul.mubr.f32.gmra.mrb[0].mxu0 %v2031
        %v2242 = vpop.f32.mrb[0].mxu0
        %v2243 = vadd.f32 %v1952, %v2242
        %v2244 = vpop.f32.mrb[0].mxu0
        %2245 = vmatprep.mubr.f32.mxu0 0.0
        %2246 = vmatmul.mubr.f32.gmra.mrb[0].mxu0 %v2034
        %v2247 = vpop.f32.mrb[0].mxu0
        %v2248 = vadd.f32 %v1952, %v2247
        %v2249 = vpop.f32.mrb[0].mxu0
        %2250 = vmatprep.mubr.f32.mxu0 0.0
        %2251 = vmatmul.mubr.f32.gmra.mrb[0].mxu0 %v2037
        %v2252 = vpop.f32.mrb[0].mxu0
        %v2253 = vadd.f32 %v1952, %v2252
        %v2254 = vpop.f32.mrb[0].mxu0
        %2255 = vmatprep.mubr.f32.mxu0 0.0
        %2256 = vmatmul.mubr.f32.gmra.mrb[0].mxu0 %v2040
        %v2257 = vpop.f32.mrb[0].mxu0
        %v2258 = vadd.f32 %v1952, %v2257
        %v2259 = vpop.f32.mrb[0].mxu0
        %2260 = vmatprep.mubr.f32.mxu0 0.0
        %2261 = vmatmul.mubr.f32.gmra.mrb[0].mxu0 %v2043
        %v2262 = vpop.f32.mrb[0].mxu0
        %v2263 = vadd.f32 %v1952, %v2262
        %v2264 = vpop.f32.mrb[0].mxu0
        %2265 = vmatprep.mubr.f32.mxu0 0.0
        %2266 = vmatmul.mubr.f32.gmra.mrb[0].mxu0 %v2046
        %v2267 = vpop.f32.mrb[0].mxu0
        %v2268 = vadd.f32 %v1952, %v2267
        %v2269 = vpop.f32.mrb[0].mxu0
        %2270 = vmatprep.mubr.f32.mxu0 0.0
        %2271 = vmatmul.mubr.f32.gmra.mrb[0].mxu0 %v2049
        %v2272 = vpop.f32.mrb[0].mxu0
        %v2273 = vadd.f32 %v1952, %v2272
        %v2274 = vpop.f32.mrb[0].mxu0
        %2275 = vdwg.mxu0
        %v2276 = vmax.f32 %v2118, 0.0
        %v2277 = vmax.f32 %v2123, 0.0
        %v2278 = vmax.f32 %v2128, 0.0
        %v2279 = vmax.f32 %v2133, 0.0
        %v2280 = vmax.f32 %v2138, 0.0
        %v2281 = vmax.f32 %v2143, 0.0
        %v2282 = vmax.f32 %v2148, 0.0
        %v2283 = vmax.f32 %v2153, 0.0
        %v2284 = vmax.f32 %v2158, 0.0
        %v2285 = vmax.f32 %v2163, 0.0
        %v2286 = vmax.f32 %v2168, 0.0
        %v2287 = vmax.f32 %v2173, 0.0
        %v2288 = vmax.f32 %v2178, 0.0
        %v2289 = vmax.f32 %v2183, 0.0
        %v2290 = vmax.f32 %v2188, 0.0
        %v2291 = vmax.f32 %v2193, 0.0
        %v2292 = vmax.f32 %v2198, 0.0
        %v2293 = vmax.f32 %v2203, 0.0
        %v2294 = vmax.f32 %v2208, 0.0
        %v2295 = vmax.f32 %v2213, 0.0
        %v2296 = vmax.f32 %v2218, 0.0
        %v2297 = vmax.f32 %v2223, 0.0
        %v2298 = vmax.f32 %v2228, 0.0
        %v2299 = vmax.f32 %v2233, 0.0
        %v2300 = vmax.f32 %v2238, 0.0
        %v2301 = vmax.f32 %v2243, 0.0
        %v2302 = vmax.f32 %v2248, 0.0
        %v2303 = vmax.f32 %v2253, 0.0
        %v2304 = vmax.f32 %v2258, 0.0
        %v2305 = vmax.f32 %v2263, 0.0
        %v2306 = vmax.f32 %v2268, 0.0
        %v2307 = vmax.f32 %v2273, 0.0
        %2338 = vrot.lane.b32.xlu0 %v2276, 120
        %v2339 = vpop.permute.xlu0 %2338
        %2340 = vrot.lane.b32.xlu0 %v2277, 120
        %v2341 = vpop.permute.xlu0 %2340
        %2342 = vrot.lane.b32.xlu0 %v2278, 120
        %v2343 = vpop.permute.xlu0 %2342
        %2344 = vrot.lane.b32.xlu0 %v2279, 120
        %v2345 = vpop.permute.xlu0 %2344
        %2346 = vrot.lane.b32.xlu0 %v2280, 120
        %v2347 = vpop.permute.xlu0 %2346
        %2348 = vrot.lane.b32.xlu0 %v2281, 120
        %v2349 = vpop.permute.xlu0 %2348
        %2350 = vrot.lane.b32.xlu0 %v2282, 120
        %v2351 = vpop.permute.xlu0 %2350
        %2352 = vrot.lane.b32.xlu0 %v2283, 120
        %v2353 = vpop.permute.xlu0 %2352
        %2354 = vrot.lane.b32.xlu0 %v2284, 120
        %v2355 = vpop.permute.xlu0 %2354
        %2356 = vrot.lane.b32.xlu0 %v2285, 120
        %v2357 = vpop.permute.xlu0 %2356
        %2358 = vrot.lane.b32.xlu0 %v2286, 120
        %v2359 = vpop.permute.xlu0 %2358
        %2360 = vrot.lane.b32.xlu0 %v2287, 120
        %v2361 = vpop.permute.xlu0 %2360
        %2362 = vrot.lane.b32.xlu0 %v2288, 120
        %v2363 = vpop.permute.xlu0 %2362
        %2364 = vrot.lane.b32.xlu0 %v2289, 120
        %v2365 = vpop.permute.xlu0 %2364
        %2366 = vrot.lane.b32.xlu0 %v2290, 120
        %v2367 = vpop.permute.xlu0 %2366
        %2368 = vrot.lane.b32.xlu0 %v2291, 120
        %v2369 = vpop.permute.xlu0 %2368
        %2370 = vrot.lane.b32.xlu0 %v2292, 120
        %v2371 = vpop.permute.xlu0 %2370
        %2372 = vrot.lane.b32.xlu0 %v2293, 120
        %v2373 = vpop.permute.xlu0 %2372
        %2374 = vrot.lane.b32.xlu0 %v2294, 120
        %v2375 = vpop.permute.xlu0 %2374
        %2376 = vrot.lane.b32.xlu0 %v2295, 120
        %v2377 = vpop.permute.xlu0 %2376
        %2378 = vrot.lane.b32.xlu0 %v2296, 120
        %v2379 = vpop.permute.xlu0 %2378
        %2380 = vrot.lane.b32.xlu0 %v2297, 120
        %v2381 = vpop.permute.xlu0 %2380
        %2382 = vrot.lane.b32.xlu0 %v2298, 120
        %v2383 = vpop.permute.xlu0 %2382
        %2384 = vrot.lane.b32.xlu0 %v2299, 120
        %v2385 = vpop.permute.xlu0 %2384
        %2386 = vrot.lane.b32.xlu0 %v2300, 120
        %v2387 = vpop.permute.xlu0 %2386
        %2388 = vrot.lane.b32.xlu0 %v2301, 120
        %v2389 = vpop.permute.xlu0 %2388
        %2390 = vrot.lane.b32.xlu0 %v2302, 120
        %v2391 = vpop.permute.xlu0 %2390
        %2392 = vrot.lane.b32.xlu0 %v2303, 120
        %v2393 = vpop.permute.xlu0 %2392
        %2394 = vrot.lane.b32.xlu0 %v2304, 120
        %v2395 = vpop.permute.xlu0 %2394
        %2396 = vrot.lane.b32.xlu0 %v2305, 120
        %v2397 = vpop.permute.xlu0 %2396
        %2428 = vst.msk [vmem:[%s850 + $0x1] sm:$0xff] %vm729, %v2339
        %2429 = vst.msk [vmem:[%s850 + $0x9] sm:$0x7f] %vm852, %v2341
        %2430 = vst.msk [vmem:[%s850 + $0x11] sm:$0xff] %vm729, %v2343
        %2431 = vst.msk [vmem:[%s850 + $0x19] sm:$0x7f] %vm852, %v2345
        %2432 = vst.msk [vmem:[%s850 + $0x21] sm:$0xff] %vm729, %v2347
        %2433 = vst.msk [vmem:[%s850 + $0x29] sm:$0x7f] %vm852, %v2349
        %2434 = vst.msk [vmem:[%s850 + $0x31] sm:$0xff] %vm729, %v2351
        %2435 = vst.msk [vmem:[%s850 + $0x39] sm:$0x7f] %vm852, %v2353
        %2436 = vst.msk [vmem:[%s850 + $0x41] sm:$0xff] %vm729, %v2355
        %2437 = vst.msk [vmem:[%s850 + $0x49] sm:$0x7f] %vm852, %v2357
        %2438 = vst.msk [vmem:[%s850 + $0x51] sm:$0xff] %vm729, %v2359
        %2439 = vst.msk [vmem:[%s850 + $0x59] sm:$0x7f] %vm852, %v2361
        %2440 = vst.msk [vmem:[%s850 + $0x61] sm:$0xff] %vm729, %v2363
        %2441 = vst.msk [vmem:[%s850 + $0x69] sm:$0x7f] %vm852, %v2365
        %2442 = vst.msk [vmem:[%s850 + $0x71] sm:$0xff] %vm729, %v2367
        %2443 = vst.msk [vmem:[%s850 + $0x79] sm:$0x7f] %vm852, %v2369
        %2444 = vst.msk [vmem:[%s850 + $0x81] sm:$0xff] %vm729, %v2371
        %2445 = vst.msk [vmem:[%s850 + $0x89] sm:$0x7f] %vm852, %v2373
        %2446 = vst.msk [vmem:[%s850 + $0x91] sm:$0xff] %vm729, %v2375
        %2447 = vst.msk [vmem:[%s850 + $0x99] sm:$0x7f] %vm852, %v2377
        %2448 = vst.msk [vmem:[%s850 + $0xa1] sm:$0xff] %vm729, %v2379
        %2449 = vst.msk [vmem:[%s850 + $0xa9] sm:$0x7f] %vm852, %v2381
        %2450 = vst.msk [vmem:[%s850 + $0xb1] sm:$0xff] %vm729, %v2383
        %2451 = vst.msk [vmem:[%s850 + $0xb9] sm:$0x7f] %vm852, %v2385
        %2452 = vst.msk [vmem:[%s850 + $0xc1] sm:$0xff] %vm729, %v2387
        %2453 = vst.msk [vmem:[%s850 + $0xc9] sm:$0x7f] %vm852, %v2389
        %2454 = vst.msk [vmem:[%s850 + $0xd1] sm:$0xff] %vm729, %v2391
        %2455 = vst.msk [vmem:[%s850 + $0xd9] sm:$0x7f] %vm852, %v2393
        %2456 = vst.msk [vmem:[%s850 + $0xe1] sm:$0xff] %vm729, %v2395
        %2457 = vst.msk [vmem:[%s850 + $0xe9] sm:$0x7f] %vm852, %v2397
        %2458 = vst.msk [vmem:[%s850] sm:$0xff] %vm749, %v2276
        %2459 = vst.msk [vmem:[%s850 + $0x8] sm:$0xff] %vm749, %v2277
        %2460 = vst.msk [vmem:[%s850 + $0x10] sm:$0xff] %vm749, %v2278
        %2461 = vst.msk [vmem:[%s850 + $0x18] sm:$0xff] %vm749, %v2279
        %2462 = vst.msk [vmem:[%s850 + $0x20] sm:$0xff] %vm749, %v2280
        %2463 = vst.msk [vmem:[%s850 + $0x28] sm:$0xff] %vm749, %v2281
        %2464 = vst.msk [vmem:[%s850 + $0x30] sm:$0xff] %vm749, %v2282
        %2465 = vst.msk [vmem:[%s850 + $0x38] sm:$0xff] %vm749, %v2283
        %2466 = vst.msk [vmem:[%s850 + $0x40] sm:$0xff] %vm749, %v2284
        %2467 = vst.msk [vmem:[%s850 + $0x48] sm:$0xff] %vm749, %v2285
        %2468 = vst.msk [vmem:[%s850 + $0x50] sm:$0xff] %vm749, %v2286
        %2469 = vst.msk [vmem:[%s850 + $0x58] sm:$0xff] %vm749, %v2287
        %2470 = vst.msk [vmem:[%s850 + $0x60] sm:$0xff] %vm749, %v2288
        %2471 = vst.msk [vmem:[%s850 + $0x68] sm:$0xff] %vm749, %v2289
        %2472 = vst.msk [vmem:[%s850 + $0x70] sm:$0xff] %vm749, %v2290
        %2473 = vst.msk [vmem:[%s850 + $0x78] sm:$0xff] %vm749, %v2291
        %2474 = vst.msk [vmem:[%s850 + $0x80] sm:$0xff] %vm749, %v2292
        %2475 = vst.msk [vmem:[%s850 + $0x88] sm:$0xff] %vm749, %v2293
        %2476 = vst.msk [vmem:[%s850 + $0x90] sm:$0xff] %vm749, %v2294
        %2477 = vst.msk [vmem:[%s850 + $0x98] sm:$0xff] %vm749, %v2295
        %2478 = vst.msk [vmem:[%s850 + $0xa0] sm:$0xff] %vm749, %v2296
        %2479 = vst.msk [vmem:[%s850 + $0xa8] sm:$0xff] %vm749, %v2297
        %2480 = vst.msk [vmem:[%s850 + $0xb0] sm:$0xff] %vm749, %v2298
        %2481 = vst.msk [vmem:[%s850 + $0xb8] sm:$0xff] %vm749, %v2299
        %2482 = vst.msk [vmem:[%s850 + $0xc0] sm:$0xff] %vm749, %v2300
        %2483 = vst.msk [vmem:[%s850 + $0xc8] sm:$0xff] %vm749, %v2301
        %2484 = vst.msk [vmem:[%s850 + $0xd0] sm:$0xff] %vm749, %v2302
        %2485 = vst.msk [vmem:[%s850 + $0xd8] sm:$0xff] %vm749, %v2303
        %2486 = vst.msk [vmem:[%s850 + $0xe0] sm:$0xff] %vm749, %v2304
        %2487 = vst.msk [vmem:[%s850 + $0xe8] sm:$0xff] %vm749, %v2305
        %2488 = vrot.lane.b32.xlu0 %v2276, 8
        %v2489 = vpop.permute.xlu0 %2488
        %2490 = vrot.lane.b32.xlu0 %v2277, 8
        %v2491 = vpop.permute.xlu0 %2490
        %2492 = vrot.lane.b32.xlu0 %v2278, 8
        %v2493 = vpop.permute.xlu0 %2492
        %2494 = vrot.lane.b32.xlu0 %v2279, 8
        %v2495 = vpop.permute.xlu0 %2494
        %2496 = vrot.lane.b32.xlu0 %v2280, 8
        %v2497 = vpop.permute.xlu0 %2496
        %2498 = vrot.lane.b32.xlu0 %v2281, 8
        %v2499 = vpop.permute.xlu0 %2498
        %2500 = vrot.lane.b32.xlu0 %v2282, 8
        %v2501 = vpop.permute.xlu0 %2500
        %2502 = vrot.lane.b32.xlu0 %v2283, 8
        %v2503 = vpop.permute.xlu0 %2502
        %2504 = vrot.lane.b32.xlu0 %v2284, 8
        %v2505 = vpop.permute.xlu0 %2504
        %2506 = vrot.lane.b32.xlu0 %v2285, 8
        %v2507 = vpop.permute.xlu0 %2506
        %2508 = vrot.lane.b32.xlu0 %v2286, 8
        %v2509 = vpop.permute.xlu0 %2508
        %2510 = vrot.lane.b32.xlu0 %v2287, 8
        %v2511 = vpop.permute.xlu0 %2510
        %2512 = vrot.lane.b32.xlu0 %v2288, 8
        %v2513 = vpop.permute.xlu0 %2512
        %2514 = vrot.lane.b32.xlu0 %v2289, 8
        %v2515 = vpop.permute.xlu0 %2514
        %2516 = vrot.lane.b32.xlu0 %v2290, 8
        %v2517 = vpop.permute.xlu0 %2516
        %2518 = vrot.lane.b32.xlu0 %v2291, 8
        %v2519 = vpop.permute.xlu0 %2518
        %2520 = vrot.lane.b32.xlu0 %v2292, 8
        %v2521 = vpop.permute.xlu0 %2520
        %2522 = vrot.lane.b32.xlu0 %v2293, 8
        %v2523 = vpop.permute.xlu0 %2522
        %2524 = vrot.lane.b32.xlu0 %v2294, 8
        %v2525 = vpop.permute.xlu0 %2524
        %2526 = vrot.lane.b32.xlu0 %v2295, 8
        %v2527 = vpop.permute.xlu0 %2526
        %2528 = vrot.lane.b32.xlu0 %v2296, 8
        %v2529 = vpop.permute.xlu0 %2528
        %2530 = vrot.lane.b32.xlu0 %v2297, 8
        %v2531 = vpop.permute.xlu0 %2530
        %2532 = vrot.lane.b32.xlu0 %v2298, 8
        %v2533 = vpop.permute.xlu0 %2532
        %2534 = vrot.lane.b32.xlu0 %v2299, 8
        %v2535 = vpop.permute.xlu0 %2534
        %2536 = vrot.lane.b32.xlu0 %v2300, 8
        %v2537 = vpop.permute.xlu0 %2536
        %2538 = vrot.lane.b32.xlu0 %v2301, 8
        %v2539 = vpop.permute.xlu0 %2538
        %2540 = vrot.lane.b32.xlu0 %v2302, 8
        %v2541 = vpop.permute.xlu0 %2540
        %2542 = vrot.lane.b32.xlu0 %v2303, 8
        %v2543 = vpop.permute.xlu0 %2542
        %2544 = vrot.lane.b32.xlu0 %v2304, 8
        %v2545 = vpop.permute.xlu0 %2544
        %2546 = vrot.lane.b32.xlu0 %v2305, 8
        %v2547 = vpop.permute.xlu0 %2546
        %2578 = vst.msk [vmem:[%s850 - $0x1] sm:$0xfe] %vm1122, %v2489
        %2579 = vst.msk [vmem:[%s850 + $0x7] sm:$0xff] %vm752, %v2491
        %2580 = vst.msk [vmem:[%s850 + $0xf] sm:$0xfe] %vm1122, %v2493
        %2581 = vst.msk [vmem:[%s850 + $0x17] sm:$0xff] %vm752, %v2495
        %2582 = vst.msk [vmem:[%s850 + $0x1f] sm:$0xfe] %vm1122, %v2497
        %2583 = vst.msk [vmem:[%s850 + $0x27] sm:$0xff] %vm752, %v2499
        %2584 = vst.msk [vmem:[%s850 + $0x2f] sm:$0xfe] %vm1122, %v2501
        %2585 = vst.msk [vmem:[%s850 + $0x37] sm:$0xff] %vm752, %v2503
        %2586 = vst.msk [vmem:[%s850 + $0x3f] sm:$0xfe] %vm1122, %v2505
        %2587 = vst.msk [vmem:[%s850 + $0x47] sm:$0xff] %vm752, %v2507
        %2588 = vst.msk [vmem:[%s850 + $0x4f] sm:$0xfe] %vm1122, %v2509
        %2589 = vst.msk [vmem:[%s850 + $0x57] sm:$0xff] %vm752, %v2511
        %2590 = vst.msk [vmem:[%s850 + $0x5f] sm:$0xfe] %vm1122, %v2513
        %2591 = vst.msk [vmem:[%s850 + $0x67] sm:$0xff] %vm752, %v2515
        %2592 = vst.msk [vmem:[%s850 + $0x6f] sm:$0xfe] %vm1122, %v2517
        %2593 = vst.msk [vmem:[%s850 + $0x77] sm:$0xff] %vm752, %v2519
        %2594 = vst.msk [vmem:[%s850 + $0x7f] sm:$0xfe] %vm1122, %v2521
        %2595 = vst.msk [vmem:[%s850 + $0x87] sm:$0xff] %vm752, %v2523
        %2596 = vst.msk [vmem:[%s850 + $0x8f] sm:$0xfe] %vm1122, %v2525
        %2597 = vst.msk [vmem:[%s850 + $0x97] sm:$0xff] %vm752, %v2527
        %2598 = vst.msk [vmem:[%s850 + $0x9f] sm:$0xfe] %vm1122, %v2529
        %2599 = vst.msk [vmem:[%s850 + $0xa7] sm:$0xff] %vm752, %v2531
        %2600 = vst.msk [vmem:[%s850 + $0xaf] sm:$0xfe] %vm1122, %v2533
        %2601 = vst.msk [vmem:[%s850 + $0xb7] sm:$0xff] %vm752, %v2535
        %2602 = vst.msk [vmem:[%s850 + $0xbf] sm:$0xfe] %vm1122, %v2537
        %2603 = vst.msk [vmem:[%s850 + $0xc7] sm:$0xff] %vm752, %v2539
        %2604 = vst.msk [vmem:[%s850 + $0xcf] sm:$0xfe] %vm1122, %v2541
        %2605 = vst.msk [vmem:[%s850 + $0xd7] sm:$0xff] %vm752, %v2543
        %2606 = vst.msk [vmem:[%s850 + $0xdf] sm:$0xfe] %vm1122, %v2545
        %2607 = vst.msk [vmem:[%s850 + $0xe7] sm:$0xff] %vm752, %v2547
        %2610 = vrot.lane.b32.xlu0 %v2276, 16
        %v2611 = vpop.permute.xlu0 %2610
        %2612 = vrot.lane.b32.xlu0 %v2277, 16
        %v2613 = vpop.permute.xlu0 %2612
        %2614 = vrot.lane.b32.xlu0 %v2278, 16
        %v2615 = vpop.permute.xlu0 %2614
        %2616 = vrot.lane.b32.xlu0 %v2279, 16
        %v2617 = vpop.permute.xlu0 %2616
        %2618 = vrot.lane.b32.xlu0 %v2280, 16
        %v2619 = vpop.permute.xlu0 %2618
        %2620 = vrot.lane.b32.xlu0 %v2281, 16
        %v2621 = vpop.permute.xlu0 %2620
        %2622 = vrot.lane.b32.xlu0 %v2282, 16
        %v2623 = vpop.permute.xlu0 %2622
        %2624 = vrot.lane.b32.xlu0 %v2283, 16
        %v2625 = vpop.permute.xlu0 %2624
        %2626 = vrot.lane.b32.xlu0 %v2284, 16
        %v2627 = vpop.permute.xlu0 %2626
        %2628 = vrot.lane.b32.xlu0 %v2285, 16
        %v2629 = vpop.permute.xlu0 %2628
        %2630 = vrot.lane.b32.xlu0 %v2286, 16
        %v2631 = vpop.permute.xlu0 %2630
        %2632 = vrot.lane.b32.xlu0 %v2287, 16
        %v2633 = vpop.permute.xlu0 %2632
        %2634 = vrot.lane.b32.xlu0 %v2288, 16
        %v2635 = vpop.permute.xlu0 %2634
        %2636 = vrot.lane.b32.xlu0 %v2289, 16
        %v2637 = vpop.permute.xlu0 %2636
        %2638 = vrot.lane.b32.xlu0 %v2290, 16
        %v2639 = vpop.permute.xlu0 %2638
        %2640 = vrot.lane.b32.xlu0 %v2291, 16
        %v2641 = vpop.permute.xlu0 %2640
        %2642 = vrot.lane.b32.xlu0 %v2292, 16
        %v2643 = vpop.permute.xlu0 %2642
        %2644 = vrot.lane.b32.xlu0 %v2293, 16
        %v2645 = vpop.permute.xlu0 %2644
        %2646 = vrot.lane.b32.xlu0 %v2294, 16
        %v2647 = vpop.permute.xlu0 %2646
        %2648 = vrot.lane.b32.xlu0 %v2295, 16
        %v2649 = vpop.permute.xlu0 %2648
        %2650 = vrot.lane.b32.xlu0 %v2296, 16
        %v2651 = vpop.permute.xlu0 %2650
        %2652 = vrot.lane.b32.xlu0 %v2297, 16
        %v2653 = vpop.permute.xlu0 %2652
        %2654 = vrot.lane.b32.xlu0 %v2298, 16
        %v2655 = vpop.permute.xlu0 %2654
        %2656 = vrot.lane.b32.xlu0 %v2299, 16
        %v2657 = vpop.permute.xlu0 %2656
        %2658 = vrot.lane.b32.xlu0 %v2300, 16
        %v2659 = vpop.permute.xlu0 %2658
        %2660 = vrot.lane.b32.xlu0 %v2301, 16
        %v2661 = vpop.permute.xlu0 %2660
        %2662 = vrot.lane.b32.xlu0 %v2302, 16
        %v2663 = vpop.permute.xlu0 %2662
        %2664 = vrot.lane.b32.xlu0 %v2303, 16
        %v2665 = vpop.permute.xlu0 %2664
        %2666 = vrot.lane.b32.xlu0 %v2304, 16
        %v2667 = vpop.permute.xlu0 %2666
        %2668 = vrot.lane.b32.xlu0 %v2305, 16
        %v2669 = vpop.permute.xlu0 %2668
        %2670 = vrot.lane.b32.xlu0 %v2306, 16
        %v2671 = vpop.permute.xlu0 %2670
        %2672 = vrot.lane.b32.xlu0 %v2307, 16
        %v2673 = vpop.permute.xlu0 %2672
        %2706 = vst.msk [vmem:[#allocation2 + $0x1] sm:$0xff] %vm1251, %v2611
        %2707 = vst.msk [vmem:[#allocation2 + $0x9] sm:$0x7f] %vm1253, %v2613
        %2708 = vst.msk [vmem:[#allocation2 + $0x11] sm:$0xff] %vm1251, %v2615
        %2709 = vst.msk [vmem:[#allocation2 + $0x19] sm:$0x7f] %vm1253, %v2617
        %2710 = vst.msk [vmem:[#allocation2 + $0x21] sm:$0xff] %vm1251, %v2619
        %2711 = vst.msk [vmem:[#allocation2 + $0x29] sm:$0x7f] %vm1253, %v2621
        %2712 = vst.msk [vmem:[#allocation2 + $0x31] sm:$0xff] %vm1251, %v2623
        %2713 = vst.msk [vmem:[#allocation2 + $0x39] sm:$0x7f] %vm1253, %v2625
        %2714 = vst.msk [vmem:[#allocation2 + $0x41] sm:$0xff] %vm1251, %v2627
        %2715 = vst.msk [vmem:[#allocation2 + $0x49] sm:$0x7f] %vm1253, %v2629
        %2716 = vst.msk [vmem:[#allocation2 + $0x51] sm:$0xff] %vm1251, %v2631
        %2717 = vst.msk [vmem:[#allocation2 + $0x59] sm:$0x7f] %vm1253, %v2633
        %2718 = vst.msk [vmem:[#allocation2 + $0x61] sm:$0xff] %vm1251, %v2635
        %2719 = vst.msk [vmem:[#allocation2 + $0x69] sm:$0x7f] %vm1253, %v2637
        %2720 = vst.msk [vmem:[#allocation2 + $0x71] sm:$0xff] %vm1251, %v2639
        %2721 = vst.msk [vmem:[#allocation2 + $0x79] sm:$0x7f] %vm1253, %v2641
        %2722 = vst.msk [vmem:[#allocation2 + $0x81] sm:$0xff] %vm1251, %v2643
        %2723 = vst.msk [vmem:[#allocation2 + $0x89] sm:$0x7f] %vm1253, %v2645
        %2724 = vst.msk [vmem:[#allocation2 + $0x91] sm:$0xff] %vm1251, %v2647
        %2725 = vst.msk [vmem:[#allocation2 + $0x99] sm:$0x7f] %vm1253, %v2649
        %2726 = vst.msk [vmem:[#allocation2 + $0xa1] sm:$0xff] %vm1251, %v2651
        %2727 = vst.msk [vmem:[#allocation2 + $0xa9] sm:$0x7f] %vm1253, %v2653
        %2728 = vst.msk [vmem:[#allocation2 + $0xb1] sm:$0xff] %vm1251, %v2655
        %2729 = vst.msk [vmem:[#allocation2 + $0xb9] sm:$0x7f] %vm1253, %v2657
        %2730 = vst.msk [vmem:[#allocation2 + $0xc1] sm:$0xff] %vm1251, %v2659
        %2731 = vst.msk [vmem:[#allocation2 + $0xc9] sm:$0x7f] %vm1253, %v2661
        %2732 = vst.msk [vmem:[#allocation2 + $0xd1] sm:$0xff] %vm1251, %v2663
        %2733 = vst.msk [vmem:[#allocation2 + $0xd9] sm:$0x7f] %vm1253, %v2665
        %2734 = vst.msk [vmem:[#allocation2 + $0xe1] sm:$0xff] %vm1251, %v2667
        %2735 = vst.msk [vmem:[#allocation2 + $0xe9] sm:$0x7f] %vm1253, %v2669
        %2736 = vst.msk [vmem:[#allocation2 + $0xf1] sm:$0xff] %vm1251, %v2671
        %2737 = vst.msk [vmem:[#allocation2 + $0xf9] sm:$0x7f] %vm1253, %v2673
        %2738 = vrot.lane.b32.xlu0 %v2276, 24
        %v2739 = vpop.permute.xlu0 %2738
        %2740 = vrot.lane.b32.xlu0 %v2277, 24
        %v2741 = vpop.permute.xlu0 %2740
        %2742 = vrot.lane.b32.xlu0 %v2278, 24
        %v2743 = vpop.permute.xlu0 %2742
        %2744 = vrot.lane.b32.xlu0 %v2279, 24
        %v2745 = vpop.permute.xlu0 %2744
        %2746 = vrot.lane.b32.xlu0 %v2280, 24
        %v2747 = vpop.permute.xlu0 %2746
        %2748 = vrot.lane.b32.xlu0 %v2281, 24
        %v2749 = vpop.permute.xlu0 %2748
        %2750 = vrot.lane.b32.xlu0 %v2282, 24
        %v2751 = vpop.permute.xlu0 %2750
        %2752 = vrot.lane.b32.xlu0 %v2283, 24
        %v2753 = vpop.permute.xlu0 %2752
        %2754 = vrot.lane.b32.xlu0 %v2284, 24
        %v2755 = vpop.permute.xlu0 %2754
        %2756 = vrot.lane.b32.xlu0 %v2285, 24
        %v2757 = vpop.permute.xlu0 %2756
        %2758 = vrot.lane.b32.xlu0 %v2286, 24
        %v2759 = vpop.permute.xlu0 %2758
        %2760 = vrot.lane.b32.xlu0 %v2287, 24
        %v2761 = vpop.permute.xlu0 %2760
        %2762 = vrot.lane.b32.xlu0 %v2288, 24
        %v2763 = vpop.permute.xlu0 %2762
        %2764 = vrot.lane.b32.xlu0 %v2289, 24
        %v2765 = vpop.permute.xlu0 %2764
        %2766 = vrot.lane.b32.xlu0 %v2290, 24
        %v2767 = vpop.permute.xlu0 %2766
        %2768 = vrot.lane.b32.xlu0 %v2291, 24
        %v2769 = vpop.permute.xlu0 %2768
        %2770 = vrot.lane.b32.xlu0 %v2292, 24
        %v2771 = vpop.permute.xlu0 %2770
        %2772 = vrot.lane.b32.xlu0 %v2293, 24
        %v2773 = vpop.permute.xlu0 %2772
        %2774 = vrot.lane.b32.xlu0 %v2294, 24
        %v2775 = vpop.permute.xlu0 %2774
        %2776 = vrot.lane.b32.xlu0 %v2295, 24
        %v2777 = vpop.permute.xlu0 %2776
        %2778 = vrot.lane.b32.xlu0 %v2296, 24
        %v2779 = vpop.permute.xlu0 %2778
        %2780 = vrot.lane.b32.xlu0 %v2297, 24
        %v2781 = vpop.permute.xlu0 %2780
        %2782 = vrot.lane.b32.xlu0 %v2298, 24
        %v2783 = vpop.permute.xlu0 %2782
        %2784 = vrot.lane.b32.xlu0 %v2299, 24
        %v2785 = vpop.permute.xlu0 %2784
        %2786 = vrot.lane.b32.xlu0 %v2300, 24
        %v2787 = vpop.permute.xlu0 %2786
        %2788 = vrot.lane.b32.xlu0 %v2301, 24
        %v2789 = vpop.permute.xlu0 %2788
        %2790 = vrot.lane.b32.xlu0 %v2302, 24
        %v2791 = vpop.permute.xlu0 %2790
        %2792 = vrot.lane.b32.xlu0 %v2303, 24
        %v2793 = vpop.permute.xlu0 %2792
        %2794 = vrot.lane.b32.xlu0 %v2304, 24
        %v2795 = vpop.permute.xlu0 %2794
        %2796 = vrot.lane.b32.xlu0 %v2305, 24
        %v2797 = vpop.permute.xlu0 %2796
        %2798 = vrot.lane.b32.xlu0 %v2306, 24
        %v2799 = vpop.permute.xlu0 %2798
        %2800 = vrot.lane.b32.xlu0 %v2307, 24
        %v2801 = vpop.permute.xlu0 %2800
        %2834 = vst.msk [vmem:[#allocation2] sm:$0xff] %vm1381, %v2739
        %2835 = vst.msk [vmem:[#allocation2 + $0x8] sm:$0xff] %vm1381, %v2741
        %2836 = vst.msk [vmem:[#allocation2 + $0x10] sm:$0xff] %vm1381, %v2743
        %2837 = vst.msk [vmem:[#allocation2 + $0x18] sm:$0xff] %vm1381, %v2745
        %2838 = vst.msk [vmem:[#allocation2 + $0x20] sm:$0xff] %vm1381, %v2747
        %2839 = vst.msk [vmem:[#allocation2 + $0x28] sm:$0xff] %vm1381, %v2749
        %2840 = vst.msk [vmem:[#allocation2 + $0x30] sm:$0xff] %vm1381, %v2751
        %2841 = vst.msk [vmem:[#allocation2 + $0x38] sm:$0xff] %vm1381, %v2753
        %2842 = vst.msk [vmem:[#allocation2 + $0x40] sm:$0xff] %vm1381, %v2755
        %2843 = vst.msk [vmem:[#allocation2 + $0x48] sm:$0xff] %vm1381, %v2757
        %2844 = vst.msk [vmem:[#allocation2 + $0x50] sm:$0xff] %vm1381, %v2759
        %2845 = vst.msk [vmem:[#allocation2 + $0x58] sm:$0xff] %vm1381, %v2761
        %2846 = vst.msk [vmem:[#allocation2 + $0x60] sm:$0xff] %vm1381, %v2763
        %2847 = vst.msk [vmem:[#allocation2 + $0x68] sm:$0xff] %vm1381, %v2765
        %2848 = vst.msk [vmem:[#allocation2 + $0x70] sm:$0xff] %vm1381, %v2767
        %2849 = vst.msk [vmem:[#allocation2 + $0x78] sm:$0xff] %vm1381, %v2769
        %2850 = vst.msk [vmem:[#allocation2 + $0x80] sm:$0xff] %vm1381, %v2771
        %2851 = vst.msk [vmem:[#allocation2 + $0x88] sm:$0xff] %vm1381, %v2773
        %2852 = vst.msk [vmem:[#allocation2 + $0x90] sm:$0xff] %vm1381, %v2775
        %2853 = vst.msk [vmem:[#allocation2 + $0x98] sm:$0xff] %vm1381, %v2777
        %2854 = vst.msk [vmem:[#allocation2 + $0xa0] sm:$0xff] %vm1381, %v2779
        %2855 = vst.msk [vmem:[#allocation2 + $0xa8] sm:$0xff] %vm1381, %v2781
        %2856 = vst.msk [vmem:[#allocation2 + $0xb0] sm:$0xff] %vm1381, %v2783
        %2857 = vst.msk [vmem:[#allocation2 + $0xb8] sm:$0xff] %vm1381, %v2785
        %2858 = vst.msk [vmem:[#allocation2 + $0xc0] sm:$0xff] %vm1381, %v2787
        %2859 = vst.msk [vmem:[#allocation2 + $0xc8] sm:$0xff] %vm1381, %v2789
        %2860 = vst.msk [vmem:[#allocation2 + $0xd0] sm:$0xff] %vm1381, %v2791
        %2861 = vst.msk [vmem:[#allocation2 + $0xd8] sm:$0xff] %vm1381, %v2793
        %2862 = vst.msk [vmem:[#allocation2 + $0xe0] sm:$0xff] %vm1381, %v2795
        %2863 = vst.msk [vmem:[#allocation2 + $0xe8] sm:$0xff] %vm1381, %v2797
        %2864 = vst.msk [vmem:[#allocation2 + $0xf0] sm:$0xff] %vm1381, %v2799
        %2865 = vst.msk [vmem:[#allocation2 + $0xf8] sm:$0xff] %vm1381, %v2801
        %2866 = vrot.lane.b32.xlu0 %v2276, 32
        %v2867 = vpop.permute.xlu0 %2866
        %2868 = vrot.lane.b32.xlu0 %v2277, 32
        %v2869 = vpop.permute.xlu0 %2868
        %2870 = vrot.lane.b32.xlu0 %v2278, 32
        %v2871 = vpop.permute.xlu0 %2870
        %2872 = vrot.lane.b32.xlu0 %v2279, 32
        %v2873 = vpop.permute.xlu0 %2872
        %2874 = vrot.lane.b32.xlu0 %v2280, 32
        %v2875 = vpop.permute.xlu0 %2874
        %2876 = vrot.lane.b32.xlu0 %v2281, 32
        %v2877 = vpop.permute.xlu0 %2876
        %2878 = vrot.lane.b32.xlu0 %v2282, 32
        %v2879 = vpop.permute.xlu0 %2878
        %2880 = vrot.lane.b32.xlu0 %v2283, 32
        %v2881 = vpop.permute.xlu0 %2880
        %2882 = vrot.lane.b32.xlu0 %v2284, 32
        %v2883 = vpop.permute.xlu0 %2882
        %2884 = vrot.lane.b32.xlu0 %v2285, 32
        %v2885 = vpop.permute.xlu0 %2884
        %2886 = vrot.lane.b32.xlu0 %v2286, 32
        %v2887 = vpop.permute.xlu0 %2886
        %2888 = vrot.lane.b32.xlu0 %v2287, 32
        %v2889 = vpop.permute.xlu0 %2888
        %2890 = vrot.lane.b32.xlu0 %v2288, 32
        %v2891 = vpop.permute.xlu0 %2890
        %2892 = vrot.lane.b32.xlu0 %v2289, 32
        %v2893 = vpop.permute.xlu0 %2892
        %2894 = vrot.lane.b32.xlu0 %v2290, 32
        %v2895 = vpop.permute.xlu0 %2894
        %2896 = vrot.lane.b32.xlu0 %v2291, 32
        %v2897 = vpop.permute.xlu0 %2896
        %2898 = vrot.lane.b32.xlu0 %v2292, 32
        %v2899 = vpop.permute.xlu0 %2898
        %2900 = vrot.lane.b32.xlu0 %v2293, 32
        %v2901 = vpop.permute.xlu0 %2900
        %2902 = vrot.lane.b32.xlu0 %v2294, 32
        %v2903 = vpop.permute.xlu0 %2902
        %2904 = vrot.lane.b32.xlu0 %v2295, 32
        %v2905 = vpop.permute.xlu0 %2904
        %2906 = vrot.lane.b32.xlu0 %v2296, 32
        %v2907 = vpop.permute.xlu0 %2906
        %2908 = vrot.lane.b32.xlu0 %v2297, 32
        %v2909 = vpop.permute.xlu0 %2908
        %2910 = vrot.lane.b32.xlu0 %v2298, 32
        %v2911 = vpop.permute.xlu0 %2910
        %2912 = vrot.lane.b32.xlu0 %v2299, 32
        %v2913 = vpop.permute.xlu0 %2912
        %2914 = vrot.lane.b32.xlu0 %v2300, 32
        %v2915 = vpop.permute.xlu0 %2914
        %2916 = vrot.lane.b32.xlu0 %v2301, 32
        %v2917 = vpop.permute.xlu0 %2916
        %2918 = vrot.lane.b32.xlu0 %v2302, 32
        %v2919 = vpop.permute.xlu0 %2918
        %2920 = vrot.lane.b32.xlu0 %v2303, 32
        %v2921 = vpop.permute.xlu0 %2920
        %2922 = vrot.lane.b32.xlu0 %v2304, 32
        %v2923 = vpop.permute.xlu0 %2922
        %2924 = vrot.lane.b32.xlu0 %v2305, 32
        %v2925 = vpop.permute.xlu0 %2924
        %2926 = vrot.lane.b32.xlu0 %v2306, 32
        %v2927 = vpop.permute.xlu0 %2926
        %2928 = vrot.lane.b32.xlu0 %v2307, 32
        %v2929 = vpop.permute.xlu0 %2928
        %2962 = vst.msk [vmem:[#allocation2 - $0x1] sm:$0xfe] %vm1510, %v2867
        %2963 = vst.msk [vmem:[#allocation2 + $0x7] sm:$0xff] %vm1512, %v2869
        %2964 = vst.msk [vmem:[#allocation2 + $0xf] sm:$0xfe] %vm1510, %v2871
        %2965 = vst.msk [vmem:[#allocation2 + $0x17] sm:$0xff] %vm1512, %v2873
        %2966 = vst.msk [vmem:[#allocation2 + $0x1f] sm:$0xfe] %vm1510, %v2875
        %2967 = vst.msk [vmem:[#allocation2 + $0x27] sm:$0xff] %vm1512, %v2877
        %2968 = vst.msk [vmem:[#allocation2 + $0x2f] sm:$0xfe] %vm1510, %v2879
        %2969 = vst.msk [vmem:[#allocation2 + $0x37] sm:$0xff] %vm1512, %v2881
        %2970 = vst.msk [vmem:[#allocation2 + $0x3f] sm:$0xfe] %vm1510, %v2883
        %2971 = vst.msk [vmem:[#allocation2 + $0x47] sm:$0xff] %vm1512, %v2885
        %2972 = vst.msk [vmem:[#allocation2 + $0x4f] sm:$0xfe] %vm1510, %v2887
        %2973 = vst.msk [vmem:[#allocation2 + $0x57] sm:$0xff] %vm1512, %v2889
        %2974 = vst.msk [vmem:[#allocation2 + $0x5f] sm:$0xfe] %vm1510, %v2891
        %2975 = vst.msk [vmem:[#allocation2 + $0x67] sm:$0xff] %vm1512, %v2893
        %2976 = vst.msk [vmem:[#allocation2 + $0x6f] sm:$0xfe] %vm1510, %v2895
        %2977 = vst.msk [vmem:[#allocation2 + $0x77] sm:$0xff] %vm1512, %v2897
        %2978 = vst.msk [vmem:[#allocation2 + $0x7f] sm:$0xfe] %vm1510, %v2899
        %2979 = vst.msk [vmem:[#allocation2 + $0x87] sm:$0xff] %vm1512, %v2901
        %2980 = vst.msk [vmem:[#allocation2 + $0x8f] sm:$0xfe] %vm1510, %v2903
        %2981 = vst.msk [vmem:[#allocation2 + $0x97] sm:$0xff] %vm1512, %v2905
        %2982 = vst.msk [vmem:[#allocation2 + $0x9f] sm:$0xfe] %vm1510, %v2907
        %2983 = vst.msk [vmem:[#allocation2 + $0xa7] sm:$0xff] %vm1512, %v2909
        %2984 = vst.msk [vmem:[#allocation2 + $0xaf] sm:$0xfe] %vm1510, %v2911
        %2985 = vst.msk [vmem:[#allocation2 + $0xb7] sm:$0xff] %vm1512, %v2913
        %2986 = vst.msk [vmem:[#allocation2 + $0xbf] sm:$0xfe] %vm1510, %v2915
        %2987 = vst.msk [vmem:[#allocation2 + $0xc7] sm:$0xff] %vm1512, %v2917
        %2988 = vst.msk [vmem:[#allocation2 + $0xcf] sm:$0xfe] %vm1510, %v2919
        %2989 = vst.msk [vmem:[#allocation2 + $0xd7] sm:$0xff] %vm1512, %v2921
        %2990 = vst.msk [vmem:[#allocation2 + $0xdf] sm:$0xfe] %vm1510, %v2923
        %2991 = vst.msk [vmem:[#allocation2 + $0xe7] sm:$0xff] %vm1512, %v2925
        %2992 = vst.msk [vmem:[#allocation2 + $0xef] sm:$0xfe] %vm1510, %v2927
        %2993 = vst.msk [vmem:[#allocation2 + $0xf7] sm:$0xff] %vm1512, %v2929
        %2994 = vrot.lane.b32.xlu0 %v2278, 40
        %v2995 = vpop.permute.xlu0 %2994
        %2996 = vrot.lane.b32.xlu0 %v2279, 40
        %v2997 = vpop.permute.xlu0 %2996
        %2998 = vrot.lane.b32.xlu0 %v2280, 40
        %v2999 = vpop.permute.xlu0 %2998
        %3000 = vrot.lane.b32.xlu0 %v2281, 40
        %v3001 = vpop.permute.xlu0 %3000
        %3002 = vrot.lane.b32.xlu0 %v2282, 40
        %v3003 = vpop.permute.xlu0 %3002
        %3004 = vrot.lane.b32.xlu0 %v2283, 40
        %v3005 = vpop.permute.xlu0 %3004
        %3006 = vrot.lane.b32.xlu0 %v2284, 40
        %v3007 = vpop.permute.xlu0 %3006
        %3008 = vrot.lane.b32.xlu0 %v2285, 40
        %v3009 = vpop.permute.xlu0 %3008
        %3010 = vrot.lane.b32.xlu0 %v2286, 40
        %v3011 = vpop.permute.xlu0 %3010
        %3012 = vrot.lane.b32.xlu0 %v2287, 40
        %v3013 = vpop.permute.xlu0 %3012
        %3014 = vrot.lane.b32.xlu0 %v2288, 40
        %v3015 = vpop.permute.xlu0 %3014
        %3016 = vrot.lane.b32.xlu0 %v2289, 40
        %v3017 = vpop.permute.xlu0 %3016
        %3018 = vrot.lane.b32.xlu0 %v2290, 40
        %v3019 = vpop.permute.xlu0 %3018
        %3020 = vrot.lane.b32.xlu0 %v2291, 40
        %v3021 = vpop.permute.xlu0 %3020
        %3022 = vrot.lane.b32.xlu0 %v2292, 40
        %v3023 = vpop.permute.xlu0 %3022
        %3024 = vrot.lane.b32.xlu0 %v2293, 40
        %v3025 = vpop.permute.xlu0 %3024
        %3026 = vrot.lane.b32.xlu0 %v2294, 40
        %v3027 = vpop.permute.xlu0 %3026
        %3028 = vrot.lane.b32.xlu0 %v2295, 40
        %v3029 = vpop.permute.xlu0 %3028
        %3030 = vrot.lane.b32.xlu0 %v2296, 40
        %v3031 = vpop.permute.xlu0 %3030
        %3032 = vrot.lane.b32.xlu0 %v2297, 40
        %v3033 = vpop.permute.xlu0 %3032
        %3034 = vrot.lane.b32.xlu0 %v2298, 40
        %v3035 = vpop.permute.xlu0 %3034
        %3036 = vrot.lane.b32.xlu0 %v2299, 40
        %v3037 = vpop.permute.xlu0 %3036
        %3038 = vrot.lane.b32.xlu0 %v2300, 40
        %v3039 = vpop.permute.xlu0 %3038
        %3040 = vrot.lane.b32.xlu0 %v2301, 40
        %v3041 = vpop.permute.xlu0 %3040
        %3042 = vrot.lane.b32.xlu0 %v2302, 40
        %v3043 = vpop.permute.xlu0 %3042
        %3044 = vrot.lane.b32.xlu0 %v2303, 40
        %v3045 = vpop.permute.xlu0 %3044
        %3046 = vrot.lane.b32.xlu0 %v2304, 40
        %v3047 = vpop.permute.xlu0 %3046
        %3048 = vrot.lane.b32.xlu0 %v2305, 40
        %v3049 = vpop.permute.xlu0 %3048
        %3050 = vrot.lane.b32.xlu0 %v2306, 40
        %v3051 = vpop.permute.xlu0 %3050
        %3052 = vrot.lane.b32.xlu0 %v2307, 40
        %v3053 = vpop.permute.xlu0 %3052
        %3084 = vst.msk [vmem:[#allocation2 + $0x1] sm:$0xff] %vm807, %v2995
        %3085 = vst.msk [vmem:[#allocation2 + $0x9] sm:$0x7f] %vm1635, %v2997
        %3086 = vst.msk [vmem:[#allocation2 + $0x11] sm:$0xff] %vm807, %v2999
        %3087 = vst.msk [vmem:[#allocation2 + $0x19] sm:$0x7f] %vm1635, %v3001
        %3088 = vst.msk [vmem:[#allocation2 + $0x21] sm:$0xff] %vm807, %v3003
        %3089 = vst.msk [vmem:[#allocation2 + $0x29] sm:$0x7f] %vm1635, %v3005
        %3090 = vst.msk [vmem:[#allocation2 + $0x31] sm:$0xff] %vm807, %v3007
        %3091 = vst.msk [vmem:[#allocation2 + $0x39] sm:$0x7f] %vm1635, %v3009
        %3092 = vst.msk [vmem:[#allocation2 + $0x41] sm:$0xff] %vm807, %v3011
        %3093 = vst.msk [vmem:[#allocation2 + $0x49] sm:$0x7f] %vm1635, %v3013
        %3094 = vst.msk [vmem:[#allocation2 + $0x51] sm:$0xff] %vm807, %v3015
        %3095 = vst.msk [vmem:[#allocation2 + $0x59] sm:$0x7f] %vm1635, %v3017
        %3096 = vst.msk [vmem:[#allocation2 + $0x61] sm:$0xff] %vm807, %v3019
        %3097 = vst.msk [vmem:[#allocation2 + $0x69] sm:$0x7f] %vm1635, %v3021
        %3098 = vst.msk [vmem:[#allocation2 + $0x71] sm:$0xff] %vm807, %v3023
        %3099 = vst.msk [vmem:[#allocation2 + $0x79] sm:$0x7f] %vm1635, %v3025
        %3100 = vst.msk [vmem:[#allocation2 + $0x81] sm:$0xff] %vm807, %v3027
        %3101 = vst.msk [vmem:[#allocation2 + $0x89] sm:$0x7f] %vm1635, %v3029
        %3102 = vst.msk [vmem:[#allocation2 + $0x91] sm:$0xff] %vm807, %v3031
        %3103 = vst.msk [vmem:[#allocation2 + $0x99] sm:$0x7f] %vm1635, %v3033
        %3104 = vst.msk [vmem:[#allocation2 + $0xa1] sm:$0xff] %vm807, %v3035
        %3105 = vst.msk [vmem:[#allocation2 + $0xa9] sm:$0x7f] %vm1635, %v3037
        %3106 = vst.msk [vmem:[#allocation2 + $0xb1] sm:$0xff] %vm807, %v3039
        %3107 = vst.msk [vmem:[#allocation2 + $0xb9] sm:$0x7f] %vm1635, %v3041
        %3108 = vst.msk [vmem:[#allocation2 + $0xc1] sm:$0xff] %vm807, %v3043
        %3109 = vst.msk [vmem:[#allocation2 + $0xc9] sm:$0x7f] %vm1635, %v3045
        %3110 = vst.msk [vmem:[#allocation2 + $0xd1] sm:$0xff] %vm807, %v3047
        %3111 = vst.msk [vmem:[#allocation2 + $0xd9] sm:$0x7f] %vm1635, %v3049
        %3112 = vst.msk [vmem:[#allocation2 + $0xe1] sm:$0xff] %vm807, %v3051
        %3113 = vst.msk [vmem:[#allocation2 + $0xe9] sm:$0x7f] %vm1635, %v3053
        %3114 = vrot.lane.b32.xlu0 %v2278, 48
        %v3115 = vpop.permute.xlu0 %3114
        %3116 = vrot.lane.b32.xlu0 %v2279, 48
        %v3117 = vpop.permute.xlu0 %3116
        %3118 = vrot.lane.b32.xlu0 %v2280, 48
        %v3119 = vpop.permute.xlu0 %3118
        %3120 = vrot.lane.b32.xlu0 %v2281, 48
        %v3121 = vpop.permute.xlu0 %3120
        %3122 = vrot.lane.b32.xlu0 %v2282, 48
        %v3123 = vpop.permute.xlu0 %3122
        %3124 = vrot.lane.b32.xlu0 %v2283, 48
        %v3125 = vpop.permute.xlu0 %3124
        %3126 = vrot.lane.b32.xlu0 %v2284, 48
        %v3127 = vpop.permute.xlu0 %3126
        %3128 = vrot.lane.b32.xlu0 %v2285, 48
        %v3129 = vpop.permute.xlu0 %3128
        %3130 = vrot.lane.b32.xlu0 %v2286, 48
        %v3131 = vpop.permute.xlu0 %3130
        %3132 = vrot.lane.b32.xlu0 %v2287, 48
        %v3133 = vpop.permute.xlu0 %3132
        %3134 = vrot.lane.b32.xlu0 %v2288, 48
        %v3135 = vpop.permute.xlu0 %3134
        %3136 = vrot.lane.b32.xlu0 %v2289, 48
        %v3137 = vpop.permute.xlu0 %3136
        %3138 = vrot.lane.b32.xlu0 %v2290, 48
        %v3139 = vpop.permute.xlu0 %3138
        %3140 = vrot.lane.b32.xlu0 %v2291, 48
        %v3141 = vpop.permute.xlu0 %3140
        %3142 = vrot.lane.b32.xlu0 %v2292, 48
        %v3143 = vpop.permute.xlu0 %3142
        %3144 = vrot.lane.b32.xlu0 %v2293, 48
        %v3145 = vpop.permute.xlu0 %3144
        %3146 = vrot.lane.b32.xlu0 %v2294, 48
        %v3147 = vpop.permute.xlu0 %3146
        %3148 = vrot.lane.b32.xlu0 %v2295, 48
        %v3149 = vpop.permute.xlu0 %3148
        %3150 = vrot.lane.b32.xlu0 %v2296, 48
        %v3151 = vpop.permute.xlu0 %3150
        %3152 = vrot.lane.b32.xlu0 %v2297, 48
        %v3153 = vpop.permute.xlu0 %3152
        %3154 = vrot.lane.b32.xlu0 %v2298, 48
        %v3155 = vpop.permute.xlu0 %3154
        %3156 = vrot.lane.b32.xlu0 %v2299, 48
        %v3157 = vpop.permute.xlu0 %3156
        %3158 = vrot.lane.b32.xlu0 %v2300, 48
        %v3159 = vpop.permute.xlu0 %3158
        %3160 = vrot.lane.b32.xlu0 %v2301, 48
        %v3161 = vpop.permute.xlu0 %3160
        %3162 = vrot.lane.b32.xlu0 %v2302, 48
        %v3163 = vpop.permute.xlu0 %3162
        %3164 = vrot.lane.b32.xlu0 %v2303, 48
        %v3165 = vpop.permute.xlu0 %3164
        %3166 = vrot.lane.b32.xlu0 %v2304, 48
        %v3167 = vpop.permute.xlu0 %3166
        %3168 = vrot.lane.b32.xlu0 %v2305, 48
        %v3169 = vpop.permute.xlu0 %3168
        %3170 = vrot.lane.b32.xlu0 %v2306, 48
        %v3171 = vpop.permute.xlu0 %3170
        %3172 = vrot.lane.b32.xlu0 %v2307, 48
        %v3173 = vpop.permute.xlu0 %3172
        %3204 = vst.msk [vmem:[#allocation2] sm:$0xff] %vm827, %v3115
        %3205 = vst.msk [vmem:[#allocation2 + $0x8] sm:$0xff] %vm827, %v3117
        %3206 = vst.msk [vmem:[#allocation2 + $0x10] sm:$0xff] %vm827, %v3119
        %3207 = vst.msk [vmem:[#allocation2 + $0x18] sm:$0xff] %vm827, %v3121
        %3208 = vst.msk [vmem:[#allocation2 + $0x20] sm:$0xff] %vm827, %v3123
        %3209 = vst.msk [vmem:[#allocation2 + $0x28] sm:$0xff] %vm827, %v3125
        %3210 = vst.msk [vmem:[#allocation2 + $0x30] sm:$0xff] %vm827, %v3127
        %3211 = vst.msk [vmem:[#allocation2 + $0x38] sm:$0xff] %vm827, %v3129
        %3212 = vst.msk [vmem:[#allocation2 + $0x40] sm:$0xff] %vm827, %v3131
        %3213 = vst.msk [vmem:[#allocation2 + $0x48] sm:$0xff] %vm827, %v3133
        %3214 = vst.msk [vmem:[#allocation2 + $0x50] sm:$0xff] %vm827, %v3135
        %3215 = vst.msk [vmem:[#allocation2 + $0x58] sm:$0xff] %vm827, %v3137
        %3216 = vst.msk [vmem:[#allocation2 + $0x60] sm:$0xff] %vm827, %v3139
        %3217 = vst.msk [vmem:[#allocation2 + $0x68] sm:$0xff] %vm827, %v3141
        %3218 = vst.msk [vmem:[#allocation2 + $0x70] sm:$0xff] %vm827, %v3143
        %3219 = vst.msk [vmem:[#allocation2 + $0x78] sm:$0xff] %vm827, %v3145
        %3220 = vst.msk [vmem:[#allocation2 + $0x80] sm:$0xff] %vm827, %v3147
        %3221 = vst.msk [vmem:[#allocation2 + $0x88] sm:$0xff] %vm827, %v3149
        %3222 = vst.msk [vmem:[#allocation2 + $0x90] sm:$0xff] %vm827, %v3151
        %3223 = vst.msk [vmem:[#allocation2 + $0x98] sm:$0xff] %vm827, %v3153
        %3224 = vst.msk [vmem:[#allocation2 + $0xa0] sm:$0xff] %vm827, %v3155
        %3225 = vst.msk [vmem:[#allocation2 + $0xa8] sm:$0xff] %vm827, %v3157
        %3226 = vst.msk [vmem:[#allocation2 + $0xb0] sm:$0xff] %vm827, %v3159
        %3227 = vst.msk [vmem:[#allocation2 + $0xb8] sm:$0xff] %vm827, %v3161
        %3228 = vst.msk [vmem:[#allocation2 + $0xc0] sm:$0xff] %vm827, %v3163
        %3229 = vst.msk [vmem:[#allocation2 + $0xc8] sm:$0xff] %vm827, %v3165
        %3230 = vst.msk [vmem:[#allocation2 + $0xd0] sm:$0xff] %vm827, %v3167
        %3231 = vst.msk [vmem:[#allocation2 + $0xd8] sm:$0xff] %vm827, %v3169
        %3232 = vst.msk [vmem:[#allocation2 + $0xe0] sm:$0xff] %vm827, %v3171
        %3233 = vst.msk [vmem:[#allocation2 + $0xe8] sm:$0xff] %vm827, %v3173
        %3234 = vrot.lane.b32.xlu0 %v2278, 56
        %v3235 = vpop.permute.xlu0 %3234
        %3236 = vrot.lane.b32.xlu0 %v2279, 56
        %v3237 = vpop.permute.xlu0 %3236
        %3238 = vrot.lane.b32.xlu0 %v2280, 56
        %v3239 = vpop.permute.xlu0 %3238
        %3240 = vrot.lane.b32.xlu0 %v2281, 56
        %v3241 = vpop.permute.xlu0 %3240
        %3242 = vrot.lane.b32.xlu0 %v2282, 56
        %v3243 = vpop.permute.xlu0 %3242
        %3244 = vrot.lane.b32.xlu0 %v2283, 56
        %v3245 = vpop.permute.xlu0 %3244
        %3246 = vrot.lane.b32.xlu0 %v2284, 56
        %v3247 = vpop.permute.xlu0 %3246
        %3248 = vrot.lane.b32.xlu0 %v2285, 56
        %v3249 = vpop.permute.xlu0 %3248
        %3250 = vrot.lane.b32.xlu0 %v2286, 56
        %v3251 = vpop.permute.xlu0 %3250
        %3252 = vrot.lane.b32.xlu0 %v2287, 56
        %v3253 = vpop.permute.xlu0 %3252
        %3254 = vrot.lane.b32.xlu0 %v2288, 56
        %v3255 = vpop.permute.xlu0 %3254
        %3256 = vrot.lane.b32.xlu0 %v2289, 56
        %v3257 = vpop.permute.xlu0 %3256
        %3258 = vrot.lane.b32.xlu0 %v2290, 56
        %v3259 = vpop.permute.xlu0 %3258
        %3260 = vrot.lane.b32.xlu0 %v2291, 56
        %v3261 = vpop.permute.xlu0 %3260
        %3262 = vrot.lane.b32.xlu0 %v2292, 56
        %v3263 = vpop.permute.xlu0 %3262
        %3264 = vrot.lane.b32.xlu0 %v2293, 56
        %v3265 = vpop.permute.xlu0 %3264
        %3266 = vrot.lane.b32.xlu0 %v2294, 56
        %v3267 = vpop.permute.xlu0 %3266
        %3268 = vrot.lane.b32.xlu0 %v2295, 56
        %v3269 = vpop.permute.xlu0 %3268
        %3270 = vrot.lane.b32.xlu0 %v2296, 56
        %v3271 = vpop.permute.xlu0 %3270
        %3272 = vrot.lane.b32.xlu0 %v2297, 56
        %v3273 = vpop.permute.xlu0 %3272
        %3274 = vrot.lane.b32.xlu0 %v2298, 56
        %v3275 = vpop.permute.xlu0 %3274
        %3276 = vrot.lane.b32.xlu0 %v2299, 56
        %v3277 = vpop.permute.xlu0 %3276
        %3278 = vrot.lane.b32.xlu0 %v2300, 56
        %v3279 = vpop.permute.xlu0 %3278
        %3280 = vrot.lane.b32.xlu0 %v2301, 56
        %v3281 = vpop.permute.xlu0 %3280
        %3282 = vrot.lane.b32.xlu0 %v2302, 56
        %v3283 = vpop.permute.xlu0 %3282
        %3284 = vrot.lane.b32.xlu0 %v2303, 56
        %v3285 = vpop.permute.xlu0 %3284
        %3286 = vrot.lane.b32.xlu0 %v2304, 56
        %v3287 = vpop.permute.xlu0 %3286
        %3288 = vrot.lane.b32.xlu0 %v2305, 56
        %v3289 = vpop.permute.xlu0 %3288
        %3290 = vrot.lane.b32.xlu0 %v2306, 56
        %v3291 = vpop.permute.xlu0 %3290
        %3292 = vrot.lane.b32.xlu0 %v2307, 56
        %v3293 = vpop.permute.xlu0 %3292
        %3324 = vst.msk [vmem:[#allocation2 - $0x1] sm:$0xfe] %vm1875, %v3235
        %3325 = vst.msk [vmem:[#allocation2 + $0x7] sm:$0xff] %vm830, %v3237
        %3326 = vst.msk [vmem:[#allocation2 + $0xf] sm:$0xfe] %vm1875, %v3239
        %3327 = vst.msk [vmem:[#allocation2 + $0x17] sm:$0xff] %vm830, %v3241
        %3328 = vst.msk [vmem:[#allocation2 + $0x1f] sm:$0xfe] %vm1875, %v3243
        %3329 = vst.msk [vmem:[#allocation2 + $0x27] sm:$0xff] %vm830, %v3245
        %3330 = vst.msk [vmem:[#allocation2 + $0x2f] sm:$0xfe] %vm1875, %v3247
        %3331 = vst.msk [vmem:[#allocation2 + $0x37] sm:$0xff] %vm830, %v3249
        %3332 = vst.msk [vmem:[#allocation2 + $0x3f] sm:$0xfe] %vm1875, %v3251
        %3333 = vst.msk [vmem:[#allocation2 + $0x47] sm:$0xff] %vm830, %v3253
        %3334 = vst.msk [vmem:[#allocation2 + $0x4f] sm:$0xfe] %vm1875, %v3255
        %3335 = vst.msk [vmem:[#allocation2 + $0x57] sm:$0xff] %vm830, %v3257
        %3336 = vst.msk [vmem:[#allocation2 + $0x5f] sm:$0xfe] %vm1875, %v3259
        %3337 = vst.msk [vmem:[#allocation2 + $0x67] sm:$0xff] %vm830, %v3261
        %3338 = vst.msk [vmem:[#allocation2 + $0x6f] sm:$0xfe] %vm1875, %v3263
        %3339 = vst.msk [vmem:[#allocation2 + $0x77] sm:$0xff] %vm830, %v3265
        %3340 = vst.msk [vmem:[#allocation2 + $0x7f] sm:$0xfe] %vm1875, %v3267
        %3341 = vst.msk [vmem:[#allocation2 + $0x87] sm:$0xff] %vm830, %v3269
        %3342 = vst.msk [vmem:[#allocation2 + $0x8f] sm:$0xfe] %vm1875, %v3271
        %3343 = vst.msk [vmem:[#allocation2 + $0x97] sm:$0xff] %vm830, %v3273
        %3344 = vst.msk [vmem:[#allocation2 + $0x9f] sm:$0xfe] %vm1875, %v3275
        %3345 = vst.msk [vmem:[#allocation2 + $0xa7] sm:$0xff] %vm830, %v3277
        %3346 = vst.msk [vmem:[#allocation2 + $0xaf] sm:$0xfe] %vm1875, %v3279
        %3347 = vst.msk [vmem:[#allocation2 + $0xb7] sm:$0xff] %vm830, %v3281
        %3348 = vst.msk [vmem:[#allocation2 + $0xbf] sm:$0xfe] %vm1875, %v3283
        %3349 = vst.msk [vmem:[#allocation2 + $0xc7] sm:$0xff] %vm830, %v3285
        %3350 = vst.msk [vmem:[#allocation2 + $0xcf] sm:$0xfe] %vm1875, %v3287
        %3351 = vst.msk [vmem:[#allocation2 + $0xd7] sm:$0xff] %vm830, %v3289
        %3352 = vst.msk [vmem:[#allocation2 + $0xdf] sm:$0xfe] %vm1875, %v3291
        %3353 = vst.msk [vmem:[#allocation2 + $0xe7] sm:$0xff] %vm830, %v3293
        %v3354 = vld [vmem:[#allocation2] sm:$0xff]
        %v3355 = vld [vmem:[#allocation2 + $0x8] sm:$0xff]
        %v3356 = vld [vmem:[#allocation2 + $0x10] sm:$0xff]
        %v3357 = vld [vmem:[#allocation2 + $0x18] sm:$0xff]
        %v3358 = vld [vmem:[#allocation2 + $0x20] sm:$0xff]
        %v3359 = vld [vmem:[#allocation2 + $0x28] sm:$0xff]
        %v3360 = vld [vmem:[#allocation2 + $0x30] sm:$0xff]
        %v3361 = vld [vmem:[#allocation2 + $0x38] sm:$0xff]
        %v3362 = vld [vmem:[#allocation2 + $0x40] sm:$0xff]
        %v3363 = vld [vmem:[#allocation2 + $0x48] sm:$0xff]
        %v3364 = vld [vmem:[#allocation2 + $0x50] sm:$0xff]
        %v3365 = vld [vmem:[#allocation2 + $0x58] sm:$0xff]
        %v3366 = vld [vmem:[#allocation2 + $0x60] sm:$0xff]
        %v3367 = vld [vmem:[#allocation2 + $0x68] sm:$0xff]
        %v3368 = vld [vmem:[#allocation2 + $0x70] sm:$0xff]
        %v3369 = vld [vmem:[#allocation2 + $0x78] sm:$0xff]
        %v3370 = vld [vmem:[#allocation2 + $0x80] sm:$0xff]
        %v3371 = vld [vmem:[#allocation2 + $0x88] sm:$0xff]
        %v3372 = vld [vmem:[#allocation2 + $0x90] sm:$0xff]
        %v3373 = vld [vmem:[#allocation2 + $0x98] sm:$0xff]
        %v3374 = vld [vmem:[#allocation2 + $0xa0] sm:$0xff]
        %v3375 = vld [vmem:[#allocation2 + $0xa8] sm:$0xff]
        %v3376 = vld [vmem:[#allocation2 + $0xb0] sm:$0xff]
        %v3377 = vld [vmem:[#allocation2 + $0xb8] sm:$0xff]
        %v3378 = vld [vmem:[#allocation2 + $0xc0] sm:$0xff]
        %v3379 = vld [vmem:[#allocation2 + $0xc8] sm:$0xff]
        %v3380 = vld [vmem:[#allocation2 + $0xd0] sm:$0xff]
        %v3381 = vld [vmem:[#allocation2 + $0xd8] sm:$0xff]
        %v3382 = vld [vmem:[#allocation2 + $0xe0] sm:$0xff]
        %v3383 = vld [vmem:[#allocation2 + $0xe8] sm:$0xff]
        %v3384 = vld [vmem:[#allocation2 + $0xf0] sm:$0xff]
        %v3385 = vld [vmem:[#allocation2 + $0xf8] sm:$0xff]
        %v3386 = vld [vmem:[%s5] sm:$0xff]
        %v3387 = vld [vmem:[%s5 + $0x8] sm:$0xff]
        %v3388 = vld [vmem:[%s5 + $0x10] sm:$0xff]
        %v3389 = vld [vmem:[%s5 + $0x18] sm:$0xff]
        %v3390 = vld [vmem:[%s5 + $0x20] sm:$0xff]
        %v3391 = vld [vmem:[%s5 + $0x28] sm:$0xff]
        %v3392 = vld [vmem:[%s5 + $0x30] sm:$0xff]
        %v3393 = vld [vmem:[%s5 + $0x38] sm:$0xff]
        %v3394 = vld [vmem:[%s5 + $0x40] sm:$0xff]
        %v3395 = vld [vmem:[%s6] sm:$0x1]
        %v3397 = vlaneseq
        %v3398 = vshrl.u32 %v3397, 7
        %v3399 = vsub.s32 0, %v3398
        %v3400 = vrot.slane %v3395, %v3399
        %v3403 = vsel %vm1954, %v3354, 0
        %v3406 = vsel %vm1954, %v3355, 0
        %v3409 = vsel %vm1954, %v3356, 0
        %v3412 = vsel %vm1954, %v3357, 0
        %v3415 = vsel %vm1954, %v3358, 0
        %v3418 = vsel %vm1954, %v3359, 0
        %v3421 = vsel %vm1954, %v3360, 0
        %v3424 = vsel %vm1954, %v3361, 0
        %v3427 = vsel %vm1954, %v3362, 0
        %v3430 = vsel %vm1954, %v3363, 0
        %v3433 = vsel %vm1954, %v3364, 0
        %v3436 = vsel %vm1954, %v3365, 0
        %v3439 = vsel %vm1954, %v3366, 0
        %v3442 = vsel %vm1954, %v3367, 0
        %v3445 = vsel %vm1954, %v3368, 0
        %v3448 = vsel %vm1954, %v3369, 0
        %v3451 = vsel %vm1954, %v3370, 0
        %v3454 = vsel %vm1954, %v3371, 0
        %v3457 = vsel %vm1954, %v3372, 0
        %v3460 = vsel %vm1954, %v3373, 0
        %v3463 = vsel %vm1954, %v3374, 0
        %v3466 = vsel %vm1954, %v3375, 0
        %v3469 = vsel %vm1954, %v3376, 0
        %v3472 = vsel %vm1954, %v3377, 0
        %v3475 = vsel %vm1954, %v3378, 0
        %v3478 = vsel %vm1954, %v3379, 0
        %v3481 = vsel %vm1954, %v3380, 0
        %v3484 = vsel %vm1954, %v3381, 0
        %v3487 = vsel %vm1954, %v3382, 0
        %v3490 = vsel %vm1954, %v3383, 0
        %v3493 = vsel %vm1954, %v3384, 0
        %v3496 = vsel %vm1954, %v3385, 0
        %3498 = vmatprep.subr.mxu0 0.0
        %3499 = vmatpush1.msra.mxu0 %v3386
        %3500 = vmatprep.subr.mxu0 0.0
        %3501 = vmatpush1.msra.mxu0 %v3387
        %3502 = vmatprep.subr.mxu0 0.0
        %3503 = vmatpush1.msra.mxu0 %v3388
        %3504 = vmatprep.subr.mxu0 0.0
        %3505 = vmatpush1.msra.mxu0 %v3389
        %3506 = vmatprep.subr.mxu0 0.0
        %3507 = vmatpush1.msra.mxu0 %v3390
        %3508 = vmatprep.subr.mxu0 0.0
        %3509 = vmatpush1.msra.mxu0 %v3391
        %3510 = vmatprep.subr.mxu0 0.0
        %3511 = vmatpush1.msra.mxu0 %v3392
        %3512 = vmatprep.subr.mxu0 0.0
        %3513 = vmatpush1.msra.mxu0 %v3393
        %3514 = vmatprep.subr.mxu0 0.0
        %3515 = vmatpush1.msra.mxu0 %v3394
        %3516 = vmatprep.subr.mxu0 0.0
        %3517 = vmatpush1.msra.mxu0 0.0
        %3518 = vmatprep.subr.mxu0 0.0
        %3519 = vmatpush1.msra.mxu0 0.0
        %3520 = vmatprep.subr.mxu0 0.0
        %3521 = vmatpush1.msra.mxu0 0.0
        %3522 = vmatprep.subr.mxu0 0.0
        %3523 = vmatpush1.msra.mxu0 0.0
        %3524 = vmatprep.subr.mxu0 0.0
        %3525 = vmatpush1.msra.mxu0 0.0
        %3526 = vmatprep.subr.mxu0 0.0
        %3527 = vmatpush1.msra.mxu0 0.0
        %3528 = vmatprep.subr.mxu0 0.0
        %3529 = vmatpush1.msra.mxu0 0.0
        %3530 = vmatprep.subr.mxu0 0.0
        %3531 = vmatpush1.msra.mxu0 0.0
        %3532 = vmatprep.subr.mxu0 0.0
        %3533 = vmatpush1.msra.mxu0 0.0
        %3534 = vmatprep.subr.mxu0 0.0
        %3535 = vmatpush1.msra.mxu0 0.0
        %3536 = vmatprep.subr.mxu0 0.0
        %3537 = vmatpush1.msra.mxu0 0.0
        %3538 = vmatprep.subr.mxu0 0.0
        %3539 = vmatpush1.msra.mxu0 0.0
        %3540 = vmatprep.subr.mxu0 0.0
        %3541 = vmatpush1.msra.mxu0 0.0
        %3542 = vmatprep.subr.mxu0 0.0
        %3543 = vmatpush1.msra.mxu0 0.0
        %3544 = vmatprep.subr.mxu0 0.0
        %3545 = vmatpush1.msra.mxu0 0.0
        %3546 = vmatprep.subr.mxu0 0.0
        %3547 = vmatpush1.msra.mxu0 0.0
        %3548 = vmatprep.subr.mxu0 0.0
        %3549 = vmatpush1.msra.mxu0 0.0
        %3550 = vmatprep.subr.mxu0 0.0
        %3551 = vmatpush1.msra.mxu0 0.0
        %3552 = vmatprep.subr.mxu0 0.0
        %3553 = vmatpush1.msra.mxu0 0.0
        %3554 = vmatprep.subr.mxu0 0.0
        %3555 = vmatpush1.msra.mxu0 0.0
        %3556 = vmatprep.subr.mxu0 0.0
        %3557 = vmatpush1.msra.mxu0 0.0
        %3558 = vmatprep.subr.mxu0 0.0
        %3559 = vmatpush1.msra.mxu0 0.0
        %3560 = vmatprep.subr.mxu0 0.0
        %3561 = vmatpush1.msra.mxu0 0.0
        %3562 = vmatprep.mubr.f32.mxu0 0.0
        %3563 = vmatmul.mubr.f32.gmra.mrb[0].mxu0 %v3403
        %v3564 = vpop.f32.mrb[0].mxu0
        %v3565 = vadd.f32 %v3400, %v3564
        %v3566 = vpop.f32.mrb[0].mxu0
        %3567 = vmatprep.mubr.f32.mxu0 0.0
        %3568 = vmatmul.mubr.f32.gmra.mrb[0].mxu0 %v3406
        %v3569 = vpop.f32.mrb[0].mxu0
        %v3570 = vadd.f32 %v3400, %v3569
        %v3571 = vpop.f32.mrb[0].mxu0
        %3572 = vmatprep.mubr.f32.mxu0 0.0
        %3573 = vmatmul.mubr.f32.gmra.mrb[0].mxu0 %v3409
        %v3574 = vpop.f32.mrb[0].mxu0
        %v3575 = vadd.f32 %v3400, %v3574
        %v3576 = vpop.f32.mrb[0].mxu0
        %3577 = vmatprep.mubr.f32.mxu0 0.0
        %3578 = vmatmul.mubr.f32.gmra.mrb[0].mxu0 %v3412
        %v3579 = vpop.f32.mrb[0].mxu0
        %v3580 = vadd.f32 %v3400, %v3579
        %v3581 = vpop.f32.mrb[0].mxu0
        %3582 = vmatprep.mubr.f32.mxu0 0.0
        %3583 = vmatmul.mubr.f32.gmra.mrb[0].mxu0 %v3415
        %v3584 = vpop.f32.mrb[0].mxu0
        %v3585 = vadd.f32 %v3400, %v3584
        %v3586 = vpop.f32.mrb[0].mxu0
        %3587 = vmatprep.mubr.f32.mxu0 0.0
        %3588 = vmatmul.mubr.f32.gmra.mrb[0].mxu0 %v3418
        %v3589 = vpop.f32.mrb[0].mxu0
        %v3590 = vadd.f32 %v3400, %v3589
        %v3591 = vpop.f32.mrb[0].mxu0
        %3592 = vmatprep.mubr.f32.mxu0 0.0
        %3593 = vmatmul.mubr.f32.gmra.mrb[0].mxu0 %v3421
        %v3594 = vpop.f32.mrb[0].mxu0
        %v3595 = vadd.f32 %v3400, %v3594
        %v3596 = vpop.f32.mrb[0].mxu0
        %3597 = vmatprep.mubr.f32.mxu0 0.0
        %3598 = vmatmul.mubr.f32.gmra.mrb[0].mxu0 %v3424
        %v3599 = vpop.f32.mrb[0].mxu0
        %v3600 = vadd.f32 %v3400, %v3599
        %v3601 = vpop.f32.mrb[0].mxu0
        %3602 = vmatprep.mubr.f32.mxu0 0.0
        %3603 = vmatmul.mubr.f32.gmra.mrb[0].mxu0 %v3427
        %v3604 = vpop.f32.mrb[0].mxu0
        %v3605 = vadd.f32 %v3400, %v3604
        %v3606 = vpop.f32.mrb[0].mxu0
        %3607 = vmatprep.mubr.f32.mxu0 0.0
        %3608 = vmatmul.mubr.f32.gmra.mrb[0].mxu0 %v3430
        %v3609 = vpop.f32.mrb[0].mxu0
        %v3610 = vadd.f32 %v3400, %v3609
        %v3611 = vpop.f32.mrb[0].mxu0
        %3612 = vmatprep.mubr.f32.mxu0 0.0
        %3613 = vmatmul.mubr.f32.gmra.mrb[0].mxu0 %v3433
        %v3614 = vpop.f32.mrb[0].mxu0
        %v3615 = vadd.f32 %v3400, %v3614
        %v3616 = vpop.f32.mrb[0].mxu0
        %3617 = vmatprep.mubr.f32.mxu0 0.0
        %3618 = vmatmul.mubr.f32.gmra.mrb[0].mxu0 %v3436
        %v3619 = vpop.f32.mrb[0].mxu0
        %v3620 = vadd.f32 %v3400, %v3619
        %v3621 = vpop.f32.mrb[0].mxu0
        %3622 = vmatprep.mubr.f32.mxu0 0.0
        %3623 = vmatmul.mubr.f32.gmra.mrb[0].mxu0 %v3439
        %v3624 = vpop.f32.mrb[0].mxu0
        %v3625 = vadd.f32 %v3400, %v3624
        %v3626 = vpop.f32.mrb[0].mxu0
        %3627 = vmatprep.mubr.f32.mxu0 0.0
        %3628 = vmatmul.mubr.f32.gmra.mrb[0].mxu0 %v3442
        %v3629 = vpop.f32.mrb[0].mxu0
        %v3630 = vadd.f32 %v3400, %v3629
        %v3631 = vpop.f32.mrb[0].mxu0
        %3632 = vmatprep.mubr.f32.mxu0 0.0
        %3633 = vmatmul.mubr.f32.gmra.mrb[0].mxu0 %v3445
        %v3634 = vpop.f32.mrb[0].mxu0
        %v3635 = vadd.f32 %v3400, %v3634
        %v3636 = vpop.f32.mrb[0].mxu0
        %3637 = vmatprep.mubr.f32.mxu0 0.0
        %3638 = vmatmul.mubr.f32.gmra.mrb[0].mxu0 %v3448
        %v3639 = vpop.f32.mrb[0].mxu0
        %v3640 = vadd.f32 %v3400, %v3639
        %v3641 = vpop.f32.mrb[0].mxu0
        %3642 = vmatprep.mubr.f32.mxu0 0.0
        %3643 = vmatmul.mubr.f32.gmra.mrb[0].mxu0 %v3451
        %v3644 = vpop.f32.mrb[0].mxu0
        %v3645 = vadd.f32 %v3400, %v3644
        %v3646 = vpop.f32.mrb[0].mxu0
        %3647 = vmatprep.mubr.f32.mxu0 0.0
        %3648 = vmatmul.mubr.f32.gmra.mrb[0].mxu0 %v3454
        %v3649 = vpop.f32.mrb[0].mxu0
        %v3650 = vadd.f32 %v3400, %v3649
        %v3651 = vpop.f32.mrb[0].mxu0
        %3652 = vmatprep.mubr.f32.mxu0 0.0
        %3653 = vmatmul.mubr.f32.gmra.mrb[0].mxu0 %v3457
        %v3654 = vpop.f32.mrb[0].mxu0
        %v3655 = vadd.f32 %v3400, %v3654
        %v3656 = vpop.f32.mrb[0].mxu0
        %3657 = vmatprep.mubr.f32.mxu0 0.0
        %3658 = vmatmul.mubr.f32.gmra.mrb[0].mxu0 %v3460
        %v3659 = vpop.f32.mrb[0].mxu0
        %v3660 = vadd.f32 %v3400, %v3659
        %v3661 = vpop.f32.mrb[0].mxu0
        %3662 = vmatprep.mubr.f32.mxu0 0.0
        %3663 = vmatmul.mubr.f32.gmra.mrb[0].mxu0 %v3463
        %v3664 = vpop.f32.mrb[0].mxu0
        %v3665 = vadd.f32 %v3400, %v3664
        %v3666 = vpop.f32.mrb[0].mxu0
        %3667 = vmatprep.mubr.f32.mxu0 0.0
        %3668 = vmatmul.mubr.f32.gmra.mrb[0].mxu0 %v3466
        %v3669 = vpop.f32.mrb[0].mxu0
        %v3670 = vadd.f32 %v3400, %v3669
        %v3671 = vpop.f32.mrb[0].mxu0
        %3672 = vmatprep.mubr.f32.mxu0 0.0
        %3673 = vmatmul.mubr.f32.gmra.mrb[0].mxu0 %v3469
        %v3674 = vpop.f32.mrb[0].mxu0
        %v3675 = vadd.f32 %v3400, %v3674
        %v3676 = vpop.f32.mrb[0].mxu0
        %3677 = vmatprep.mubr.f32.mxu0 0.0
        %3678 = vmatmul.mubr.f32.gmra.mrb[0].mxu0 %v3472
        %v3679 = vpop.f32.mrb[0].mxu0
        %v3680 = vadd.f32 %v3400, %v3679
        %v3681 = vpop.f32.mrb[0].mxu0
        %3682 = vmatprep.mubr.f32.mxu0 0.0
        %3683 = vmatmul.mubr.f32.gmra.mrb[0].mxu0 %v3475
        %v3684 = vpop.f32.mrb[0].mxu0
        %v3685 = vadd.f32 %v3400, %v3684
        %v3686 = vpop.f32.mrb[0].mxu0
        %3687 = vmatprep.mubr.f32.mxu0 0.0
        %3688 = vmatmul.mubr.f32.gmra.mrb[0].mxu0 %v3478
        %v3689 = vpop.f32.mrb[0].mxu0
        %v3690 = vadd.f32 %v3400, %v3689
        %v3691 = vpop.f32.mrb[0].mxu0
        %3692 = vmatprep.mubr.f32.mxu0 0.0
        %3693 = vmatmul.mubr.f32.gmra.mrb[0].mxu0 %v3481
        %v3694 = vpop.f32.mrb[0].mxu0
        %v3695 = vadd.f32 %v3400, %v3694
        %v3696 = vpop.f32.mrb[0].mxu0
        %3697 = vmatprep.mubr.f32.mxu0 0.0
        %3698 = vmatmul.mubr.f32.gmra.mrb[0].mxu0 %v3484
        %v3699 = vpop.f32.mrb[0].mxu0
        %v3700 = vadd.f32 %v3400, %v3699
        %v3701 = vpop.f32.mrb[0].mxu0
        %3702 = vmatprep.mubr.f32.mxu0 0.0
        %3703 = vmatmul.mubr.f32.gmra.mrb[0].mxu0 %v3487
        %v3704 = vpop.f32.mrb[0].mxu0
        %v3705 = vadd.f32 %v3400, %v3704
        %v3706 = vpop.f32.mrb[0].mxu0
        %3707 = vmatprep.mubr.f32.mxu0 0.0
        %3708 = vmatmul.mubr.f32.gmra.mrb[0].mxu0 %v3490
        %v3709 = vpop.f32.mrb[0].mxu0
        %v3710 = vadd.f32 %v3400, %v3709
        %v3711 = vpop.f32.mrb[0].mxu0
        %3712 = vmatprep.mubr.f32.mxu0 0.0
        %3713 = vmatmul.mubr.f32.gmra.mrb[0].mxu0 %v3493
        %v3714 = vpop.f32.mrb[0].mxu0
        %v3715 = vadd.f32 %v3400, %v3714
        %v3716 = vpop.f32.mrb[0].mxu0
        %3717 = vmatprep.mubr.f32.mxu0 0.0
        %3718 = vmatmul.mubr.f32.gmra.mrb[0].mxu0 %v3496
        %v3719 = vpop.f32.mrb[0].mxu0
        %v3720 = vadd.f32 %v3400, %v3719
        %v3721 = vpop.f32.mrb[0].mxu0
        %3722 = vdwg.mxu0
        %v3723 = vmax.f32 %v3565, 0.0
        %v3724 = vmax.f32 %v3570, 0.0
        %v3725 = vmax.f32 %v3575, 0.0
        %v3726 = vmax.f32 %v3580, 0.0
        %v3727 = vmax.f32 %v3585, 0.0
        %v3728 = vmax.f32 %v3590, 0.0
        %v3729 = vmax.f32 %v3595, 0.0
        %v3730 = vmax.f32 %v3600, 0.0
        %v3731 = vmax.f32 %v3605, 0.0
        %v3732 = vmax.f32 %v3610, 0.0
        %v3733 = vmax.f32 %v3615, 0.0
        %v3734 = vmax.f32 %v3620, 0.0
        %v3735 = vmax.f32 %v3625, 0.0
        %v3736 = vmax.f32 %v3630, 0.0
        %v3737 = vmax.f32 %v3635, 0.0
        %v3738 = vmax.f32 %v3640, 0.0
        %v3739 = vmax.f32 %v3645, 0.0
        %v3740 = vmax.f32 %v3650, 0.0
        %v3741 = vmax.f32 %v3655, 0.0
        %v3742 = vmax.f32 %v3660, 0.0
        %v3743 = vmax.f32 %v3665, 0.0
        %v3744 = vmax.f32 %v3670, 0.0
        %v3745 = vmax.f32 %v3675, 0.0
        %v3746 = vmax.f32 %v3680, 0.0
        %v3747 = vmax.f32 %v3685, 0.0
        %v3748 = vmax.f32 %v3690, 0.0
        %v3749 = vmax.f32 %v3695, 0.0
        %v3750 = vmax.f32 %v3700, 0.0
        %v3751 = vmax.f32 %v3705, 0.0
        %v3752 = vmax.f32 %v3710, 0.0
        %v3753 = vmax.f32 %v3715, 0.0
        %v3754 = vmax.f32 %v3720, 0.0
        %v3755 = vlaneseq
        %v3756 = vshrl.u32 %v3755, 7
        %v3757 = vadd.s32 %v3756, 8
        %vm3758 = vcmp.lt.s32.totalorder %v3756, 15
        %vm3759 = vcmp.lt.s32.totalorder %v3757, 15
        %v3760 = vrot.slane %v331, 1
        %v3761 = vrot.slane %v332, 1
        %v3762 = vrot.slane %v333, 1
        %v3763 = vrot.slane %v334, 1
        %v3764 = vrot.slane %v335, 1
        %v3765 = vrot.slane %v336, 1
        %v3766 = vrot.slane %v337, 1
        %v3767 = vrot.slane %v338, 1
        %v3768 = vrot.slane %v339, 1
        %v3769 = vrot.slane %v340, 1
        %v3770 = vrot.slane %v341, 1
        %v3771 = vrot.slane %v342, 1
        %v3772 = vrot.slane %v343, 1
        %v3773 = vrot.slane %v344, 1
        %v3774 = vrot.slane %v345, 1
        %v3775 = vrot.slane %v346, 1
        %v3776 = vrot.slane %v347, 1
        %v3777 = vrot.slane %v348, 1
        %v3778 = vrot.slane %v349, 1
        %v3779 = vrot.slane %v350, 1
        %v3780 = vrot.slane %v351, 1
        %v3781 = vrot.slane %v352, 1
        %v3782 = vrot.slane %v353, 1
        %v3783 = vrot.slane %v354, 1
        %v3784 = vrot.slane %v355, 1
        %v3785 = vrot.slane %v356, 1
        %v3786 = vrot.slane %v357, 1
        %v3787 = vrot.slane %v358, 1
        %v3788 = vrot.slane %v359, 1
        %v3789 = vrot.slane %v360, 1
        %v3790 = vrot.slane %v361, 1
        %v3791 = vrot.slane %v362, 1
        %vm3792 = vcmp.lt.s32.totalorder %v3756, 7
        %v3793 = vsel %vm3792, %v3790, %v3791
        %v3794 = vsel %vm3792, %v3789, %v3790
        %v3795 = vsel %vm3792, %v3788, %v3789
        %v3796 = vsel %vm3792, %v3787, %v3788
        %v3797 = vsel %vm3792, %v3786, %v3787
        %v3798 = vsel %vm3792, %v3785, %v3786
        %v3799 = vsel %vm3792, %v3784, %v3785
        %v3800 = vsel %vm3792, %v3783, %v3784
        %v3801 = vsel %vm3792, %v3782, %v3783
        %v3802 = vsel %vm3792, %v3781, %v3782
        %v3803 = vsel %vm3792, %v3780, %v3781
        %v3804 = vsel %vm3792, %v3779, %v3780
        %v3805 = vsel %vm3792, %v3778, %v3779
        %v3806 = vsel %vm3792, %v3777, %v3778
        %v3807 = vsel %vm3792, %v3776, %v3777
        %v3808 = vsel %vm3792, %v3775, %v3776
        %v3809 = vsel %vm3792, %v3774, %v3775
        %v3810 = vsel %vm3792, %v3773, %v3774
        %v3811 = vsel %vm3792, %v3772, %v3773
        %v3812 = vsel %vm3792, %v3771, %v3772
        %v3813 = vsel %vm3792, %v3770, %v3771
        %v3814 = vsel %vm3792, %v3769, %v3770
        %v3815 = vsel %vm3792, %v3768, %v3769
        %v3816 = vsel %vm3792, %v3767, %v3768
        %v3817 = vsel %vm3792, %v3766, %v3767
        %v3818 = vsel %vm3792, %v3765, %v3766
        %v3819 = vsel %vm3792, %v3764, %v3765
        %v3820 = vsel %vm3792, %v3763, %v3764
        %v3821 = vsel %vm3792, %v3762, %v3763
        %v3822 = vsel %vm3792, %v3761, %v3762
        %v3823 = vsel %vm3792, %v3760, %v3761
        %v3824 = vsel %vm3792, %v3791, %v3760
        %v3825 = vsel %vm3758, %v3823, %v331
        %v3826 = vsel %vm3759, %v3822, %v332
        %v3827 = vsel %vm3758, %v3821, %v333
        %v3828 = vsel %vm3759, %v3820, %v334
        %v3829 = vsel %vm3758, %v3819, %v335
        %v3830 = vsel %vm3759, %v3818, %v336
        %v3831 = vsel %vm3758, %v3817, %v337
        %v3832 = vsel %vm3759, %v3816, %v338
        %v3833 = vsel %vm3758, %v3815, %v339
        %v3834 = vsel %vm3759, %v3814, %v340
        %v3835 = vsel %vm3758, %v3813, %v341
        %v3836 = vsel %vm3759, %v3812, %v342
        %v3837 = vsel %vm3758, %v3811, %v343
        %v3838 = vsel %vm3759, %v3810, %v344
        %v3839 = vsel %vm3758, %v3809, %v345
        %v3840 = vsel %vm3759, %v3808, %v346
        %v3841 = vsel %vm3758, %v3807, %v347
        %v3842 = vsel %vm3759, %v3806, %v348
        %v3843 = vsel %vm3758, %v3805, %v349
        %v3844 = vsel %vm3759, %v3804, %v350
        %v3845 = vsel %vm3758, %v3803, %v351
        %v3846 = vsel %vm3759, %v3802, %v352
        %v3847 = vsel %vm3758, %v3801, %v353
        %v3848 = vsel %vm3759, %v3800, %v354
        %v3849 = vsel %vm3758, %v3799, %v355
        %v3850 = vsel %vm3759, %v3798, %v356
        %v3851 = vsel %vm3758, %v3797, %v357
        %v3852 = vsel %vm3759, %v3796, %v358
        %v3853 = vsel %vm3758, %v3795, %v359
        %v3854 = vsel %vm3759, %v3794, %v360
        %v3855 = vsel %vm3758, %v3793, %v361
        %v3856 = vsel %vm3759, %v3824, %v362
        %vm3857 = vcmp.gt.s32.totalorder %v3756, 0
        %vm3858 = vcmp.gt.s32.totalorder %v3757, 0
        %v3859 = vrot.slane %v331, 7
        %v3860 = vrot.slane %v332, 7
        %v3861 = vrot.slane %v333, 7
        %v3862 = vrot.slane %v334, 7
        %v3863 = vrot.slane %v335, 7
        %v3864 = vrot.slane %v336, 7
        %v3865 = vrot.slane %v337, 7
        %v3866 = vrot.slane %v338, 7
        %v3867 = vrot.slane %v339, 7
        %v3868 = vrot.slane %v340, 7
        %v3869 = vrot.slane %v341, 7
        %v3870 = vrot.slane %v342, 7
        %v3871 = vrot.slane %v343, 7
        %v3872 = vrot.slane %v344, 7
        %v3873 = vrot.slane %v345, 7
        %v3874 = vrot.slane %v346, 7
        %v3875 = vrot.slane %v347, 7
        %v3876 = vrot.slane %v348, 7
        %v3877 = vrot.slane %v349, 7
        %v3878 = vrot.slane %v350, 7
        %v3879 = vrot.slane %v351, 7
        %v3880 = vrot.slane %v352, 7
        %v3881 = vrot.slane %v353, 7
        %v3882 = vrot.slane %v354, 7
        %v3883 = vrot.slane %v355, 7
        %v3884 = vrot.slane %v356, 7
        %v3885 = vrot.slane %v357, 7
        %v3886 = vrot.slane %v358, 7
        %v3887 = vrot.slane %v359, 7
        %v3888 = vrot.slane %v360, 7
        %v3889 = vrot.slane %v361, 7
        %v3890 = vrot.slane %v362, 7
        %vm3891 = vcmp.lt.s32.totalorder %v3756, 1
        %v3892 = vsel %vm3891, %v3889, %v3890
        %v3893 = vsel %vm3891, %v3888, %v3889
        %v3894 = vsel %vm3891, %v3887, %v3888
        %v3895 = vsel %vm3891, %v3886, %v3887
        %v3896 = vsel %vm3891, %v3885, %v3886
        %v3897 = vsel %vm3891, %v3884, %v3885
        %v3898 = vsel %vm3891, %v3883, %v3884
        %v3899 = vsel %vm3891, %v3882, %v3883
        %v3900 = vsel %vm3891, %v3881, %v3882
        %v3901 = vsel %vm3891, %v3880, %v3881
        %v3902 = vsel %vm3891, %v3879, %v3880
        %v3903 = vsel %vm3891, %v3878, %v3879
        %v3904 = vsel %vm3891, %v3877, %v3878
        %v3905 = vsel %vm3891, %v3876, %v3877
        %v3906 = vsel %vm3891, %v3875, %v3876
        %v3907 = vsel %vm3891, %v3874, %v3875
        %v3908 = vsel %vm3891, %v3873, %v3874
        %v3909 = vsel %vm3891, %v3872, %v3873
        %v3910 = vsel %vm3891, %v3871, %v3872
        %v3911 = vsel %vm3891, %v3870, %v3871
        %v3912 = vsel %vm3891, %v3869, %v3870
        %v3913 = vsel %vm3891, %v3868, %v3869
        %v3914 = vsel %vm3891, %v3867, %v3868
        %v3915 = vsel %vm3891, %v3866, %v3867
        %v3916 = vsel %vm3891, %v3865, %v3866
        %v3917 = vsel %vm3891, %v3864, %v3865
        %v3918 = vsel %vm3891, %v3863, %v3864
        %v3919 = vsel %vm3891, %v3862, %v3863
        %v3920 = vsel %vm3891, %v3861, %v3862
        %v3921 = vsel %vm3891, %v3860, %v3861
        %v3922 = vsel %vm3891, %v3859, %v3860
        %v3923 = vsel %vm3891, %v3890, %v3859
        %v3924 = vsel %vm3857, %v3923, %v331
        %v3925 = vsel %vm3858, %v3922, %v332
        %v3926 = vsel %vm3857, %v3921, %v333
        %v3927 = vsel %vm3858, %v3920, %v334
        %v3928 = vsel %vm3857, %v3919, %v335
        %v3929 = vsel %vm3858, %v3918, %v336
        %v3930 = vsel %vm3857, %v3917, %v337
        %v3931 = vsel %vm3858, %v3916, %v338
        %v3932 = vsel %vm3857, %v3915, %v339
        %v3933 = vsel %vm3858, %v3914, %v340
        %v3934 = vsel %vm3857, %v3913, %v341
        %v3935 = vsel %vm3858, %v3912, %v342
        %v3936 = vsel %vm3857, %v3911, %v343
        %v3937 = vsel %vm3858, %v3910, %v344
        %v3938 = vsel %vm3857, %v3909, %v345
        %v3939 = vsel %vm3858, %v3908, %v346
        %v3940 = vsel %vm3857, %v3907, %v347
        %v3941 = vsel %vm3858, %v3906, %v348
        %v3942 = vsel %vm3857, %v3905, %v349
        %v3943 = vsel %vm3858, %v3904, %v350
        %v3944 = vsel %vm3857, %v3903, %v351
        %v3945 = vsel %vm3858, %v3902, %v352
        %v3946 = vsel %vm3857, %v3901, %v353
        %v3947 = vsel %vm3858, %v3900, %v354
        %v3948 = vsel %vm3857, %v3899, %v355
        %v3949 = vsel %vm3858, %v3898, %v356
        %v3950 = vsel %vm3857, %v3897, %v357
        %v3951 = vsel %vm3858, %v3896, %v358
        %v3952 = vsel %vm3857, %v3895, %v359
        %v3953 = vsel %vm3858, %v3894, %v360
        %v3954 = vsel %vm3857, %v3893, %v361
        %v3955 = vsel %vm3858, %v3892, %v362
        %v3956 = vmax.f32 %v3825, %v3924
        %v3957 = vmax.f32 %v3826, %v3925
        %v3958 = vmax.f32 %v3827, %v3926
        %v3959 = vmax.f32 %v3828, %v3927
        %v3960 = vmax.f32 %v3829, %v3928
        %v3961 = vmax.f32 %v3830, %v3929
        %v3962 = vmax.f32 %v3831, %v3930
        %v3963 = vmax.f32 %v3832, %v3931
        %v3964 = vmax.f32 %v3833, %v3932
        %v3965 = vmax.f32 %v3834, %v3933
        %v3966 = vmax.f32 %v3835, %v3934
        %v3967 = vmax.f32 %v3836, %v3935
        %v3968 = vmax.f32 %v3837, %v3936
        %v3969 = vmax.f32 %v3838, %v3937
        %v3970 = vmax.f32 %v3839, %v3938
        %v3971 = vmax.f32 %v3840, %v3939
        %v3972 = vmax.f32 %v3841, %v3940
        %v3973 = vmax.f32 %v3842, %v3941
        %v3974 = vmax.f32 %v3843, %v3942
        %v3975 = vmax.f32 %v3844, %v3943
        %v3976 = vmax.f32 %v3845, %v3944
        %v3977 = vmax.f32 %v3846, %v3945
        %v3978 = vmax.f32 %v3847, %v3946
        %v3979 = vmax.f32 %v3848, %v3947
        %v3980 = vmax.f32 %v3849, %v3948
        %v3981 = vmax.f32 %v3850, %v3949
        %v3982 = vmax.f32 %v3851, %v3950
        %v3983 = vmax.f32 %v3852, %v3951
        %v3984 = vmax.f32 %v3853, %v3952
        %v3985 = vmax.f32 %v3854, %v3953
        %v3986 = vmax.f32 %v3855, %v3954
        %v3987 = vmax.f32 %v3856, %v3955
        %v3988 = vmax.f32 %v331, %v3956
        %v3989 = vmax.f32 %v332, %v3957
        %v3990 = vmax.f32 %v333, %v3958
        %v3991 = vmax.f32 %v334, %v3959
        %v3992 = vmax.f32 %v335, %v3960
        %v3993 = vmax.f32 %v336, %v3961
        %v3994 = vmax.f32 %v337, %v3962
        %v3995 = vmax.f32 %v338, %v3963
        %v3996 = vmax.f32 %v339, %v3964
        %v3997 = vmax.f32 %v340, %v3965
        %v3998 = vmax.f32 %v341, %v3966
        %v3999 = vmax.f32 %v342, %v3967
        %v4000 = vmax.f32 %v343, %v3968
        %v4001 = vmax.f32 %v344, %v3969
        %v4002 = vmax.f32 %v345, %v3970
        %v4003 = vmax.f32 %v346, %v3971
        %v4004 = vmax.f32 %v347, %v3972
        %v4005 = vmax.f32 %v348, %v3973
        %v4006 = vmax.f32 %v349, %v3974
        %v4007 = vmax.f32 %v350, %v3975
        %v4008 = vmax.f32 %v351, %v3976
        %v4009 = vmax.f32 %v352, %v3977
        %v4010 = vmax.f32 %v353, %v3978
        %v4011 = vmax.f32 %v354, %v3979
        %v4012 = vmax.f32 %v355, %v3980
        %v4013 = vmax.f32 %v356, %v3981
        %v4014 = vmax.f32 %v357, %v3982
        %v4015 = vmax.f32 %v358, %v3983
        %v4016 = vmax.f32 %v359, %v3984
        %v4017 = vmax.f32 %v360, %v3985
        %v4018 = vmax.f32 %v361, %v3986
        %v4019 = vmax.f32 %v362, %v3987
        %v4020 = vmax.f32 %v3990, %v3988
        %v4021 = vmax.f32 %v3991, %v3989
        %v4022 = vmax.f32 %v3992, %v3988
        %v4023 = vmax.f32 %v3993, %v3989
        %v4024 = vmax.f32 %v3994, %v3990
        %v4025 = vmax.f32 %v3995, %v3991
        %v4026 = vmax.f32 %v3996, %v3992
        %v4027 = vmax.f32 %v3997, %v3993
        %v4028 = vmax.f32 %v3998, %v3994
        %v4029 = vmax.f32 %v3999, %v3995
        %v4030 = vmax.f32 %v4000, %v3996
        %v4031 = vmax.f32 %v4001, %v3997
        %v4032 = vmax.f32 %v4002, %v3998
        %v4033 = vmax.f32 %v4003, %v3999
        %v4034 = vmax.f32 %v4004, %v4000
        %v4035 = vmax.f32 %v4005, %v4001
        %v4036 = vmax.f32 %v4006, %v4002
        %v4037 = vmax.f32 %v4007, %v4003
        %v4038 = vmax.f32 %v4008, %v4004
        %v4039 = vmax.f32 %v4009, %v4005
        %v4040 = vmax.f32 %v4010, %v4006
        %v4041 = vmax.f32 %v4011, %v4007
        %v4042 = vmax.f32 %v4012, %v4008
        %v4043 = vmax.f32 %v4013, %v4009
        %v4044 = vmax.f32 %v4014, %v4010
        %v4045 = vmax.f32 %v4015, %v4011
        %v4046 = vmax.f32 %v4016, %v4012
        %v4047 = vmax.f32 %v4017, %v4013
        %v4048 = vmax.f32 %v4018, %v4014
        %v4049 = vmax.f32 %v4019, %v4015
        %v4050 = vmax.f32 %v4018, %v4016
        %v4051 = vmax.f32 %v4019, %v4017
        %v4052 = vmax.f32 %v3988, %v4020
        %v4053 = vmax.f32 %v3989, %v4021
        %v4054 = vmax.f32 %v3990, %v4022
        %v4055 = vmax.f32 %v3991, %v4023
        %v4056 = vmax.f32 %v3992, %v4024
        %v4057 = vmax.f32 %v3993, %v4025
        %v4058 = vmax.f32 %v3994, %v4026
        %v4059 = vmax.f32 %v3995, %v4027
        %v4060 = vmax.f32 %v3996, %v4028
        %v4061 = vmax.f32 %v3997, %v4029
        %v4062 = vmax.f32 %v3998, %v4030
        %v4063 = vmax.f32 %v3999, %v4031
        %v4064 = vmax.f32 %v4000, %v4032
        %v4065 = vmax.f32 %v4001, %v4033
        %v4066 = vmax.f32 %v4002, %v4034
        %v4067 = vmax.f32 %v4003, %v4035
        %v4068 = vmax.f32 %v4004, %v4036
        %v4069 = vmax.f32 %v4005, %v4037
        %v4070 = vmax.f32 %v4006, %v4038
        %v4071 = vmax.f32 %v4007, %v4039
        %v4072 = vmax.f32 %v4008, %v4040
        %v4073 = vmax.f32 %v4009, %v4041
        %v4074 = vmax.f32 %v4010, %v4042
        %v4075 = vmax.f32 %v4011, %v4043
        %v4076 = vmax.f32 %v4012, %v4044
        %v4077 = vmax.f32 %v4013, %v4045
        %v4078 = vmax.f32 %v4014, %v4046
        %v4079 = vmax.f32 %v4015, %v4047
        %v4080 = vmax.f32 %v4016, %v4048
        %v4081 = vmax.f32 %v4017, %v4049
        %v4082 = vmax.f32 %v4018, %v4050
        %v4083 = vmax.f32 %v4019, %v4051
        %v4084 = vld [vmem:[%s7] sm:$0xf]
        %v4085 = vld [vmem:[%s8] sm:$0x1]
        %v4087 = vlaneseq
        %v4088 = vshrl.u32 %v4087, 7
        %v4089 = vsub.s32 0, %v4088
        %v4090 = vrot.slane %v4085, %v4089
        %v4093 = vsel %vm371, %v4052, 0
        %v4096 = vsel %vm371, %v4053, 0
        %v4099 = vsel %vm371, %v4054, 0
        %v4102 = vsel %vm371, %v4055, 0
        %v4105 = vsel %vm371, %v4056, 0
        %v4108 = vsel %vm371, %v4057, 0
        %v4111 = vsel %vm371, %v4058, 0
        %v4114 = vsel %vm371, %v4059, 0
        %v4117 = vsel %vm371, %v4060, 0
        %v4120 = vsel %vm371, %v4061, 0
        %v4123 = vsel %vm371, %v4062, 0
        %v4126 = vsel %vm371, %v4063, 0
        %v4129 = vsel %vm371, %v4064, 0
        %v4132 = vsel %vm371, %v4065, 0
        %v4135 = vsel %vm371, %v4066, 0
        %v4138 = vsel %vm371, %v4067, 0
        %v4141 = vsel %vm371, %v4068, 0
        %v4144 = vsel %vm371, %v4069, 0
        %v4147 = vsel %vm371, %v4070, 0
        %v4150 = vsel %vm371, %v4071, 0
        %v4153 = vsel %vm371, %v4072, 0
        %v4156 = vsel %vm371, %v4073, 0
        %v4159 = vsel %vm371, %v4074, 0
        %v4162 = vsel %vm371, %v4075, 0
        %v4165 = vsel %vm371, %v4076, 0
        %v4168 = vsel %vm371, %v4077, 0
        %v4171 = vsel %vm371, %v4078, 0
        %v4174 = vsel %vm371, %v4079, 0
        %v4177 = vsel %vm371, %v4080, 0
        %v4180 = vsel %vm371, %v4081, 0
        %v4183 = vsel %vm371, %v4082, 0
        %v4186 = vsel %vm371, %v4083, 0
        %v4189 = vsel %vm468, %v4084, 0
        %4191 = vmatprep.subr.mxu0 0.0
        %4192 = vmatpush1.msra.mxu0 %v4189
        %4193 = vmatprep.subr.mxu0 0.0
        %4194 = vmatpush1.msra.mxu0 0.0
        %4195 = vmatprep.subr.mxu0 0.0
        %4196 = vmatpush1.msra.mxu0 0.0
        %4197 = vmatprep.subr.mxu0 0.0
        %4198 = vmatpush1.msra.mxu0 0.0
        %4199 = vmatprep.subr.mxu0 0.0
        %4200 = vmatpush1.msra.mxu0 0.0
        %4201 = vmatprep.subr.mxu0 0.0
        %4202 = vmatpush1.msra.mxu0 0.0
        %4203 = vmatprep.subr.mxu0 0.0
        %4204 = vmatpush1.msra.mxu0 0.0
        %4205 = vmatprep.subr.mxu0 0.0
        %4206 = vmatpush1.msra.mxu0 0.0
        %4207 = vmatprep.subr.mxu0 0.0
        %4208 = vmatpush1.msra.mxu0 0.0
        %4209 = vmatprep.subr.mxu0 0.0
        %4210 = vmatpush1.msra.mxu0 0.0
        %4211 = vmatprep.subr.mxu0 0.0
        %4212 = vmatpush1.msra.mxu0 0.0
        %4213 = vmatprep.subr.mxu0 0.0
        %4214 = vmatpush1.msra.mxu0 0.0
        %4215 = vmatprep.subr.mxu0 0.0
        %4216 = vmatpush1.msra.mxu0 0.0
        %4217 = vmatprep.subr.mxu0 0.0
        %4218 = vmatpush1.msra.mxu0 0.0
        %4219 = vmatprep.subr.mxu0 0.0
        %4220 = vmatpush1.msra.mxu0 0.0
        %4221 = vmatprep.subr.mxu0 0.0
        %4222 = vmatpush1.msra.mxu0 0.0
        %4223 = vmatprep.subr.mxu0 0.0
        %4224 = vmatpush1.msra.mxu0 0.0
        %4225 = vmatprep.subr.mxu0 0.0
        %4226 = vmatpush1.msra.mxu0 0.0
        %4227 = vmatprep.subr.mxu0 0.0
        %4228 = vmatpush1.msra.mxu0 0.0
        %4229 = vmatprep.subr.mxu0 0.0
        %4230 = vmatpush1.msra.mxu0 0.0
        %4231 = vmatprep.subr.mxu0 0.0
        %4232 = vmatpush1.msra.mxu0 0.0
        %4233 = vmatprep.subr.mxu0 0.0
        %4234 = vmatpush1.msra.mxu0 0.0
        %4235 = vmatprep.subr.mxu0 0.0
        %4236 = vmatpush1.msra.mxu0 0.0
        %4237 = vmatprep.subr.mxu0 0.0
        %4238 = vmatpush1.msra.mxu0 0.0
        %4239 = vmatprep.subr.mxu0 0.0
        %4240 = vmatpush1.msra.mxu0 0.0
        %4241 = vmatprep.subr.mxu0 0.0
        %4242 = vmatpush1.msra.mxu0 0.0
        %4243 = vmatprep.subr.mxu0 0.0
        %4244 = vmatpush1.msra.mxu0 0.0
        %4245 = vmatprep.subr.mxu0 0.0
        %4246 = vmatpush1.msra.mxu0 0.0
        %4247 = vmatprep.subr.mxu0 0.0
        %4248 = vmatpush1.msra.mxu0 0.0
        %4249 = vmatprep.subr.mxu0 0.0
        %4250 = vmatpush1.msra.mxu0 0.0
        %4251 = vmatprep.subr.mxu0 0.0
        %4252 = vmatpush1.msra.mxu0 0.0
        %4253 = vmatprep.subr.mxu0 0.0
        %4254 = vmatpush1.msra.mxu0 0.0
        %4255 = vmatprep.mubr.f32.mxu0 0.0
        %4256 = vmatmul.mubr.f32.gmra.mrb[0].mxu0 %v4093
        %v4257 = vpop.f32.mrb[0].mxu0
        %v4258 = vadd.f32 %v4090, %v4257
        %v4259 = vpop.f32.mrb[0].mxu0
        %4260 = vmatprep.mubr.f32.mxu0 0.0
        %4261 = vmatmul.mubr.f32.gmra.mrb[0].mxu0 %v4096
        %v4262 = vpop.f32.mrb[0].mxu0
        %v4263 = vadd.f32 %v4090, %v4262
        %v4264 = vpop.f32.mrb[0].mxu0
        %4265 = vmatprep.mubr.f32.mxu0 0.0
        %4266 = vmatmul.mubr.f32.gmra.mrb[0].mxu0 %v4099
        %v4267 = vpop.f32.mrb[0].mxu0
        %v4268 = vadd.f32 %v4090, %v4267
        %v4269 = vpop.f32.mrb[0].mxu0
        %4270 = vmatprep.mubr.f32.mxu0 0.0
        %4271 = vmatmul.mubr.f32.gmra.mrb[0].mxu0 %v4102
        %v4272 = vpop.f32.mrb[0].mxu0
        %v4273 = vadd.f32 %v4090, %v4272
        %v4274 = vpop.f32.mrb[0].mxu0
        %4275 = vmatprep.mubr.f32.mxu0 0.0
        %4276 = vmatmul.mubr.f32.gmra.mrb[0].mxu0 %v4105
        %v4277 = vpop.f32.mrb[0].mxu0
        %v4278 = vadd.f32 %v4090, %v4277
        %v4279 = vpop.f32.mrb[0].mxu0
        %4280 = vmatprep.mubr.f32.mxu0 0.0
        %4281 = vmatmul.mubr.f32.gmra.mrb[0].mxu0 %v4108
        %v4282 = vpop.f32.mrb[0].mxu0
        %v4283 = vadd.f32 %v4090, %v4282
        %v4284 = vpop.f32.mrb[0].mxu0
        %4285 = vmatprep.mubr.f32.mxu0 0.0
        %4286 = vmatmul.mubr.f32.gmra.mrb[0].mxu0 %v4111
        %v4287 = vpop.f32.mrb[0].mxu0
        %v4288 = vadd.f32 %v4090, %v4287
        %v4289 = vpop.f32.mrb[0].mxu0
        %4290 = vmatprep.mubr.f32.mxu0 0.0
        %4291 = vmatmul.mubr.f32.gmra.mrb[0].mxu0 %v4114
        %v4292 = vpop.f32.mrb[0].mxu0
        %v4293 = vadd.f32 %v4090, %v4292
        %v4294 = vpop.f32.mrb[0].mxu0
        %4295 = vmatprep.mubr.f32.mxu0 0.0
        %4296 = vmatmul.mubr.f32.gmra.mrb[0].mxu0 %v4117
        %v4297 = vpop.f32.mrb[0].mxu0
        %v4298 = vadd.f32 %v4090, %v4297
        %v4299 = vpop.f32.mrb[0].mxu0
        %4300 = vmatprep.mubr.f32.mxu0 0.0
        %4301 = vmatmul.mubr.f32.gmra.mrb[0].mxu0 %v4120
        %v4302 = vpop.f32.mrb[0].mxu0
        %v4303 = vadd.f32 %v4090, %v4302
        %v4304 = vpop.f32.mrb[0].mxu0
        %4305 = vmatprep.mubr.f32.mxu0 0.0
        %4306 = vmatmul.mubr.f32.gmra.mrb[0].mxu0 %v4123
        %v4307 = vpop.f32.mrb[0].mxu0
        %v4308 = vadd.f32 %v4090, %v4307
        %v4309 = vpop.f32.mrb[0].mxu0
        %4310 = vmatprep.mubr.f32.mxu0 0.0
        %4311 = vmatmul.mubr.f32.gmra.mrb[0].mxu0 %v4126
        %v4312 = vpop.f32.mrb[0].mxu0
        %v4313 = vadd.f32 %v4090, %v4312
        %v4314 = vpop.f32.mrb[0].mxu0
        %4315 = vmatprep.mubr.f32.mxu0 0.0
        %4316 = vmatmul.mubr.f32.gmra.mrb[0].mxu0 %v4129
        %v4317 = vpop.f32.mrb[0].mxu0
        %v4318 = vadd.f32 %v4090, %v4317
        %v4319 = vpop.f32.mrb[0].mxu0
        %4320 = vmatprep.mubr.f32.mxu0 0.0
        %4321 = vmatmul.mubr.f32.gmra.mrb[0].mxu0 %v4132
        %v4322 = vpop.f32.mrb[0].mxu0
        %v4323 = vadd.f32 %v4090, %v4322
        %v4324 = vpop.f32.mrb[0].mxu0
        %4325 = vmatprep.mubr.f32.mxu0 0.0
        %4326 = vmatmul.mubr.f32.gmra.mrb[0].mxu0 %v4135
        %v4327 = vpop.f32.mrb[0].mxu0
        %v4328 = vadd.f32 %v4090, %v4327
        %v4329 = vpop.f32.mrb[0].mxu0
        %4330 = vmatprep.mubr.f32.mxu0 0.0
        %4331 = vmatmul.mubr.f32.gmra.mrb[0].mxu0 %v4138
        %v4332 = vpop.f32.mrb[0].mxu0
        %v4333 = vadd.f32 %v4090, %v4332
        %v4334 = vpop.f32.mrb[0].mxu0
        %4335 = vmatprep.mubr.f32.mxu0 0.0
        %4336 = vmatmul.mubr.f32.gmra.mrb[0].mxu0 %v4141
        %v4337 = vpop.f32.mrb[0].mxu0
        %v4338 = vadd.f32 %v4090, %v4337
        %v4339 = vpop.f32.mrb[0].mxu0
        %4340 = vmatprep.mubr.f32.mxu0 0.0
        %4341 = vmatmul.mubr.f32.gmra.mrb[0].mxu0 %v4144
        %v4342 = vpop.f32.mrb[0].mxu0
        %v4343 = vadd.f32 %v4090, %v4342
        %v4344 = vpop.f32.mrb[0].mxu0
        %4345 = vmatprep.mubr.f32.mxu0 0.0
        %4346 = vmatmul.mubr.f32.gmra.mrb[0].mxu0 %v4147
        %v4347 = vpop.f32.mrb[0].mxu0
        %v4348 = vadd.f32 %v4090, %v4347
        %v4349 = vpop.f32.mrb[0].mxu0
        %4350 = vmatprep.mubr.f32.mxu0 0.0
        %4351 = vmatmul.mubr.f32.gmra.mrb[0].mxu0 %v4150
        %v4352 = vpop.f32.mrb[0].mxu0
        %v4353 = vadd.f32 %v4090, %v4352
        %v4354 = vpop.f32.mrb[0].mxu0
        %4355 = vmatprep.mubr.f32.mxu0 0.0
        %4356 = vmatmul.mubr.f32.gmra.mrb[0].mxu0 %v4153
        %v4357 = vpop.f32.mrb[0].mxu0
        %v4358 = vadd.f32 %v4090, %v4357
        %v4359 = vpop.f32.mrb[0].mxu0
        %4360 = vmatprep.mubr.f32.mxu0 0.0
        %4361 = vmatmul.mubr.f32.gmra.mrb[0].mxu0 %v4156
        %v4362 = vpop.f32.mrb[0].mxu0
        %v4363 = vadd.f32 %v4090, %v4362
        %v4364 = vpop.f32.mrb[0].mxu0
        %4365 = vmatprep.mubr.f32.mxu0 0.0
        %4366 = vmatmul.mubr.f32.gmra.mrb[0].mxu0 %v4159
        %v4367 = vpop.f32.mrb[0].mxu0
        %v4368 = vadd.f32 %v4090, %v4367
        %v4369 = vpop.f32.mrb[0].mxu0
        %4370 = vmatprep.mubr.f32.mxu0 0.0
        %4371 = vmatmul.mubr.f32.gmra.mrb[0].mxu0 %v4162
        %v4372 = vpop.f32.mrb[0].mxu0
        %v4373 = vadd.f32 %v4090, %v4372
        %v4374 = vpop.f32.mrb[0].mxu0
        %4375 = vmatprep.mubr.f32.mxu0 0.0
        %4376 = vmatmul.mubr.f32.gmra.mrb[0].mxu0 %v4165
        %v4377 = vpop.f32.mrb[0].mxu0
        %v4378 = vadd.f32 %v4090, %v4377
        %v4379 = vpop.f32.mrb[0].mxu0
        %4380 = vmatprep.mubr.f32.mxu0 0.0
        %4381 = vmatmul.mubr.f32.gmra.mrb[0].mxu0 %v4168
        %v4382 = vpop.f32.mrb[0].mxu0
        %v4383 = vadd.f32 %v4090, %v4382
        %v4384 = vpop.f32.mrb[0].mxu0
        %4385 = vmatprep.mubr.f32.mxu0 0.0
        %4386 = vmatmul.mubr.f32.gmra.mrb[0].mxu0 %v4171
        %v4387 = vpop.f32.mrb[0].mxu0
        %v4388 = vadd.f32 %v4090, %v4387
        %v4389 = vpop.f32.mrb[0].mxu0
        %4390 = vmatprep.mubr.f32.mxu0 0.0
        %4391 = vmatmul.mubr.f32.gmra.mrb[0].mxu0 %v4174
        %v4392 = vpop.f32.mrb[0].mxu0
        %v4393 = vadd.f32 %v4090, %v4392
        %v4394 = vpop.f32.mrb[0].mxu0
        %4395 = vmatprep.mubr.f32.mxu0 0.0
        %4396 = vmatmul.mubr.f32.gmra.mrb[0].mxu0 %v4177
        %v4397 = vpop.f32.mrb[0].mxu0
        %v4398 = vadd.f32 %v4090, %v4397
        %v4399 = vpop.f32.mrb[0].mxu0
        %4400 = vmatprep.mubr.f32.mxu0 0.0
        %4401 = vmatmul.mubr.f32.gmra.mrb[0].mxu0 %v4180
        %v4402 = vpop.f32.mrb[0].mxu0
        %v4403 = vadd.f32 %v4090, %v4402
        %v4404 = vpop.f32.mrb[0].mxu0
        %4405 = vmatprep.mubr.f32.mxu0 0.0
        %4406 = vmatmul.mubr.f32.gmra.mrb[0].mxu0 %v4183
        %v4407 = vpop.f32.mrb[0].mxu0
        %v4408 = vadd.f32 %v4090, %v4407
        %v4409 = vpop.f32.mrb[0].mxu0
        %4410 = vmatprep.mubr.f32.mxu0 0.0
        %4411 = vmatmul.mubr.f32.gmra.mrb[0].mxu0 %v4186
        %v4412 = vpop.f32.mrb[0].mxu0
        %v4413 = vadd.f32 %v4090, %v4412
        %v4414 = vpop.f32.mrb[0].mxu0
        %4415 = vdwg.mxu0
        %v4416 = vmax.f32 %v4258, 0.0
        %v4417 = vmax.f32 %v4263, 0.0
        %v4418 = vmax.f32 %v4268, 0.0
        %v4419 = vmax.f32 %v4273, 0.0
        %v4420 = vmax.f32 %v4278, 0.0
        %v4421 = vmax.f32 %v4283, 0.0
        %v4422 = vmax.f32 %v4288, 0.0
        %v4423 = vmax.f32 %v4293, 0.0
        %v4424 = vmax.f32 %v4298, 0.0
        %v4425 = vmax.f32 %v4303, 0.0
        %v4426 = vmax.f32 %v4308, 0.0
        %v4427 = vmax.f32 %v4313, 0.0
        %v4428 = vmax.f32 %v4318, 0.0
        %v4429 = vmax.f32 %v4323, 0.0
        %v4430 = vmax.f32 %v4328, 0.0
        %v4431 = vmax.f32 %v4333, 0.0
        %v4432 = vmax.f32 %v4338, 0.0
        %v4433 = vmax.f32 %v4343, 0.0
        %v4434 = vmax.f32 %v4348, 0.0
        %v4435 = vmax.f32 %v4353, 0.0
        %v4436 = vmax.f32 %v4358, 0.0
        %v4437 = vmax.f32 %v4363, 0.0
        %v4438 = vmax.f32 %v4368, 0.0
        %v4439 = vmax.f32 %v4373, 0.0
        %v4440 = vmax.f32 %v4378, 0.0
        %v4441 = vmax.f32 %v4383, 0.0
        %v4442 = vmax.f32 %v4388, 0.0
        %v4443 = vmax.f32 %v4393, 0.0
        %v4444 = vmax.f32 %v4398, 0.0
        %v4445 = vmax.f32 %v4403, 0.0
        %v4446 = vmax.f32 %v4408, 0.0
        %v4447 = vmax.f32 %v4413, 0.0
        %4448 = vrot.lane.b32.xlu0 %v697, 120
        %v4449 = vpop.permute.xlu0 %4448
        %4450 = vrot.lane.b32.xlu0 %v698, 120
        %v4451 = vpop.permute.xlu0 %4450
        %4452 = vrot.lane.b32.xlu0 %v699, 120
        %v4453 = vpop.permute.xlu0 %4452
        %4454 = vrot.lane.b32.xlu0 %v700, 120
        %v4455 = vpop.permute.xlu0 %4454
        %4456 = vrot.lane.b32.xlu0 %v701, 120
        %v4457 = vpop.permute.xlu0 %4456
        %4458 = vrot.lane.b32.xlu0 %v702, 120
        %v4459 = vpop.permute.xlu0 %4458
        %4460 = vrot.lane.b32.xlu0 %v703, 120
        %v4461 = vpop.permute.xlu0 %4460
        %4462 = vrot.lane.b32.xlu0 %v704, 120
        %v4463 = vpop.permute.xlu0 %4462
        %4464 = vrot.lane.b32.xlu0 %v705, 120
        %v4465 = vpop.permute.xlu0 %4464
        %4466 = vrot.lane.b32.xlu0 %v706, 120
        %v4467 = vpop.permute.xlu0 %4466
        %4468 = vrot.lane.b32.xlu0 %v707, 120
        %v4469 = vpop.permute.xlu0 %4468
        %4470 = vrot.lane.b32.xlu0 %v708, 120
        %v4471 = vpop.permute.xlu0 %4470
        %4472 = vrot.lane.b32.xlu0 %v709, 120
        %v4473 = vpop.permute.xlu0 %4472
        %4474 = vrot.lane.b32.xlu0 %v710, 120
        %v4475 = vpop.permute.xlu0 %4474
        %4476 = vrot.lane.b32.xlu0 %v711, 120
        %v4477 = vpop.permute.xlu0 %4476
        %4478 = vrot.lane.b32.xlu0 %v712, 120
        %v4479 = vpop.permute.xlu0 %4478
        %4480 = vrot.lane.b32.xlu0 %v713, 120
        %v4481 = vpop.permute.xlu0 %4480
        %4482 = vrot.lane.b32.xlu0 %v714, 120
        %v4483 = vpop.permute.xlu0 %4482
        %4484 = vrot.lane.b32.xlu0 %v715, 120
        %v4485 = vpop.permute.xlu0 %4484
        %4486 = vrot.lane.b32.xlu0 %v716, 120
        %v4487 = vpop.permute.xlu0 %4486
        %4488 = vrot.lane.b32.xlu0 %v717, 120
        %v4489 = vpop.permute.xlu0 %4488
        %4490 = vrot.lane.b32.xlu0 %v718, 120
        %v4491 = vpop.permute.xlu0 %4490
        %4492 = vrot.lane.b32.xlu0 %v719, 120
        %v4493 = vpop.permute.xlu0 %4492
        %4494 = vrot.lane.b32.xlu0 %v720, 120
        %v4495 = vpop.permute.xlu0 %4494
        %4496 = vrot.lane.b32.xlu0 %v721, 120
        %v4497 = vpop.permute.xlu0 %4496
        %4498 = vrot.lane.b32.xlu0 %v722, 120
        %v4499 = vpop.permute.xlu0 %4498
        %4500 = vrot.lane.b32.xlu0 %v723, 120
        %v4501 = vpop.permute.xlu0 %4500
        %4502 = vrot.lane.b32.xlu0 %v724, 120
        %v4503 = vpop.permute.xlu0 %4502
        %4504 = vrot.lane.b32.xlu0 %v725, 120
        %v4505 = vpop.permute.xlu0 %4504
        %4506 = vrot.lane.b32.xlu0 %v726, 120
        %v4507 = vpop.permute.xlu0 %4506
        %4508 = vrot.lane.b32.xlu0 %v727, 120
        %v4509 = vpop.permute.xlu0 %4508
        %4510 = vrot.lane.b32.xlu0 %v728, 120
        %v4511 = vpop.permute.xlu0 %4510
        %4544 = vrot.lane.b32.xlu0 %v2306, 8
        %v4545 = vpop.permute.xlu0 %4544
        %4546 = vrot.lane.b32.xlu0 %v2307, 8
        %v4547 = vpop.permute.xlu0 %4546
        %4582 = vrot.lane.b32.xlu0 %v3723, 16
        %v4583 = vpop.permute.xlu0 %4582
        %4584 = vrot.lane.b32.xlu0 %v3724, 16
        %v4585 = vpop.permute.xlu0 %4584
        %4586 = vrot.lane.b32.xlu0 %v3725, 16
        %v4587 = vpop.permute.xlu0 %4586
        %4588 = vrot.lane.b32.xlu0 %v3726, 16
        %v4589 = vpop.permute.xlu0 %4588
        %4590 = vrot.lane.b32.xlu0 %v3727, 16
        %v4591 = vpop.permute.xlu0 %4590
        %4592 = vrot.lane.b32.xlu0 %v3728, 16
        %v4593 = vpop.permute.xlu0 %4592
        %4594 = vrot.lane.b32.xlu0 %v3729, 16
        %v4595 = vpop.permute.xlu0 %4594
        %4596 = vrot.lane.b32.xlu0 %v3730, 16
        %v4597 = vpop.permute.xlu0 %4596
        %4598 = vrot.lane.b32.xlu0 %v3731, 16
        %v4599 = vpop.permute.xlu0 %4598
        %4600 = vrot.lane.b32.xlu0 %v3732, 16
        %v4601 = vpop.permute.xlu0 %4600
        %4602 = vrot.lane.b32.xlu0 %v3733, 16
        %v4603 = vpop.permute.xlu0 %4602
        %4604 = vrot.lane.b32.xlu0 %v3734, 16
        %v4605 = vpop.permute.xlu0 %4604
        %4606 = vrot.lane.b32.xlu0 %v3735, 16
        %v4607 = vpop.permute.xlu0 %4606
        %4608 = vrot.lane.b32.xlu0 %v3736, 16
        %v4609 = vpop.permute.xlu0 %4608
        %4610 = vrot.lane.b32.xlu0 %v3737, 16
        %v4611 = vpop.permute.xlu0 %4610
        %4612 = vrot.lane.b32.xlu0 %v3738, 16
        %v4613 = vpop.permute.xlu0 %4612
        %4614 = vrot.lane.b32.xlu0 %v3739, 16
        %v4615 = vpop.permute.xlu0 %4614
        %4616 = vrot.lane.b32.xlu0 %v3740, 16
        %v4617 = vpop.permute.xlu0 %4616
        %4618 = vrot.lane.b32.xlu0 %v3741, 16
        %v4619 = vpop.permute.xlu0 %4618
        %4620 = vrot.lane.b32.xlu0 %v3742, 16
        %v4621 = vpop.permute.xlu0 %4620
        %4622 = vrot.lane.b32.xlu0 %v3743, 16
        %v4623 = vpop.permute.xlu0 %4622
        %4624 = vrot.lane.b32.xlu0 %v3744, 16
        %v4625 = vpop.permute.xlu0 %4624
        %4626 = vrot.lane.b32.xlu0 %v3745, 16
        %v4627 = vpop.permute.xlu0 %4626
        %4628 = vrot.lane.b32.xlu0 %v3746, 16
        %v4629 = vpop.permute.xlu0 %4628
        %4630 = vrot.lane.b32.xlu0 %v3747, 16
        %v4631 = vpop.permute.xlu0 %4630
        %4632 = vrot.lane.b32.xlu0 %v3748, 16
        %v4633 = vpop.permute.xlu0 %4632
        %4634 = vrot.lane.b32.xlu0 %v3749, 16
        %v4635 = vpop.permute.xlu0 %4634
        %4636 = vrot.lane.b32.xlu0 %v3750, 16
        %v4637 = vpop.permute.xlu0 %4636
        %4638 = vrot.lane.b32.xlu0 %v3751, 16
        %v4639 = vpop.permute.xlu0 %4638
        %4640 = vrot.lane.b32.xlu0 %v3752, 16
        %v4641 = vpop.permute.xlu0 %4640
        %4642 = vrot.lane.b32.xlu0 %v3753, 16
        %v4643 = vpop.permute.xlu0 %4642
        %4644 = vrot.lane.b32.xlu0 %v3754, 16
        %v4645 = vpop.permute.xlu0 %4644
        %4710 = vrot.lane.b32.xlu0 %v4416, 24
        %v4711 = vpop.permute.xlu0 %4710
        %4712 = vrot.lane.b32.xlu0 %v4417, 24
        %v4713 = vpop.permute.xlu0 %4712
        %4714 = vrot.lane.b32.xlu0 %v4418, 24
        %v4715 = vpop.permute.xlu0 %4714
        %4716 = vrot.lane.b32.xlu0 %v4419, 24
        %v4717 = vpop.permute.xlu0 %4716
        %4718 = vrot.lane.b32.xlu0 %v4420, 24
        %v4719 = vpop.permute.xlu0 %4718
        %4720 = vrot.lane.b32.xlu0 %v4421, 24
        %v4721 = vpop.permute.xlu0 %4720
        %4722 = vrot.lane.b32.xlu0 %v4422, 24
        %v4723 = vpop.permute.xlu0 %4722
        %4724 = vrot.lane.b32.xlu0 %v4423, 24
        %v4725 = vpop.permute.xlu0 %4724
        %4726 = vrot.lane.b32.xlu0 %v4424, 24
        %v4727 = vpop.permute.xlu0 %4726
        %4728 = vrot.lane.b32.xlu0 %v4425, 24
        %v4729 = vpop.permute.xlu0 %4728
        %4730 = vrot.lane.b32.xlu0 %v4426, 24
        %v4731 = vpop.permute.xlu0 %4730
        %4732 = vrot.lane.b32.xlu0 %v4427, 24
        %v4733 = vpop.permute.xlu0 %4732
        %4734 = vrot.lane.b32.xlu0 %v4428, 24
        %v4735 = vpop.permute.xlu0 %4734
        %4736 = vrot.lane.b32.xlu0 %v4429, 24
        %v4737 = vpop.permute.xlu0 %4736
        %4738 = vrot.lane.b32.xlu0 %v4430, 24
        %v4739 = vpop.permute.xlu0 %4738
        %4740 = vrot.lane.b32.xlu0 %v4431, 24
        %v4741 = vpop.permute.xlu0 %4740
        %4742 = vrot.lane.b32.xlu0 %v4432, 24
        %v4743 = vpop.permute.xlu0 %4742
        %4744 = vrot.lane.b32.xlu0 %v4433, 24
        %v4745 = vpop.permute.xlu0 %4744
        %4746 = vrot.lane.b32.xlu0 %v4434, 24
        %v4747 = vpop.permute.xlu0 %4746
        %4748 = vrot.lane.b32.xlu0 %v4435, 24
        %v4749 = vpop.permute.xlu0 %4748
        %4750 = vrot.lane.b32.xlu0 %v4436, 24
        %v4751 = vpop.permute.xlu0 %4750
        %4752 = vrot.lane.b32.xlu0 %v4437, 24
        %v4753 = vpop.permute.xlu0 %4752
        %4754 = vrot.lane.b32.xlu0 %v4438, 24
        %v4755 = vpop.permute.xlu0 %4754
        %4756 = vrot.lane.b32.xlu0 %v4439, 24
        %v4757 = vpop.permute.xlu0 %4756
        %4758 = vrot.lane.b32.xlu0 %v4440, 24
        %v4759 = vpop.permute.xlu0 %4758
        %4760 = vrot.lane.b32.xlu0 %v4441, 24
        %v4761 = vpop.permute.xlu0 %4760
        %4762 = vrot.lane.b32.xlu0 %v4442, 24
        %v4763 = vpop.permute.xlu0 %4762
        %4764 = vrot.lane.b32.xlu0 %v4443, 24
        %v4765 = vpop.permute.xlu0 %4764
        %4766 = vrot.lane.b32.xlu0 %v4444, 24
        %v4767 = vpop.permute.xlu0 %4766
        %4768 = vrot.lane.b32.xlu0 %v4445, 24
        %v4769 = vpop.permute.xlu0 %4768
        %4770 = vrot.lane.b32.xlu0 %v4446, 24
        %v4771 = vpop.permute.xlu0 %4770
        %4772 = vrot.lane.b32.xlu0 %v4447, 24
        %v4773 = vpop.permute.xlu0 %4772
        %v4806 = vsel %vm729, %v4449, %v2489
        %v4807 = vsel %vm729, %v4451, %v2491
        %v4808 = vsel %vm729, %v4453, %v2493
        %v4809 = vsel %vm729, %v4455, %v2495
        %v4810 = vsel %vm729, %v4457, %v2497
        %v4811 = vsel %vm729, %v4459, %v2499
        %v4812 = vsel %vm729, %v4461, %v2501
        %v4813 = vsel %vm729, %v4463, %v2503
        %v4814 = vsel %vm729, %v4465, %v2505
        %v4815 = vsel %vm729, %v4467, %v2507
        %v4816 = vsel %vm729, %v4469, %v2509
        %v4817 = vsel %vm729, %v4471, %v2511
        %v4818 = vsel %vm729, %v4473, %v2513
        %v4819 = vsel %vm729, %v4475, %v2515
        %v4820 = vsel %vm729, %v4477, %v2517
        %v4821 = vsel %vm729, %v4479, %v2519
        %v4822 = vsel %vm729, %v4481, %v2521
        %v4823 = vsel %vm729, %v4483, %v2523
        %v4824 = vsel %vm729, %v4485, %v2525
        %v4825 = vsel %vm729, %v4487, %v2527
        %v4826 = vsel %vm729, %v4489, %v2529
        %v4827 = vsel %vm729, %v4491, %v2531
        %v4828 = vsel %vm729, %v4493, %v2533
        %v4829 = vsel %vm729, %v4495, %v2535
        %v4830 = vsel %vm729, %v4497, %v2537
        %v4831 = vsel %vm729, %v4499, %v2539
        %v4832 = vsel %vm729, %v4501, %v2541
        %v4833 = vsel %vm729, %v4503, %v2543
        %v4834 = vsel %vm729, %v4505, %v2545
        %v4835 = vsel %vm729, %v4507, %v2547
        %v4836 = vsel %vm729, %v4509, %v4545
        %v4837 = vsel %vm729, %v4511, %v4547
        %vm4838 = vcmask 130048
        %v4839 = vsel %vm4838, %v4806, %v4583
        %v4840 = vsel %vm4838, %v4807, %v4585
        %v4841 = vsel %vm4838, %v4808, %v4587
        %v4842 = vsel %vm4838, %v4809, %v4589
        %v4843 = vsel %vm4838, %v4810, %v4591
        %v4844 = vsel %vm4838, %v4811, %v4593
        %v4845 = vsel %vm4838, %v4812, %v4595
        %v4846 = vsel %vm4838, %v4813, %v4597
        %v4847 = vsel %vm4838, %v4814, %v4599
        %v4848 = vsel %vm4838, %v4815, %v4601
        %v4849 = vsel %vm4838, %v4816, %v4603
        %v4850 = vsel %vm4838, %v4817, %v4605
        %v4851 = vsel %vm4838, %v4818, %v4607
        %v4852 = vsel %vm4838, %v4819, %v4609
        %v4853 = vsel %vm4838, %v4820, %v4611
        %v4854 = vsel %vm4838, %v4821, %v4613
        %v4855 = vsel %vm4838, %v4822, %v4615
        %v4856 = vsel %vm4838, %v4823, %v4617
        %v4857 = vsel %vm4838, %v4824, %v4619
        %v4858 = vsel %vm4838, %v4825, %v4621
        %v4859 = vsel %vm4838, %v4826, %v4623
        %v4860 = vsel %vm4838, %v4827, %v4625
        %v4861 = vsel %vm4838, %v4828, %v4627
        %v4862 = vsel %vm4838, %v4829, %v4629
        %v4863 = vsel %vm4838, %v4830, %v4631
        %v4864 = vsel %vm4838, %v4831, %v4633
        %v4865 = vsel %vm4838, %v4832, %v4635
        %v4866 = vsel %vm4838, %v4833, %v4637
        %v4867 = vsel %vm4838, %v4834, %v4639
        %v4868 = vsel %vm4838, %v4835, %v4641
        %v4869 = vsel %vm4838, %v4836, %v4643
        %v4870 = vsel %vm4838, %v4837, %v4645
        %vm4871 = vcmask 195584
        %v4872 = vsel %vm4871, %v4839, %v4711
        %v4873 = vsel %vm4871, %v4840, %v4713
        %v4874 = vsel %vm4871, %v4841, %v4715
        %v4875 = vsel %vm4871, %v4842, %v4717
        %v4876 = vsel %vm4871, %v4843, %v4719
        %v4877 = vsel %vm4871, %v4844, %v4721
        %v4878 = vsel %vm4871, %v4845, %v4723
        %v4879 = vsel %vm4871, %v4846, %v4725
        %v4880 = vsel %vm4871, %v4847, %v4727
        %v4881 = vsel %vm4871, %v4848, %v4729
        %v4882 = vsel %vm4871, %v4849, %v4731
        %v4883 = vsel %vm4871, %v4850, %v4733
        %v4884 = vsel %vm4871, %v4851, %v4735
        %v4885 = vsel %vm4871, %v4852, %v4737
        %v4886 = vsel %vm4871, %v4853, %v4739
        %v4887 = vsel %vm4871, %v4854, %v4741
        %v4888 = vsel %vm4871, %v4855, %v4743
        %v4889 = vsel %vm4871, %v4856, %v4745
        %v4890 = vsel %vm4871, %v4857, %v4747
        %v4891 = vsel %vm4871, %v4858, %v4749
        %v4892 = vsel %vm4871, %v4859, %v4751
        %v4893 = vsel %vm4871, %v4860, %v4753
        %v4894 = vsel %vm4871, %v4861, %v4755
        %v4895 = vsel %vm4871, %v4862, %v4757
        %v4896 = vsel %vm4871, %v4863, %v4759
        %v4897 = vsel %vm4871, %v4864, %v4761
        %v4898 = vsel %vm4871, %v4865, %v4763
        %v4899 = vsel %vm4871, %v4866, %v4765
        %v4900 = vsel %vm4871, %v4867, %v4767
        %v4901 = vsel %vm4871, %v4868, %v4769
        %v4902 = vsel %vm4871, %v4869, %v4771
        %v4903 = vsel %vm4871, %v4870, %v4773
        %vm4904 = vcmask 261120
        %4905 = vst.msk [vmem:[%s325] sm:$0xff] %vm4904, %v4872
        %4906 = vst.msk [vmem:[%s325 + $0x8] sm:$0xff] %vm4904, %v4873
        %4907 = vst.msk [vmem:[%s325 + $0x10] sm:$0xff] %vm4904, %v4874
        %4908 = vst.msk [vmem:[%s325 + $0x18] sm:$0xff] %vm4904, %v4875
        %4909 = vst.msk [vmem:[%s325 + $0x20] sm:$0xff] %vm4904, %v4876
        %4910 = vst.msk [vmem:[%s325 + $0x28] sm:$0xff] %vm4904, %v4877
        %4911 = vst.msk [vmem:[%s325 + $0x30] sm:$0xff] %vm4904, %v4878
        %4912 = vst.msk [vmem:[%s325 + $0x38] sm:$0xff] %vm4904, %v4879
        %4913 = vst.msk [vmem:[%s325 + $0x40] sm:$0xff] %vm4904, %v4880
        %4914 = vst.msk [vmem:[%s325 + $0x48] sm:$0xff] %vm4904, %v4881
        %4915 = vst.msk [vmem:[%s325 + $0x50] sm:$0xff] %vm4904, %v4882
        %4916 = vst.msk [vmem:[%s325 + $0x58] sm:$0xff] %vm4904, %v4883
        %4917 = vst.msk [vmem:[%s325 + $0x60] sm:$0xff] %vm4904, %v4884
        %4918 = vst.msk [vmem:[%s325 + $0x68] sm:$0xff] %vm4904, %v4885
        %4919 = vst.msk [vmem:[%s325 + $0x70] sm:$0xff] %vm4904, %v4886
        %4920 = vst.msk [vmem:[%s325 + $0x78] sm:$0xff] %vm4904, %v4887
        %4921 = vst.msk [vmem:[%s325 + $0x80] sm:$0xff] %vm4904, %v4888
        %4922 = vst.msk [vmem:[%s325 + $0x88] sm:$0xff] %vm4904, %v4889
        %4923 = vst.msk [vmem:[%s325 + $0x90] sm:$0xff] %vm4904, %v4890
        %4924 = vst.msk [vmem:[%s325 + $0x98] sm:$0xff] %vm4904, %v4891
        %4925 = vst.msk [vmem:[%s325 + $0xa0] sm:$0xff] %vm4904, %v4892
        %4926 = vst.msk [vmem:[%s325 + $0xa8] sm:$0xff] %vm4904, %v4893
        %4927 = vst.msk [vmem:[%s325 + $0xb0] sm:$0xff] %vm4904, %v4894
        %4928 = vst.msk [vmem:[%s325 + $0xb8] sm:$0xff] %vm4904, %v4895
        %4929 = vst.msk [vmem:[%s325 + $0xc0] sm:$0xff] %vm4904, %v4896
        %4930 = vst.msk [vmem:[%s325 + $0xc8] sm:$0xff] %vm4904, %v4897
        %4931 = vst.msk [vmem:[%s325 + $0xd0] sm:$0xff] %vm4904, %v4898
        %4932 = vst.msk [vmem:[%s325 + $0xd8] sm:$0xff] %vm4904, %v4899
        %4933 = vst.msk [vmem:[%s325 + $0xe0] sm:$0xff] %vm4904, %v4900
        %4934 = vst.msk [vmem:[%s325 + $0xe8] sm:$0xff] %vm4904, %v4901
        %4935 = vst.msk [vmem:[%s325 + $0xf0] sm:$0xff] %vm4904, %v4902
        %4936 = vst.msk [vmem:[%s325 + $0xf8] sm:$0xff] %vm4904, %v4903
        %s4937 = sand.u32 %s225, 1
        %s4938 = scalar_lea.sflag [#allocation4], %s4937
        %s4939 = sand.u32 %s225, 1
        %s4940 = smul.addr %s4939, 256
        %s4941 = scalar_lea.vmem [#allocation3], %s4940
        // Predicated region
        $region57: #{_lambda_.1} parent=55 // pred_check
          %p4942 = pneg %p235
        $region58: #{_lambda_.1} parent=55 // pred_check_branch
          %4944 = sbr.rel (%p4942) target = $region60
        $region59: #{_lambda_.1} parent=55 // pred_region
          %s4946 = ssub.s32 4096, 4096
          %4947 = vsyncadd %s4938, %s4946
          %s4948 = smul.addr %s23, 32
          %s4949 = smul.addr %s4948, 128
          %s4950 = scalar_lea.hbm %s9, %s4949
          %s4951 = sshll.u32 %s4941, 4
          %s4952 = int_to_ptr.vmem [resolvable:$true] %s4951
          %4957 = dma.vmem_to_hbm [thread:$0]  %s4952, 4096, %s4950, %s4938, 128, 128, 8
        $region60: #{_lambda_.1} parent=55 // pred_fallthru
          _
      $region56: #{_lambda_.1} parent=5 // pred_fallthru
        _
      %p4958 = scmp.le.s32.totalorder 2, %s18
      // Predicated region
      $region61: #{_lambda_.1} parent=5 // pred_check
        %p4959 = pneg %p4958
      $region62: #{_lambda_.1} parent=5 // pred_check_branch
        %4961 = sbr.rel (%p4959) target = $region64
      $region63: #{_lambda_.1} parent=5 // pred_region
        %s4962 = ssub.s32 %s18, 2
        // Predicated region
        $region65: #{_lambda_.1} parent=63 // pred_check
          %p4963 = pneg %p241
        $region66: #{_lambda_.1} parent=63 // pred_check_branch
          %4965 = sbr.rel (%p4963) target = $region68
        $region67: #{_lambda_.1} parent=63 // pred_region
          %s4966 = sand.u32 %s226, 1
          %s4967 = scalar_lea.sflag [#allocation4], %s4966
          %s4968 = sand.u32 %s226, 1
          %s4969 = smul.addr %s4968, 256
          %s4970 = scalar_lea.vmem [#allocation3], %s4969
          %4971 = dma.done %s4967, 4096
        $region68: #{_lambda_.1} parent=63 // pred_fallthru
          _
      $region64: #{_lambda_.1} parent=5 // pred_fallthru
        _
    $region6: #{_lambda_.1} parent=1 // loop_footer
      %s22 = sadd.s32 1, %s18
    $region7: #{_lambda_.1} parent=1 // loop_footer_branch
      %17 = sbr.rel target = $region3
    $region8: #{_lambda_.1} parent=1 // loop_exit
      _
    %4972 = vsyncpa [#allocation4], 1
    %s4973 = scalar_lea.sflag [#allocation4], 1
    %4974 = vsyncpa %s4973, 1

</llo_original>
